<compile_context>
chip_gen: v6e
topology: v6e:2x2x1
jax: 0.10.0
libtpu: 0.0.40
codegen_flags: <defaults>
</compile_context>

<pallas_src>
import jax
import jax.numpy as jnp
from jax import lax
from jax.experimental import pallas as pl
from jax.experimental.pallas import tpu as pltpu

IN_NODE_NF = 9
HIDDEN_NF = 32
OUT_NODE_NF = 20
IN_EDGE_NF = 16
N_LAYERS = 4
_C = 3  # coordinate dimension

EDGE_TILE = 128   # edge-axis tile: multiple of 128 so the [1, tE] index block is lane-aligned
NODE_ALIGN = 16   # node count padded to the bf16 sublane tile so table writes stay aligned

F32 = jnp.float32
BF16 = jnp.bfloat16


def _silu(v):
    return v * jax.nn.sigmoid(v)


def _dot(a, b):
    return jnp.dot(a, b, preferred_element_type=jnp.float32)


# ------------------------- fused Pallas kernel ------------------------------


def fused_res_egnn_kernel(
    rc_ref, rowl_ref, ea_ref,
    oh_ref, x0_ref, icnt_ref, ca_ref,
    w_emb_ref, b_in_ref,
    w_eproj_ref, w_er_ref, w_ee_ref, b_e1_ref, w_e2_ref, b_e2_ref,
    w_c1_ref, b_c1_ref, w_c2_ref,
    w_n1_ref, b_n1_ref, w_n2_ref, b_n2_ref,
    w_om1_ref, b_om1_ref, w_m2_ref, b_m2_ref,
    o_ref,
    h_scr, x_scr, tc_scr, tf_scr, acc_scr,
):
    l = pl.program_id(0)          # layer index
    e = pl.program_id(1)          # edge-tile index
    n_et = pl.num_programs(1)
    n = h_scr.shape[0]            # padded node count
    te = rc_ref.shape[0]          # edge tile size
    H = HIDDEN_NF

    # ---- once, at the very first grid step: nn.Embedding + embedding_in -----
    @pl.when((l == 0) & (e == 0))
    def _init():
        h_scr[...] = _dot(oh_ref[...], w_emb_ref[...]) + b_in_ref[...]
        x_scr[...] = x0_ref[...]

    # ---- per-layer setup on the first edge tile ------------------------------
    @pl.when(e == 0)
    def _layer_setup():
        hb = h_scr[...].astype(BF16)
        hsht = _dot(hb, w_eproj_ref[0])                      # packed [N, 2H]
        tf_scr[0:n, :] = hsht[:, 0:H].astype(BF16)           # source proj (h @ w_es)
        tf_scr[n:2 * n, :] = hsht[:, H:2 * H].astype(BF16)   # target proj (h @ w_et)
        xx = x_scr[...]
        tc_scr[0:n, :] = xx                                  # +x (source rows), f32
        tc_scr[n:2 * n, :] = -xx                             # -x (target rows), f32
        acc_scr[...] = jnp.zeros_like(acc_scr)

    # ---- per edge tile: build one-hots from indices, gather, edge MLP --------
    row_s = rc_ref[:, 0:1]                                   # [tE,1] int32
    col_s = rc_ref[:, 1:2]                                   # [tE,1] int32
    iota_g = lax.broadcasted_iota(jnp.int32, (te, 2 * n), 1)
    # padding edges use row=-1 / col=n -> neither comparison ever matches.
    g_mask = (iota_g == row_s) | (iota_g == (col_s + n))
    g_f32 = jnp.where(g_mask, 1.0, 0.0)                      # exact one-hot
    g_bf = g_f32.astype(BF16)

    cd = _dot(g_f32, tc_scr[...])            # [tE,3] f32: coord_diff = x[row]-x[col]
    feat = _dot(g_bf, tf_scr[...])           # [tE,H] f32: hs[row] + ht[col]
    radial = jnp.sum(cd * cd, axis=-1, keepdims=True)

    eb = _dot(ea_ref[...], w_ee_ref[0])      # edge-attr projection for this layer
    m = _silu(feat + radial * w_er_ref[0] + eb + b_e1_ref[0])
    m = _silu(_dot(m.astype(BF16), w_e2_ref[0]) + b_e2_ref[0])       # edge_feat [tE,H]

    # coord_mlp: Linear + SiLU + Linear(H, 1, bias=False)
    c1 = _silu(_dot(m.astype(BF16), w_c1_ref[0]) + b_c1_ref[0])
    c = jnp.sum(c1 * w_c2_ref[0], axis=-1, keepdims=True)            # [tE,1]
    trans = cd * c                                                    # [tE,3]

    # fused scatter for [trans | edge_feat] with an explicitly-built [N,tE] one-hot
    scat = jnp.concatenate([trans, m], axis=-1).astype(BF16)         # [tE, 3+H]
    s_mask = lax.broadcasted_iota(jnp.int32, (n, te), 0) == rowl_ref[...]
    s_bf = jnp.where(s_mask, 1.0, 0.0).astype(BF16)
    acc_scr[...] += _dot(s_bf, scat)                                  # [N, 3+H] f32

    # ---- end of layer: coord update (segment mean) + node MLP + residual -----
    @pl.when(e == n_et - 1)
    def _layer_end():
        agg = acc_scr[...]
        x_scr[...] = x_scr[...] + agg[:, 0:_C] * icnt_ref[...]
        h_old = h_scr[...]
        n_in = jnp.concatenate(
            [h_old.astype(BF16), agg[:, _C:_C + H].astype(BF16)], axis=-1)
        nmid = _silu(_dot(n_in, w_n1_ref[0]) + b_n1_ref[0])
        h_scr[...] = h_old + _dot(nmid.astype(BF16), w_n2_ref[0]) + b_n2_ref[0]

    # ---- end of network: (embedding_out folded into head) on CA rows only ----
    @pl.when((l == N_LAYERS - 1) & (e == n_et - 1))
    def _head():
        ng = o_ref.shape[0]
        sel = lax.broadcasted_iota(jnp.int32, (ng, n), 1) == ca_ref[...]
        sel_bf = jnp.where(sel, 1.0, 0.0).astype(BF16)
        hg = _dot(sel_bf, h_scr[...].astype(BF16))                    # [G, H]
        mh = jnp.maximum(
            _dot(hg.astype(BF16), w_om1_ref[...]) + b_om1_ref[...], 0.0)
        # Dropout(p=0.1) is the identity in eval mode.
        o_ref[...] = _dot(mh.astype(BF16), w_m2_ref[...]) + b_m2_ref[...]


# ------------------------- wrapper -------------------------------------------


def res_egnn_forward(params, h_idx, x, edges, edge_attr, ca_idx, ptr):
    H = HIDDEN_NF
    n_real = h_idx.shape[0]
    e_real = edges.shape[1]
    n_graphs = ca_idx.shape[0]
    n = ((n_real + NODE_ALIGN - 1) // NODE_ALIGN) * NODE_ALIGN
    e_pad = ((e_real + EDGE_TILE - 1) // EDGE_TILE) * EDGE_TILE
    n_et = e_pad // EDGE_TILE

    onehot = jnp.zeros((n, IN_NODE_NF), BF16).at[:n_real, :].set(
        jax.nn.one_hot(h_idx, IN_NODE_NF, dtype=BF16))
    xp = jnp.zeros((n, _C), F32).at[:n_real, :].set(x.astype(F32))

    row = edges[0].astype(jnp.int32)
    col = edges[1].astype(jnp.int32)
    # per-node out-degree (segment-mean denominator), real edges only
    cnt = jnp.zeros((n,), F32).at[row].add(1.0)
    inv_cnt = (1.0 / jnp.maximum(cnt, 1.0)).reshape(n, 1)

    # padded edges: row=-1 (never matches) and col=n (col+n == 2n, out of iota range)
    row_p = jnp.full((e_pad,), -1, jnp.int32).at[:e_real].set(row)
    col_p = jnp.full((e_pad,), n, jnp.int32).at[:e_real].set(col)
    rc = jnp.stack([row_p, col_p], axis=1)                 # [E,2]  (sublane layout: gather)
    row_l = row_p.reshape(1, e_pad)                        # [1,E]  (lane layout: scatter)
    ea = jnp.zeros((e_pad, IN_EDGE_NF), BF16).at[:e_real, :].set(edge_attr.astype(BF16))

    ca_abs = (ca_idx + ptr[:-1]).astype(jnp.int32).reshape(n_graphs, 1)

    # nn.Embedding folded into embedding_in; embedding_out folded into head Linear 1
    w_emb = jnp.dot(params["embed"], params["w_in"]).astype(BF16)
    w_om1 = jnp.dot(params["w_out"], params["w_m1"]).astype(BF16)
    b_om1 = jnp.dot(params["b_out"], params["w_m1"]) + params["b_m1"]

    c0 = lambda l, e: (0, 0)       # layer-invariant, whole-array blocks
    cl = lambda l, e: (l, 0, 0)    # per-layer weight slices
    in_specs = [
        pl.BlockSpec((EDGE_TILE, 2), lambda l, e: (e, 0)),            # rc
        pl.BlockSpec((1, EDGE_TILE), lambda l, e: (0, e)),            # row (lane layout)
        pl.BlockSpec((EDGE_TILE, IN_EDGE_NF), lambda l, e: (e, 0)),   # edge_attr tile
        pl.BlockSpec((n, IN_NODE_NF), c0),                            # node one-hot
        pl.BlockSpec((n, _C), c0),                                    # coords
        pl.BlockSpec((n, 1), c0),                                     # 1/deg
        pl.BlockSpec((n_graphs, 1), c0),                              # CA row ids
        pl.BlockSpec((IN_NODE_NF, H), c0),                            # w_emb
        pl.BlockSpec((1, H), c0),                                     # b_in
        pl.BlockSpec((1, H, 2 * H), cl),                              # w_eproj
        pl.BlockSpec((1, 1, H), cl),                                  # w_er
        pl.BlockSpec((1, IN_EDGE_NF, H), cl),                         # w_ee
        pl.BlockSpec((1, 1, H), cl),                                  # b_e1
        pl.BlockSpec((1, H, H), cl),                                  # w_e2
        pl.BlockSpec((1, 1, H), cl),                                  # b_e2
        pl.BlockSpec((1, H, H), cl),                                  # w_c1
        pl.BlockSpec((1, 1, H), cl),                                  # b_c1
        pl.BlockSpec((1, 1, H), cl),                                  # w_c2
        pl.BlockSpec((1, 2 * H, H), cl),                              # w_n1
        pl.BlockSpec((1, 1, H), cl),                                  # b_n1
        pl.BlockSpec((1, H, H), cl),                                  # w_n2
        pl.BlockSpec((1, 1, H), cl),                                  # b_n2
        pl.BlockSpec((H, 2 * H), c0),                                 # w_om1 (= w_out @ w_m1)
        pl.BlockSpec((1, 2 * H), c0),                                 # b_om1
        pl.BlockSpec((2 * H, OUT_NODE_NF), c0),                       # w_m2
        pl.BlockSpec((1, OUT_NODE_NF), c0),                           # b_m2
    ]
    scratch_shapes = [
        pltpu.VMEM((n, H), F32),        # h       (persists across layers)
        pltpu.VMEM((n, _C), F32),       # x       (persists across layers)
        pltpu.VMEM((2 * n, _C), F32),   # [x;-x]  f32 coord gather table (exact coord_diff)
        pltpu.VMEM((2 * n, H), BF16),   # [h@w_es; h@w_et] feature gather table
        pltpu.VMEM((n, _C + H), F32),   # per-layer scatter accumulator [trans | edge_feat]
    ]

    out = pl.pallas_call(
        fused_res_egnn_kernel,
        out_shape=jax.ShapeDtypeStruct((n_graphs, OUT_NODE_NF), F32),
        grid_spec=pltpu.PrefetchScalarGridSpec(
            num_scalar_prefetch=0,
            grid=(N_LAYERS, n_et),
            in_specs=in_specs,
            out_specs=pl.BlockSpec((n_graphs, OUT_NODE_NF), c0),
            scratch_shapes=scratch_shapes),
        compiler_params=pltpu.CompilerParams(
            dimension_semantics=("arbitrary", "arbitrary"),
            vmem_limit_bytes=32 * 1024 * 1024),
    )(rc, row_l, ea, onehot, xp, inv_cnt, ca_abs,
      w_emb, params["b_in"],
      params["w_eproj"], params["w_er"], params["w_ee"], params["b_e1"],
      params["w_e2"], params["b_e2"],
      params["w_c1"], params["b_c1"], params["w_c2"],
      params["w_n1"], params["b_n1"], params["w_n2"], params["b_n2"],
      w_om1, b_om1, params["w_m2"], params["b_m2"])
    return out


# ------------------------- pure-JAX reference (f32) ---------------------------


def res_egnn_reference(params, h_idx, x, edges, edge_attr, ca_idx, ptr):
    H = HIDDEN_NF
    f32 = lambda a: a.astype(F32)
    n = h_idx.shape[0]
    row, col = edges[0], edges[1]
    h = (jax.nn.one_hot(h_idx, IN_NODE_NF, dtype=F32)
         @ params["embed"] @ params["w_in"] + params["b_in"])
    xc = x.astype(F32)
    cnt = jnp.zeros((n,), F32).at[row].add(1.0)
    inv_cnt = (1.0 / jnp.maximum(cnt, 1.0))[:, None]
    for l in range(N_LAYERS):
        w_ep = f32(params["w_eproj"][l])
        hs, ht = h @ w_ep[:, :H], h @ w_ep[:, H:]
        coord_diff = xc[row] - xc[col]
        radial = jnp.sum(coord_diff * coord_diff, axis=-1, keepdims=True)
        m = (hs[row] + ht[col] + radial * params["w_er"][l]
             + edge_attr.astype(F32) @ f32(params["w_ee"][l]) + params["b_e1"][l])
        m = _silu(m)
        m = _silu(m @ f32(params["w_e2"][l]) + params["b_e2"][l])
        c1 = _silu(m @ f32(params["w_c1"][l]) + params["b_c1"][l])
        c = jnp.sum(c1 * params["w_c2"][l], axis=-1, keepdims=True)
        trans = coord_diff * c
        xc = xc + jnp.zeros((n, _C), F32).at[row].add(trans) * inv_cnt
        aggh = jnp.zeros((n, H), F32).at[row].add(m)
        nmid = _silu(jnp.concatenate([h, aggh], axis=-1) @ f32(params["w_n1"][l])
                     + params["b_n1"][l])
        h = h + nmid @ f32(params["w_n2"][l]) + params["b_n2"][l]
    h = h @ params["w_out"] + params["b_out"]
    out = (jnp.maximum(h @ params["w_m1"] + params["b_m1"], 0.0)
           @ f32(params["w_m2"]) + params["b_m2"])
    return out[ca_idx + ptr[:-1]]


# ------------------------- deterministic parameter init ----------------------


def _linear(key, fan_in, fan_out):
    k1, k2 = jax.random.split(key)
    bound = 1.0 / (fan_in ** 0.5)
    w = jax.random.uniform(k1, (fan_in, fan_out), F32, -bound, bound)
    b = jax.random.uniform(k2, (1, fan_out), F32, -bound, bound)
    return w, b


def init_params(key):
    H = HIDDEN_NF
    ks = iter(jax.random.split(key, 64))
    p = {}
    p["embed"] = jax.random.normal(next(ks), (IN_NODE_NF, IN_NODE_NF), F32)
    p["w_in"], p["b_in"] = _linear(next(ks), IN_NODE_NF, H)

    names = ("w_eproj", "w_er", "w_ee", "b_e1", "w_e2", "b_e2",
             "w_c1", "b_c1", "w_c2", "w_n1", "b_n1", "w_n2", "b_n2")
    per = {k: [] for k in names}
    for _ in range(N_LAYERS):
        in_edge = 2 * H + 1 + IN_EDGE_NF
        w1, b1 = _linear(next(ks), in_edge, H)
        per["w_eproj"].append(jnp.concatenate([w1[:H], w1[H:2 * H]], axis=1))  # [H,2H]
        per["w_er"].append(w1[2 * H:2 * H + 1])                                # [1,H]
        per["w_ee"].append(w1[2 * H + 1:])                                     # [Fe,H]
        per["b_e1"].append(b1)
        w, b = _linear(next(ks), H, H)
        per["w_e2"].append(w); per["b_e2"].append(b)
        w, b = _linear(next(ks), H, H)
        per["w_c1"].append(w); per["b_c1"].append(b)
        wc2, _ = _linear(next(ks), H, 1)
        per["w_c2"].append((wc2 * 0.001).reshape(1, H))     # xavier gain=0.001 analogue
        nw1, nb1 = _linear(next(ks), 2 * H, H)
        per["w_n1"].append(nw1)                             # packed [2H,H] (= [w_nh; w_na])
        per["b_n1"].append(nb1)
        w, b = _linear(next(ks), H, H)
        per["w_n2"].append(w); per["b_n2"].append(b)

    bf16_keys = {"w_eproj", "w_ee", "w_e2", "w_c1", "w_n1", "w_n2"}
    for k, v in per.items():
        stacked = jnp.stack(v)
        p[k] = stacked.astype(BF16) if k in bf16_keys else stacked

    p["w_out"], p["b_out"] = _linear(next(ks), H, H)
    p["w_m1"], p["b_m1"] = _linear(next(ks), H, 2 * H)
    p["w_m2"], p["b_m2"] = _linear(next(ks), 2 * H, OUT_NODE_NF)
    p["w_m2"] = p["w_m2"].astype(BF16)
    return p


# ------------------------- demo -----------------------------------------------

if __name__ == "__main__":
    key = jax.random.PRNGKey(0)
    N_NODES, N_EDGES, N_GRAPHS = 24, 200, 2      # pads to 32 nodes / 256 edges (2 edge tiles)
    keys = jax.random.split(key, 8)

    params = init_params(keys[0])
    h_idx = jax.random.randint(keys[1], (N_NODES,), 0, IN_NODE_NF)          # atom-type ids
    x = jax.random.normal(keys[2], (N_NODES, 3), F32)                       # coordinates
    edges = jax.random.randint(keys[3], (2, N_EDGES), 0, N_NODES)           # [row; col]
    edge_attr = jax.random.normal(keys[4], (N_EDGES, IN_EDGE_NF), F32)      # RBF feats
    ptr = jnp.array([0, 12, 24], dtype=jnp.int32)                           # graph offsets
    ca_idx = jnp.array([3, 5], dtype=jnp.int32)                             # CA per graph

    out = jax.jit(res_egnn_forward)(params, h_idx, x, edges, edge_attr, ca_idx, ptr)
    out = jax.block_until_ready(out)
    assert out.shape == (N_GRAPHS, OUT_NODE_NF) and out.dtype == F32
    assert bool(jnp.all(jnp.isfinite(out)))

    ref = res_egnn_reference(params, h_idx, x, edges, edge_attr, ca_idx, ptr)
    err = float(jnp.max(jnp.abs(out - ref)))
    assert err < 0.3, f"kernel vs reference max abs diff too large: {err}"
    print("KERNEL_OK")
</pallas_src>

<mosaic_0001>
module attributes {stable_mosaic.version = 11 : i64} {
  func.func private @main(%arg0: i32) attributes {dimension_semantics = [#tpu.dimension_semantics<core_parallel>], iteration_bounds = array<i64: 2>, tpu.core_type = #tpu.core_type<sc_scalar_subcore>, window_params = []} {
    return
  }
}

module attributes {stable_mosaic.version = 11 : i64} {
  func.func private @main(%arg0: i32) attributes {dimension_semantics = [#tpu.dimension_semantics<core_parallel>], iteration_bounds = array<i64: 2>, tpu.core_type = #tpu.core_type<sc_scalar_subcore>, window_params = []} {
    return
  }
}

module attributes {stable_mosaic.version = 11 : i64} {
  func.func @fused_res_egnn_kernel(%arg0: i32, %arg1: i32, %arg2: memref<128x2xi32, #tpu.memory_space<vmem>>, %arg3: memref<1x128xi32, #tpu.memory_space<vmem>>, %arg4: memref<128x16xbf16, #tpu.memory_space<vmem>>, %arg5: memref<32x9xbf16, #tpu.memory_space<vmem>>, %arg6: memref<32x3xf32, #tpu.memory_space<vmem>>, %arg7: memref<32x1xf32, #tpu.memory_space<vmem>>, %arg8: memref<2x1xi32, #tpu.memory_space<vmem>>, %arg9: memref<9x32xbf16, #tpu.memory_space<vmem>>, %arg10: memref<1x32xf32, #tpu.memory_space<vmem>>, %arg11: memref<1x32x64xbf16, #tpu.memory_space<vmem>>, %arg12: memref<1x1x32xf32, #tpu.memory_space<vmem>>, %arg13: memref<1x16x32xbf16, #tpu.memory_space<vmem>>, %arg14: memref<1x1x32xf32, #tpu.memory_space<vmem>>, %arg15: memref<1x32x32xbf16, #tpu.memory_space<vmem>>, %arg16: memref<1x1x32xf32, #tpu.memory_space<vmem>>, %arg17: memref<1x32x32xbf16, #tpu.memory_space<vmem>>, %arg18: memref<1x1x32xf32, #tpu.memory_space<vmem>>, %arg19: memref<1x1x32xf32, #tpu.memory_space<vmem>>, %arg20: memref<1x64x32xbf16, #tpu.memory_space<vmem>>, %arg21: memref<1x1x32xf32, #tpu.memory_space<vmem>>, %arg22: memref<1x32x32xbf16, #tpu.memory_space<vmem>>, %arg23: memref<1x1x32xf32, #tpu.memory_space<vmem>>, %arg24: memref<32x64xbf16, #tpu.memory_space<vmem>>, %arg25: memref<1x64xf32, #tpu.memory_space<vmem>>, %arg26: memref<64x20xbf16, #tpu.memory_space<vmem>>, %arg27: memref<1x20xf32, #tpu.memory_space<vmem>>, %arg28: memref<2x20xf32, #tpu.memory_space<vmem>>, %arg29: memref<32x32xf32, #tpu.memory_space<vmem>>, %arg30: memref<32x3xf32, #tpu.memory_space<vmem>>, %arg31: memref<64x3xf32, #tpu.memory_space<vmem>>, %arg32: memref<64x32xbf16, #tpu.memory_space<vmem>>, %arg33: memref<32x35xf32, #tpu.memory_space<vmem>>) attributes {dimension_semantics = [#tpu.dimension_semantics<arbitrary>, #tpu.dimension_semantics<arbitrary>], iteration_bounds = array<i64: 4, 2>, scalar_prefetch = 0 : i64, scratch_operands = 5 : i64, tpu.core_type = #tpu.core_type<tc>, window_params = [{transform_indices = @transform_0, window_bounds = array<i64: 128, 2>}, {transform_indices = @transform_1, window_bounds = array<i64: 1, 128>}, {transform_indices = @transform_2, window_bounds = array<i64: 128, 16>}, {pipeline_mode = #tpu.pipeline_mode<synchronous>, transform_indices = @transform_3, window_bounds = array<i64: 32, 9>}, {pipeline_mode = #tpu.pipeline_mode<synchronous>, transform_indices = @transform_4, window_bounds = array<i64: 32, 3>}, {pipeline_mode = #tpu.pipeline_mode<synchronous>, transform_indices = @transform_5, window_bounds = array<i64: 32, 1>}, {pipeline_mode = #tpu.pipeline_mode<synchronous>, transform_indices = @transform_6, window_bounds = array<i64: 2, 1>}, {pipeline_mode = #tpu.pipeline_mode<synchronous>, transform_indices = @transform_7, window_bounds = array<i64: 9, 32>}, {pipeline_mode = #tpu.pipeline_mode<synchronous>, transform_indices = @transform_8, window_bounds = array<i64: 1, 32>}, {transform_indices = @transform_9, window_bounds = array<i64: 1, 32, 64>}, {transform_indices = @transform_10, window_bounds = array<i64: 1, 1, 32>}, {transform_indices = @transform_11, window_bounds = array<i64: 1, 16, 32>}, {transform_indices = @transform_12, window_bounds = array<i64: 1, 1, 32>}, {transform_indices = @transform_13, window_bounds = array<i64: 1, 32, 32>}, {transform_indices = @transform_14, window_bounds = array<i64: 1, 1, 32>}, {transform_indices = @transform_15, window_bounds = array<i64: 1, 32, 32>}, {transform_indices = @transform_16, window_bounds = array<i64: 1, 1, 32>}, {transform_indices = @transform_17, window_bounds = array<i64: 1, 1, 32>}, {transform_indices = @transform_18, window_bounds = array<i64: 1, 64, 32>}, {transform_indices = @transform_19, window_bounds = array<i64: 1, 1, 32>}, {transform_indices = @transform_20, window_bounds = array<i64: 1, 32, 32>}, {transform_indices = @transform_21, window_bounds = array<i64: 1, 1, 32>}, {pipeline_mode = #tpu.pipeline_mode<synchronous>, transform_indices = @transform_22, window_bounds = array<i64: 32, 64>}, {pipeline_mode = #tpu.pipeline_mode<synchronous>, transform_indices = @transform_23, window_bounds = array<i64: 1, 64>}, {pipeline_mode = #tpu.pipeline_mode<synchronous>, transform_indices = @transform_24, window_bounds = array<i64: 64, 20>}, {pipeline_mode = #tpu.pipeline_mode<synchronous>, transform_indices = @transform_25, window_bounds = array<i64: 1, 20>}, {pipeline_mode = #tpu.pipeline_mode<synchronous>, transform_indices = @transform_26, window_bounds = array<i64: 2, 20>}]} {
    %c0_i32 = arith.constant 0 : i32
    %0 = arith.cmpi eq, %arg0, %c0_i32 : i32
    %c0_i32_0 = arith.constant 0 : i32
    %1 = arith.cmpi eq, %arg1, %c0_i32_0 : i32
    %2 = arith.andi %0, %1 : i1
    %3 = arith.extui %2 : i1 to i32
    %c0_i32_1 = arith.constant 0 : i32
    %4 = arith.cmpi ne, %3, %c0_i32_1 : i32
    scf.if %4 {
      %c0_59 = arith.constant 0 : index
      %c0_60 = arith.constant 0 : index
      %108 = vector.load %arg5[%c0_59, %c0_60] : memref<32x9xbf16, #tpu.memory_space<vmem>>, vector<32x9xbf16>
      %c0_61 = arith.constant 0 : index
      %c0_62 = arith.constant 0 : index
      %109 = vector.load %arg9[%c0_61, %c0_62] : memref<9x32xbf16, #tpu.memory_space<vmem>>, vector<9x32xbf16>
      %cst_63 = arith.constant dense<0.000000e+00> : vector<32x32xf32>
      %110 = tpu.matmul %108, %109, %cst_63 {dimension_numbers = #tpu.dot_dimension_numbers<[1], [0], [0], [1], [0, 0, 1, 1], [], []>} : vector<32x9xbf16>, vector<9x32xbf16>, vector<32x32xf32> -> vector<32x32xf32>
      %c0_64 = arith.constant 0 : index
      %c0_65 = arith.constant 0 : index
      %111 = vector.load %arg10[%c0_64, %c0_65] : memref<1x32xf32, #tpu.memory_space<vmem>>, vector<1x32xf32>
      %112 = vector.broadcast %111 : vector<1x32xf32> to vector<32x32xf32>
      %113 = arith.addf %110, %112 : vector<32x32xf32>
      %c0_66 = arith.constant 0 : index
      %c0_67 = arith.constant 0 : index
      %114 = vector.load %arg29[%c0_66, %c0_67] : memref<32x32xf32, #tpu.memory_space<vmem>>, vector<32x32xf32>
      tpu.vector_store %arg29[%c0_66, %c0_67], %113 {strides = array<i32>} : memref<32x32xf32, #tpu.memory_space<vmem>>, vector<32x32xf32>,
      %c0_68 = arith.constant 0 : index
      %c0_69 = arith.constant 0 : index
      %115 = vector.load %arg6[%c0_68, %c0_69] : memref<32x3xf32, #tpu.memory_space<vmem>>, vector<32x3xf32>
      %c0_70 = arith.constant 0 : index
      %c0_71 = arith.constant 0 : index
      %116 = vector.load %arg30[%c0_70, %c0_71] : memref<32x3xf32, #tpu.memory_space<vmem>>, vector<32x3xf32>
      tpu.vector_store %arg30[%c0_70, %c0_71], %115 {strides = array<i32>} : memref<32x3xf32, #tpu.memory_space<vmem>>, vector<32x3xf32>,
    } else {
    }
    %c0_i32_2 = arith.constant 0 : i32
    %5 = arith.cmpi eq, %arg1, %c0_i32_2 : i32
    %6 = arith.extui %5 : i1 to i32
    %c0_i32_3 = arith.constant 0 : i32
    %7 = arith.cmpi ne, %6, %c0_i32_3 : i32
    scf.if %7 {
      %c0_59 = arith.constant 0 : index
      %c0_60 = arith.constant 0 : index
      %108 = vector.load %arg29[%c0_59, %c0_60] : memref<32x32xf32, #tpu.memory_space<vmem>>, vector<32x32xf32>
      %109 = arith.truncf %108 : vector<32x32xf32> to vector<32x32xbf16>
      %c0_61 = arith.constant 0 : index
      %c0_62 = arith.constant 0 : index
      %c0_63 = arith.constant 0 : index
      %110 = vector.load %arg11[%c0_61, %c0_62, %c0_63] : memref<1x32x64xbf16, #tpu.memory_space<vmem>>, vector<1x32x64xbf16>
      %111 = vector.shape_cast %110 : vector<1x32x64xbf16> to vector<32x64xbf16>
      %cst_64 = arith.constant dense<0.000000e+00> : vector<32x64xf32>
      %112 = tpu.matmul %109, %111, %cst_64 {dimension_numbers = #tpu.dot_dimension_numbers<[1], [0], [0], [1], [0, 0, 1, 1], [], []>} : vector<32x32xbf16>, vector<32x64xbf16>, vector<32x64xf32> -> vector<32x64xf32>
      %113 = vector.extract_strided_slice %112 {offsets = [0, 0], sizes = [32, 32], strides = [1, 1]} : vector<32x64xf32> to vector<32x32xf32>
      %114 = arith.truncf %113 : vector<32x32xf32> to vector<32x32xbf16>
      %c0_65 = arith.constant 0 : index
      %c0_66 = arith.constant 0 : index
      %115 = vector.load %arg32[%c0_65, %c0_66] : memref<64x32xbf16, #tpu.memory_space<vmem>>, vector<32x32xbf16>
      tpu.vector_store %arg32[%c0_65, %c0_66], %114 {strides = array<i32>} : memref<64x32xbf16, #tpu.memory_space<vmem>>, vector<32x32xbf16>,
      %116 = vector.extract_strided_slice %112 {offsets = [0, 32], sizes = [32, 32], strides = [1, 1]} : vector<32x64xf32> to vector<32x32xf32>
      %117 = arith.truncf %116 : vector<32x32xf32> to vector<32x32xbf16>
      %c32 = arith.constant 32 : index
      %c0_67 = arith.constant 0 : index
      %118 = vector.load %arg32[%c32, %c0_67] : memref<64x32xbf16, #tpu.memory_space<vmem>>, vector<32x32xbf16>
      tpu.vector_store %arg32[%c32, %c0_67], %117 {strides = array<i32>} : memref<64x32xbf16, #tpu.memory_space<vmem>>, vector<32x32xbf16>,
      %c0_68 = arith.constant 0 : index
      %c0_69 = arith.constant 0 : index
      %119 = vector.load %arg30[%c0_68, %c0_69] : memref<32x3xf32, #tpu.memory_space<vmem>>, vector<32x3xf32>
      %c0_70 = arith.constant 0 : index
      %c0_71 = arith.constant 0 : index
      %120 = vector.load %arg31[%c0_70, %c0_71] : memref<64x3xf32, #tpu.memory_space<vmem>>, vector<32x3xf32>
      tpu.vector_store %arg31[%c0_70, %c0_71], %119 {strides = array<i32>} : memref<64x3xf32, #tpu.memory_space<vmem>>, vector<32x3xf32>,
      %cst_72 = arith.constant 0.000000e+00 : f32
      %121 = vector.broadcast %cst_72 : f32 to vector<32x3xf32>
      %122 = arith.subf %121, %119 : vector<32x3xf32>
      %c32_73 = arith.constant 32 : index
      %c0_74 = arith.constant 0 : index
      %123 = vector.load %arg31[%c32_73, %c0_74] : memref<64x3xf32, #tpu.memory_space<vmem>>, vector<32x3xf32>
      tpu.vector_store %arg31[%c32_73, %c0_74], %122 {strides = array<i32>} : memref<64x3xf32, #tpu.memory_space<vmem>>, vector<32x3xf32>,
      %cst_75 = arith.constant 0.000000e+00 : f32
      %124 = vector.broadcast %cst_75 : f32 to vector<32x35xf32>
      %c0_76 = arith.constant 0 : index
      %c0_77 = arith.constant 0 : index
      %125 = vector.load %arg33[%c0_76, %c0_77] : memref<32x35xf32, #tpu.memory_space<vmem>>, vector<32x35xf32>
      tpu.vector_store %arg33[%c0_76, %c0_77], %124 {strides = array<i32>} : memref<32x35xf32, #tpu.memory_space<vmem>>, vector<32x35xf32>,
    } else {
    }
    %c0 = arith.constant 0 : index
    %c0_4 = arith.constant 0 : index
    %8 = vector.load %arg2[%c0, %c0_4] : memref<128x2xi32, #tpu.memory_space<vmem>>, vector<128x1xi32>
    %c0_5 = arith.constant 0 : index
    %c1 = arith.constant 1 : index
    %9 = vector.load %arg2[%c0_5, %c1] : memref<128x2xi32, #tpu.memory_space<vmem>>, vector<128x1xi32>
    %10 = tpu.iota {dimensions = array<i32: 1>} : vector<128x64xi32>
    %11 = vector.broadcast %8 : vector<128x1xi32> to vector<128x64xi32>
    %12 = arith.cmpi eq, %10, %11 : vector<128x64xi32>
    %c32_i32 = arith.constant 32 : i32
    %13 = vector.broadcast %c32_i32 : i32 to vector<128x1xi32>
    %14 = arith.addi %9, %13 : vector<128x1xi32>
    %15 = vector.broadcast %14 : vector<128x1xi32> to vector<128x64xi32>
    %16 = arith.cmpi eq, %10, %15 : vector<128x64xi32>
    %17 = arith.ori %12, %16 : vector<128x64xi1>
    %cst = arith.constant 1.000000e+00 : f32
    %cst_6 = arith.constant 0.000000e+00 : f32
    %18 = vector.broadcast %cst : f32 to vector<128x64xf32>
    %19 = vector.broadcast %cst_6 : f32 to vector<128x64xf32>
    %20 = arith.select %17, %18, %19 : vector<128x64xi1>, vector<128x64xf32>
    %21 = arith.truncf %20 : vector<128x64xf32> to vector<128x64xbf16>
    %c0_7 = arith.constant 0 : index
    %c0_8 = arith.constant 0 : index
    %22 = vector.load %arg31[%c0_7, %c0_8] : memref<64x3xf32, #tpu.memory_space<vmem>>, vector<64x3xf32>
    %cst_9 = arith.constant dense<0.000000e+00> : vector<128x3xf32>
    %23 = tpu.matmul %20, %22, %cst_9 {dimension_numbers = #tpu.dot_dimension_numbers<[1], [0], [0], [1], [0, 0, 1, 1], [], []>} : vector<128x64xf32>, vector<64x3xf32>, vector<128x3xf32> -> vector<128x3xf32>
    %c0_10 = arith.constant 0 : index
    %c0_11 = arith.constant 0 : index
    %24 = vector.load %arg32[%c0_10, %c0_11] : memref<64x32xbf16, #tpu.memory_space<vmem>>, vector<64x32xbf16>
    %cst_12 = arith.constant dense<0.000000e+00> : vector<128x32xf32>
    %25 = tpu.matmul %21, %24, %cst_12 {dimension_numbers = #tpu.dot_dimension_numbers<[1], [0], [0], [1], [0, 0, 1, 1], [], []>} : vector<128x64xbf16>, vector<64x32xbf16>, vector<128x32xf32> -> vector<128x32xf32>
    %26 = arith.mulf %23, %23 : vector<128x3xf32>
    %cst_13 = arith.constant dense<0.000000e+00> : vector<128xf32>
    %27 = vector.multi_reduction <add>, %26, %cst_13 [1] : vector<128x3xf32> to vector<128xf32>
    %28 = vector.shape_cast %27 : vector<128xf32> to vector<128x1xf32>
    %c0_14 = arith.constant 0 : index
    %c0_15 = arith.constant 0 : index
    %29 = vector.load %arg4[%c0_14, %c0_15] : memref<128x16xbf16, #tpu.memory_space<vmem>>, vector<128x16xbf16>
    %c0_16 = arith.constant 0 : index
    %c0_17 = arith.constant 0 : index
    %c0_18 = arith.constant 0 : index
    %30 = vector.load %arg13[%c0_16, %c0_17, %c0_18] : memref<1x16x32xbf16, #tpu.memory_space<vmem>>, vector<1x16x32xbf16>
    %31 = vector.shape_cast %30 : vector<1x16x32xbf16> to vector<16x32xbf16>
    %cst_19 = arith.constant dense<0.000000e+00> : vector<128x32xf32>
    %32 = tpu.matmul %29, %31, %cst_19 {dimension_numbers = #tpu.dot_dimension_numbers<[1], [0], [0], [1], [0, 0, 1, 1], [], []>} : vector<128x16xbf16>, vector<16x32xbf16>, vector<128x32xf32> -> vector<128x32xf32>
    %c0_20 = arith.constant 0 : index
    %c0_21 = arith.constant 0 : index
    %c0_22 = arith.constant 0 : index
    %33 = vector.load %arg12[%c0_20, %c0_21, %c0_22] : memref<1x1x32xf32, #tpu.memory_space<vmem>>, vector<1x1x32xf32>
    %34 = vector.shape_cast %33 : vector<1x1x32xf32> to vector<1x32xf32>
    %35 = vector.broadcast %28 : vector<128x1xf32> to vector<128x32xf32>
    %36 = vector.broadcast %34 : vector<1x32xf32> to vector<128x32xf32>
    %37 = arith.mulf %35, %36 : vector<128x32xf32>
    %38 = arith.addf %25, %37 : vector<128x32xf32>
    %39 = arith.addf %38, %32 : vector<128x32xf32>
    %c0_23 = arith.constant 0 : index
    %c0_24 = arith.constant 0 : index
    %c0_25 = arith.constant 0 : index
    %40 = vector.load %arg14[%c0_23, %c0_24, %c0_25] : memref<1x1x32xf32, #tpu.memory_space<vmem>>, vector<1x1x32xf32>
    %41 = vector.shape_cast %40 : vector<1x1x32xf32> to vector<1x32xf32>
    %42 = vector.broadcast %41 : vector<1x32xf32> to vector<128x32xf32>
    %43 = arith.addf %39, %42 : vector<128x32xf32>
    %44 = arith.negf %43 : vector<128x32xf32>
    %45 = math.exp %44 : vector<128x32xf32>
    %cst_26 = arith.constant 1.000000e+00 : f32
    %46 = vector.broadcast %cst_26 : f32 to vector<128x32xf32>
    %47 = arith.addf %46, %45 : vector<128x32xf32>
    %48 = arith.divf %46, %47 : vector<128x32xf32>
    %49 = arith.mulf %43, %48 : vector<128x32xf32>
    %50 = arith.truncf %49 : vector<128x32xf32> to vector<128x32xbf16>
    %c0_27 = arith.constant 0 : index
    %c0_28 = arith.constant 0 : index
    %c0_29 = arith.constant 0 : index
    %51 = vector.load %arg15[%c0_27, %c0_28, %c0_29] : memref<1x32x32xbf16, #tpu.memory_space<vmem>>, vector<1x32x32xbf16>
    %52 = vector.shape_cast %51 : vector<1x32x32xbf16> to vector<32x32xbf16>
    %cst_30 = arith.constant dense<0.000000e+00> : vector<128x32xf32>
    %53 = tpu.matmul %50, %52, %cst_30 {dimension_numbers = #tpu.dot_dimension_numbers<[1], [0], [0], [1], [0, 0, 1, 1], [], []>} : vector<128x32xbf16>, vector<32x32xbf16>, vector<128x32xf32> -> vector<128x32xf32>
    %c0_31 = arith.constant 0 : index
    %c0_32 = arith.constant 0 : index
    %c0_33 = arith.constant 0 : index
    %54 = vector.load %arg16[%c0_31, %c0_32, %c0_33] : memref<1x1x32xf32, #tpu.memory_space<vmem>>, vector<1x1x32xf32>
    %55 = vector.shape_cast %54 : vector<1x1x32xf32> to vector<1x32xf32>
    %56 = vector.broadcast %55 : vector<1x32xf32> to vector<128x32xf32>
    %57 = arith.addf %53, %56 : vector<128x32xf32>
    %58 = arith.negf %57 : vector<128x32xf32>
    %59 = math.exp %58 : vector<128x32xf32>
    %cst_34 = arith.constant 1.000000e+00 : f32
    %60 = vector.broadcast %cst_34 : f32 to vector<128x32xf32>
    %61 = arith.addf %60, %59 : vector<128x32xf32>
    %62 = arith.divf %60, %61 : vector<128x32xf32>
    %63 = arith.mulf %57, %62 : vector<128x32xf32>
    %64 = arith.truncf %63 : vector<128x32xf32> to vector<128x32xbf16>
    %c0_35 = arith.constant 0 : index
    %c0_36 = arith.constant 0 : index
    %c0_37 = arith.constant 0 : index
    %65 = vector.load %arg17[%c0_35, %c0_36, %c0_37] : memref<1x32x32xbf16, #tpu.memory_space<vmem>>, vector<1x32x32xbf16>
    %66 = vector.shape_cast %65 : vector<1x32x32xbf16> to vector<32x32xbf16>
    %cst_38 = arith.constant dense<0.000000e+00> : vector<128x32xf32>
    %67 = tpu.matmul %64, %66, %cst_38 {dimension_numbers = #tpu.dot_dimension_numbers<[1], [0], [0], [1], [0, 0, 1, 1], [], []>} : vector<128x32xbf16>, vector<32x32xbf16>, vector<128x32xf32> -> vector<128x32xf32>
    %c0_39 = arith.constant 0 : index
    %c0_40 = arith.constant 0 : index
    %c0_41 = arith.constant 0 : index
    %68 = vector.load %arg18[%c0_39, %c0_40, %c0_41] : memref<1x1x32xf32, #tpu.memory_space<vmem>>, vector<1x1x32xf32>
    %69 = vector.shape_cast %68 : vector<1x1x32xf32> to vector<1x32xf32>
    %70 = vector.broadcast %69 : vector<1x32xf32> to vector<128x32xf32>
    %71 = arith.addf %67, %70 : vector<128x32xf32>
    %72 = arith.negf %71 : vector<128x32xf32>
    %73 = math.exp %72 : vector<128x32xf32>
    %cst_42 = arith.constant 1.000000e+00 : f32
    %74 = vector.broadcast %cst_42 : f32 to vector<128x32xf32>
    %75 = arith.addf %74, %73 : vector<128x32xf32>
    %76 = arith.divf %74, %75 : vector<128x32xf32>
    %77 = arith.mulf %71, %76 : vector<128x32xf32>
    %c0_43 = arith.constant 0 : index
    %c0_44 = arith.constant 0 : index
    %c0_45 = arith.constant 0 : index
    %78 = vector.load %arg19[%c0_43, %c0_44, %c0_45] : memref<1x1x32xf32, #tpu.memory_space<vmem>>, vector<1x1x32xf32>
    %79 = vector.shape_cast %78 : vector<1x1x32xf32> to vector<1x32xf32>
    %80 = vector.broadcast %79 : vector<1x32xf32> to vector<128x32xf32>
    %81 = arith.mulf %77, %80 : vector<128x32xf32>
    %cst_46 = arith.constant dense<0.000000e+00> : vector<128xf32>
    %82 = vector.multi_reduction <add>, %81, %cst_46 [1] : vector<128x32xf32> to vector<128xf32>
    %83 = vector.shape_cast %82 : vector<128xf32> to vector<128x1xf32>
    %84 = vector.broadcast %83 : vector<128x1xf32> to vector<128x3xf32>
    %85 = arith.mulf %23, %84 : vector<128x3xf32>
    %86 = tpu.concatenate %85, %63 in 1 : vector<128x3xf32>, vector<128x32xf32> -> vector<128x35xf32>
    %87 = arith.truncf %86 : vector<128x35xf32> to vector<128x35xbf16>
    %88 = tpu.iota {dimensions = array<i32: 0>} : vector<32x128xi32>
    %c0_47 = arith.constant 0 : index
    %c0_48 = arith.constant 0 : index
    %89 = vector.load %arg3[%c0_47, %c0_48] : memref<1x128xi32, #tpu.memory_space<vmem>>, vector<1x128xi32>
    %90 = vector.broadcast %89 : vector<1x128xi32> to vector<32x128xi32>
    %91 = arith.cmpi eq, %88, %90 : vector<32x128xi32>
    %cst_49 = arith.constant 1.000000e+00 : f32
    %cst_50 = arith.constant 0.000000e+00 : f32
    %92 = vector.broadcast %cst_49 : f32 to vector<32x128xf32>
    %93 = vector.broadcast %cst_50 : f32 to vector<32x128xf32>
    %94 = arith.select %91, %92, %93 : vector<32x128xi1>, vector<32x128xf32>
    %95 = arith.truncf %94 : vector<32x128xf32> to vector<32x128xbf16>
    %c0_51 = arith.constant 0 : index
    %c0_52 = arith.constant 0 : index
    %96 = vector.load %arg33[%c0_51, %c0_52] : memref<32x35xf32, #tpu.memory_space<vmem>>, vector<32x35xf32>
    %cst_53 = arith.constant dense<0.000000e+00> : vector<32x35xf32>
    %97 = tpu.matmul %95, %87, %cst_53 {dimension_numbers = #tpu.dot_dimension_numbers<[1], [0], [0], [1], [0, 0, 1, 1], [], []>} : vector<32x128xbf16>, vector<128x35xbf16>, vector<32x35xf32> -> vector<32x35xf32>
    %98 = arith.addf %96, %97 : vector<32x35xf32>
    %c0_54 = arith.constant 0 : index
    %c0_55 = arith.constant 0 : index
    %99 = vector.load %arg33[%c0_54, %c0_55] : memref<32x35xf32, #tpu.memory_space<vmem>>, vector<32x35xf32>
    tpu.vector_store %arg33[%c0_54, %c0_55], %98 {strides = array<i32>} : memref<32x35xf32, #tpu.memory_space<vmem>>, vector<32x35xf32>,
    %c1_i32 = arith.constant 1 : i32
    %100 = arith.cmpi eq, %arg1, %c1_i32 : i32
    %101 = arith.extui %100 : i1 to i32
    %c0_i32_56 = arith.constant 0 : i32
    %102 = arith.cmpi ne, %101, %c0_i32_56 : i32
    scf.if %102 {
      %c0_59 = arith.constant 0 : index
      %c0_60 = arith.constant 0 : index
      %108 = vector.load %arg33[%c0_59, %c0_60] : memref<32x35xf32, #tpu.memory_space<vmem>>, vector<32x35xf32>
      %c0_61 = arith.constant 0 : index
      %c0_62 = arith.constant 0 : index
      %109 = vector.load %arg30[%c0_61, %c0_62] : memref<32x3xf32, #tpu.memory_space<vmem>>, vector<32x3xf32>
      %110 = vector.extract_strided_slice %108 {offsets = [0, 0], sizes = [32, 3], strides = [1, 1]} : vector<32x35xf32> to vector<32x3xf32>
      %c0_63 = arith.constant 0 : index
      %c0_64 = arith.constant 0 : index
      %111 = vector.load %arg7[%c0_63, %c0_64] : memref<32x1xf32, #tpu.memory_space<vmem>>, vector<32x1xf32>
      %112 = vector.broadcast %111 : vector<32x1xf32> to vector<32x3xf32>
      %113 = arith.mulf %110, %112 : vector<32x3xf32>
      %114 = arith.addf %109, %113 : vector<32x3xf32>
      %c0_65 = arith.constant 0 : index
      %c0_66 = arith.constant 0 : index
      %115 = vector.load %arg30[%c0_65, %c0_66] : memref<32x3xf32, #tpu.memory_space<vmem>>, vector<32x3xf32>
      tpu.vector_store %arg30[%c0_65, %c0_66], %114 {strides = array<i32>} : memref<32x3xf32, #tpu.memory_space<vmem>>, vector<32x3xf32>,
      %c0_67 = arith.constant 0 : index
      %c0_68 = arith.constant 0 : index
      %116 = vector.load %arg29[%c0_67, %c0_68] : memref<32x32xf32, #tpu.memory_space<vmem>>, vector<32x32xf32>
      %117 = arith.truncf %116 : vector<32x32xf32> to vector<32x32xbf16>
      %118 = vector.extract_strided_slice %108 {offsets = [0, 3], sizes = [32, 32], strides = [1, 1]} : vector<32x35xf32> to vector<32x32xf32>
      %119 = arith.truncf %118 : vector<32x32xf32> to vector<32x32xbf16>
      %120 = tpu.concatenate %117, %119 in 1 : vector<32x32xbf16>, vector<32x32xbf16> -> vector<32x64xbf16>
      %c0_69 = arith.constant 0 : index
      %c0_70 = arith.constant 0 : index
      %c0_71 = arith.constant 0 : index
      %121 = vector.load %arg20[%c0_69, %c0_70, %c0_71] : memref<1x64x32xbf16, #tpu.memory_space<vmem>>, vector<1x64x32xbf16>
      %122 = vector.shape_cast %121 : vector<1x64x32xbf16> to vector<64x32xbf16>
      %cst_72 = arith.constant dense<0.000000e+00> : vector<32x32xf32>
      %123 = tpu.matmul %120, %122, %cst_72 {dimension_numbers = #tpu.dot_dimension_numbers<[1], [0], [0], [1], [0, 0, 1, 1], [], []>} : vector<32x64xbf16>, vector<64x32xbf16>, vector<32x32xf32> -> vector<32x32xf32>
      %c0_73 = arith.constant 0 : index
      %c0_74 = arith.constant 0 : index
      %c0_75 = arith.constant 0 : index
      %124 = vector.load %arg21[%c0_73, %c0_74, %c0_75] : memref<1x1x32xf32, #tpu.memory_space<vmem>>, vector<1x1x32xf32>
      %125 = vector.shape_cast %124 : vector<1x1x32xf32> to vector<1x32xf32>
      %126 = vector.broadcast %125 : vector<1x32xf32> to vector<32x32xf32>
      %127 = arith.addf %123, %126 : vector<32x32xf32>
      %128 = arith.negf %127 : vector<32x32xf32>
      %129 = math.exp %128 : vector<32x32xf32>
      %cst_76 = arith.constant 1.000000e+00 : f32
      %130 = vector.broadcast %cst_76 : f32 to vector<32x32xf32>
      %131 = arith.addf %130, %129 : vector<32x32xf32>
      %132 = arith.divf %130, %131 : vector<32x32xf32>
      %133 = arith.mulf %127, %132 : vector<32x32xf32>
      %134 = arith.truncf %133 : vector<32x32xf32> to vector<32x32xbf16>
      %c0_77 = arith.constant 0 : index
      %c0_78 = arith.constant 0 : index
      %c0_79 = arith.constant 0 : index
      %135 = vector.load %arg22[%c0_77, %c0_78, %c0_79] : memref<1x32x32xbf16, #tpu.memory_space<vmem>>, vector<1x32x32xbf16>
      %136 = vector.shape_cast %135 : vector<1x32x32xbf16> to vector<32x32xbf16>
      %cst_80 = arith.constant dense<0.000000e+00> : vector<32x32xf32>
      %137 = tpu.matmul %134, %136, %cst_80 {dimension_numbers = #tpu.dot_dimension_numbers<[1], [0], [0], [1], [0, 0, 1, 1], [], []>} : vector<32x32xbf16>, vector<32x32xbf16>, vector<32x32xf32> -> vector<32x32xf32>
      %138 = arith.addf %116, %137 : vector<32x32xf32>
      %c0_81 = arith.constant 0 : index
      %c0_82 = arith.constant 0 : index
      %c0_83 = arith.constant 0 : index
      %139 = vector.load %arg23[%c0_81, %c0_82, %c0_83] : memref<1x1x32xf32, #tpu.memory_space<vmem>>, vector<1x1x32xf32>
      %140 = vector.shape_cast %139 : vector<1x1x32xf32> to vector<1x32xf32>
      %141 = vector.broadcast %140 : vector<1x32xf32> to vector<32x32xf32>
      %142 = arith.addf %138, %141 : vector<32x32xf32>
      %c0_84 = arith.constant 0 : index
      %c0_85 = arith.constant 0 : index
      %143 = vector.load %arg29[%c0_84, %c0_85] : memref<32x32xf32, #tpu.memory_space<vmem>>, vector<32x32xf32>
      tpu.vector_store %arg29[%c0_84, %c0_85], %142 {strides = array<i32>} : memref<32x32xf32, #tpu.memory_space<vmem>>, vector<32x32xf32>,
    } else {
    }
    %c3_i32 = arith.constant 3 : i32
    %103 = arith.cmpi eq, %arg0, %c3_i32 : i32
    %c1_i32_57 = arith.constant 1 : i32
    %104 = arith.cmpi eq, %arg1, %c1_i32_57 : i32
    %105 = arith.andi %103, %104 : i1
    %106 = arith.extui %105 : i1 to i32
    %c0_i32_58 = arith.constant 0 : i32
    %107 = arith.cmpi ne, %106, %c0_i32_58 : i32
    scf.if %107 {
      %108 = tpu.iota {dimensions = array<i32: 1>} : vector<2x32xi32>
      %c0_59 = arith.constant 0 : index
      %c0_60 = arith.constant 0 : index
      %109 = vector.load %arg8[%c0_59, %c0_60] : memref<2x1xi32, #tpu.memory_space<vmem>>, vector<2x1xi32>
      %110 = vector.broadcast %109 : vector<2x1xi32> to vector<2x32xi32>
      %111 = arith.cmpi eq, %108, %110 : vector<2x32xi32>
      %cst_61 = arith.constant 1.000000e+00 : f32
      %cst_62 = arith.constant 0.000000e+00 : f32
      %112 = vector.broadcast %cst_61 : f32 to vector<2x32xf32>
      %113 = vector.broadcast %cst_62 : f32 to vector<2x32xf32>
      %114 = arith.select %111, %112, %113 : vector<2x32xi1>, vector<2x32xf32>
      %115 = arith.truncf %114 : vector<2x32xf32> to vector<2x32xbf16>
      %c0_63 = arith.constant 0 : index
      %c0_64 = arith.constant 0 : index
      %116 = vector.load %arg29[%c0_63, %c0_64] : memref<32x32xf32, #tpu.memory_space<vmem>>, vector<32x32xf32>
      %117 = arith.truncf %116 : vector<32x32xf32> to vector<32x32xbf16>
      %cst_65 = arith.constant dense<0.000000e+00> : vector<2x32xf32>
      %118 = tpu.matmul %115, %117, %cst_65 {dimension_numbers = #tpu.dot_dimension_numbers<[1], [0], [0], [1], [0, 0, 1, 1], [], []>} : vector<2x32xbf16>, vector<32x32xbf16>, vector<2x32xf32> -> vector<2x32xf32>
      %119 = arith.truncf %118 : vector<2x32xf32> to vector<2x32xbf16>
      %c0_66 = arith.constant 0 : index
      %c0_67 = arith.constant 0 : index
      %120 = vector.load %arg24[%c0_66, %c0_67] : memref<32x64xbf16, #tpu.memory_space<vmem>>, vector<32x64xbf16>
      %cst_68 = arith.constant dense<0.000000e+00> : vector<2x64xf32>
      %121 = tpu.matmul %119, %120, %cst_68 {dimension_numbers = #tpu.dot_dimension_numbers<[1], [0], [0], [1], [0, 0, 1, 1], [], []>} : vector<2x32xbf16>, vector<32x64xbf16>, vector<2x64xf32> -> vector<2x64xf32>
      %c0_69 = arith.constant 0 : index
      %c0_70 = arith.constant 0 : index
      %122 = vector.load %arg25[%c0_69, %c0_70] : memref<1x64xf32, #tpu.memory_space<vmem>>, vector<1x64xf32>
      %123 = vector.broadcast %122 : vector<1x64xf32> to vector<2x64xf32>
      %124 = arith.addf %121, %123 : vector<2x64xf32>
      %cst_71 = arith.constant 0.000000e+00 : f32
      %125 = vector.broadcast %cst_71 : f32 to vector<2x64xf32>
      %126 = arith.maximumf %124, %125 : vector<2x64xf32>
      %127 = arith.truncf %126 : vector<2x64xf32> to vector<2x64xbf16>
      %c0_72 = arith.constant 0 : index
      %c0_73 = arith.constant 0 : index
      %128 = vector.load %arg26[%c0_72, %c0_73] : memref<64x20xbf16, #tpu.memory_space<vmem>>, vector<64x20xbf16>
      %cst_74 = arith.constant dense<0.000000e+00> : vector<2x20xf32>
      %129 = tpu.matmul %127, %128, %cst_74 {dimension_numbers = #tpu.dot_dimension_numbers<[1], [0], [0], [1], [0, 0, 1, 1], [], []>} : vector<2x64xbf16>, vector<64x20xbf16>, vector<2x20xf32> -> vector<2x20xf32>
      %c0_75 = arith.constant 0 : index
      %c0_76 = arith.constant 0 : index
      %130 = vector.load %arg27[%c0_75, %c0_76] : memref<1x20xf32, #tpu.memory_space<vmem>>, vector<1x20xf32>
      %131 = vector.broadcast %130 : vector<1x20xf32> to vector<2x20xf32>
      %132 = arith.addf %129, %131 : vector<2x20xf32>
      %c0_77 = arith.constant 0 : index
      %c0_78 = arith.constant 0 : index
      %133 = vector.load %arg28[%c0_77, %c0_78] : memref<2x20xf32, #tpu.memory_space<vmem>>, vector<2x20xf32>
      tpu.vector_store %arg28[%c0_77, %c0_78], %132 {strides = array<i32>} : memref<2x20xf32, #tpu.memory_space<vmem>>, vector<2x20xf32>,
    } else {
    }
    return
  }
  func.func @transform_0(%arg0: i32, %arg1: i32) -> (i32, i32) {
    %c0_i32 = arith.constant 0 : i32
    %c0_i32_0 = arith.constant 0 : i32
    return %arg1, %c0_i32 : i32, i32
  }
  func.func @transform_1(%arg0: i32, %arg1: i32) -> (i32, i32) {
    %c0_i32 = arith.constant 0 : i32
    %c0_i32_0 = arith.constant 0 : i32
    return %c0_i32, %arg1 : i32, i32
  }
  func.func @transform_2(%arg0: i32, %arg1: i32) -> (i32, i32) {
    %c0_i32 = arith.constant 0 : i32
    %c0_i32_0 = arith.constant 0 : i32
    return %arg1, %c0_i32 : i32, i32
  }
  func.func @transform_3(%arg0: i32, %arg1: i32) -> (i32, i32) {
    %c0_i32 = arith.constant 0 : i32
    %c0_i32_0 = arith.constant 0 : i32
    %c0_i32_1 = arith.constant 0 : i32
    return %c0_i32, %c0_i32_0 : i32, i32
  }
  func.func @transform_4(%arg0: i32, %arg1: i32) -> (i32, i32) {
    %c0_i32 = arith.constant 0 : i32
    %c0_i32_0 = arith.constant 0 : i32
    %c0_i32_1 = arith.constant 0 : i32
    return %c0_i32, %c0_i32_0 : i32, i32
  }
  func.func @transform_5(%arg0: i32, %arg1: i32) -> (i32, i32) {
    %c0_i32 = arith.constant 0 : i32
    %c0_i32_0 = arith.constant 0 : i32
    %c0_i32_1 = arith.constant 0 : i32
    return %c0_i32, %c0_i32_0 : i32, i32
  }
  func.func @transform_6(%arg0: i32, %arg1: i32) -> (i32, i32) {
    %c0_i32 = arith.constant 0 : i32
    %c0_i32_0 = arith.constant 0 : i32
    %c0_i32_1 = arith.constant 0 : i32
    return %c0_i32, %c0_i32_0 : i32, i32
  }
  func.func @transform_7(%arg0: i32, %arg1: i32) -> (i32, i32) {
    %c0_i32 = arith.constant 0 : i32
    %c0_i32_0 = arith.constant 0 : i32
    %c0_i32_1 = arith.constant 0 : i32
    return %c0_i32, %c0_i32_0 : i32, i32
  }
  func.func @transform_8(%arg0: i32, %arg1: i32) -> (i32, i32) {
    %c0_i32 = arith.constant 0 : i32
    %c0_i32_0 = arith.constant 0 : i32
    %c0_i32_1 = arith.constant 0 : i32
    return %c0_i32, %c0_i32_0 : i32, i32
  }
  func.func @transform_9(%arg0: i32, %arg1: i32) -> (i32, i32, i32) {
    %c0_i32 = arith.constant 0 : i32
    %c0_i32_0 = arith.constant 0 : i32
    %c0_i32_1 = arith.constant 0 : i32
    return %arg0, %c0_i32, %c0_i32_0 : i32, i32, i32
  }
  func.func @transform_10(%arg0: i32, %arg1: i32) -> (i32, i32, i32) {
    %c0_i32 = arith.constant 0 : i32
    %c0_i32_0 = arith.constant 0 : i32
    %c0_i32_1 = arith.constant 0 : i32
    return %arg0, %c0_i32, %c0_i32_0 : i32, i32, i32
  }
  func.func @transform_11(%arg0: i32, %arg1: i32) -> (i32, i32, i32) {
    %c0_i32 = arith.constant 0 : i32
    %c0_i32_0 = arith.constant 0 : i32
    %c0_i32_1 = arith.constant 0 : i32
    return %arg0, %c0_i32, %c0_i32_0 : i32, i32, i32
  }
  func.func @transform_12(%arg0: i32, %arg1: i32) -> (i32, i32, i32) {
    %c0_i32 = arith.constant 0 : i32
    %c0_i32_0 = arith.constant 0 : i32
    %c0_i32_1 = arith.constant 0 : i32
    return %arg0, %c0_i32, %c0_i32_0 : i32, i32, i32
  }
  func.func @transform_13(%arg0: i32, %arg1: i32) -> (i32, i32, i32) {
    %c0_i32 = arith.constant 0 : i32
    %c0_i32_0 = arith.constant 0 : i32
    %c0_i32_1 = arith.constant 0 : i32
    return %arg0, %c0_i32, %c0_i32_0 : i32, i32, i32
  }
  func.func @transform_14(%arg0: i32, %arg1: i32) -> (i32, i32, i32) {
    %c0_i32 = arith.constant 0 : i32
    %c0_i32_0 = arith.constant 0 : i32
    %c0_i32_1 = arith.constant 0 : i32
    return %arg0, %c0_i32, %c0_i32_0 : i32, i32, i32
  }
  func.func @transform_15(%arg0: i32, %arg1: i32) -> (i32, i32, i32) {
    %c0_i32 = arith.constant 0 : i32
    %c0_i32_0 = arith.constant 0 : i32
    %c0_i32_1 = arith.constant 0 : i32
    return %arg0, %c0_i32, %c0_i32_0 : i32, i32, i32
  }
  func.func @transform_16(%arg0: i32, %arg1: i32) -> (i32, i32, i32) {
    %c0_i32 = arith.constant 0 : i32
    %c0_i32_0 = arith.constant 0 : i32
    %c0_i32_1 = arith.constant 0 : i32
    return %arg0, %c0_i32, %c0_i32_0 : i32, i32, i32
  }
  func.func @transform_17(%arg0: i32, %arg1: i32) -> (i32, i32, i32) {
    %c0_i32 = arith.constant 0 : i32
    %c0_i32_0 = arith.constant 0 : i32
    %c0_i32_1 = arith.constant 0 : i32
    return %arg0, %c0_i32, %c0_i32_0 : i32, i32, i32
  }
  func.func @transform_18(%arg0: i32, %arg1: i32) -> (i32, i32, i32) {
    %c0_i32 = arith.constant 0 : i32
    %c0_i32_0 = arith.constant 0 : i32
    %c0_i32_1 = arith.constant 0 : i32
    return %arg0, %c0_i32, %c0_i32_0 : i32, i32, i32
  }
  func.func @transform_19(%arg0: i32, %arg1: i32) -> (i32, i32, i32) {
    %c0_i32 = arith.constant 0 : i32
    %c0_i32_0 = arith.constant 0 : i32
    %c0_i32_1 = arith.constant 0 : i32
    return %arg0, %c0_i32, %c0_i32_0 : i32, i32, i32
  }
  func.func @transform_20(%arg0: i32, %arg1: i32) -> (i32, i32, i32) {
    %c0_i32 = arith.constant 0 : i32
    %c0_i32_0 = arith.constant 0 : i32
    %c0_i32_1 = arith.constant 0 : i32
    return %arg0, %c0_i32, %c0_i32_0 : i32, i32, i32
  }
  func.func @transform_21(%arg0: i32, %arg1: i32) -> (i32, i32, i32) {
    %c0_i32 = arith.constant 0 : i32
    %c0_i32_0 = arith.constant 0 : i32
    %c0_i32_1 = arith.constant 0 : i32
    return %arg0, %c0_i32, %c0_i32_0 : i32, i32, i32
  }
  func.func @transform_22(%arg0: i32, %arg1: i32) -> (i32, i32) {
    %c0_i32 = arith.constant 0 : i32
    %c0_i32_0 = arith.constant 0 : i32
    %c0_i32_1 = arith.constant 0 : i32
    return %c0_i32, %c0_i32_0 : i32, i32
  }
  func.func @transform_23(%arg0: i32, %arg1: i32) -> (i32, i32) {
    %c0_i32 = arith.constant 0 : i32
    %c0_i32_0 = arith.constant 0 : i32
    %c0_i32_1 = arith.constant 0 : i32
    return %c0_i32, %c0_i32_0 : i32, i32
  }
  func.func @transform_24(%arg0: i32, %arg1: i32) -> (i32, i32) {
    %c0_i32 = arith.constant 0 : i32
    %c0_i32_0 = arith.constant 0 : i32
    %c0_i32_1 = arith.constant 0 : i32
    return %c0_i32, %c0_i32_0 : i32, i32
  }
  func.func @transform_25(%arg0: i32, %arg1: i32) -> (i32, i32) {
    %c0_i32 = arith.constant 0 : i32
    %c0_i32_0 = arith.constant 0 : i32
    %c0_i32_1 = arith.constant 0 : i32
    return %c0_i32, %c0_i32_0 : i32, i32
  }
  func.func @transform_26(%arg0: i32, %arg1: i32) -> (i32, i32) {
    %c0_i32 = arith.constant 0 : i32
    %c0_i32_0 = arith.constant 0 : i32
    %c0_i32_1 = arith.constant 0 : i32
    return %c0_i32, %c0_i32_0 : i32, i32
  }
}

</mosaic_0001>

<llo_original>
// kernel: res_egnn_forward.1
$region0: #{res_egnn_forward.1}
  #allocation0 [shape = 'u32[]', space=smem, size = 0x4, offset = 0x4, fixed_abs, tag = 'smem constant byte address 0x4 - core index']
  #allocation1 [shape = 'u32[144,128]{1,0:T(1,128)}', space=vmem, size = 0x12000, scoped, tag = 'internal scratch']
  #allocation2 [shape = 'f32[32,32]{1,0:T(8,128)}', space=vmem, size = 0x4000, scoped, tag = 'scratch operand']
  #allocation3 [shape = 'f32[32,3]{1,0:T(8,128)}', space=vmem, size = 0x4000, scoped, tag = 'scratch operand']
  #allocation4 [shape = 'f32[64,3]{1,0:T(8,128)}', space=vmem, size = 0x8000, scoped, tag = 'scratch operand']
  #allocation5 [shape = 'bf16[64,32]{1,0:T(8,128)(2,1)}', space=vmem, size = 0x4000, scoped, tag = 'scratch operand']
  #allocation6 [shape = 'f32[32,35]{1,0:T(8,128)}', space=vmem, size = 0x4000, scoped, tag = 'scratch operand']
  %s0 = inlined_call_operand.vmem [shape: s32[256,2], index: 0, kind: input, shape index: {}]
  %s1 = inlined_call_operand.vmem [shape: s32[1,256], index: 1, kind: input, shape index: {}]
  %s2 = inlined_call_operand.vmem [shape: bf16[256,16], index: 2, kind: input, shape index: {}]
  %s3 = inlined_call_operand.vmem [shape: bf16[32,9], index: 3, kind: input, shape index: {}]
  %s4 = inlined_call_operand.vmem [shape: f32[32,3], index: 4, kind: input, shape index: {}]
  %s5 = inlined_call_operand.vmem [shape: f32[32,1], index: 5, kind: input, shape index: {}]
  %s6 = inlined_call_operand.vmem [shape: s32[2,1], index: 6, kind: input, shape index: {}]
  %s7 = inlined_call_operand.vmem [shape: bf16[9,32], index: 7, kind: input, shape index: {}]
  %s8 = inlined_call_operand.vmem [shape: f32[1,32], index: 8, kind: input, shape index: {}]
  %s9 = inlined_call_operand.vmem [shape: bf16[4,32,64], index: 9, kind: input, shape index: {}]
  %s10 = inlined_call_operand.vmem [shape: f32[4,1,32], index: 10, kind: input, shape index: {}]
  %s11 = inlined_call_operand.vmem [shape: bf16[4,16,32], index: 11, kind: input, shape index: {}]
  %s12 = inlined_call_operand.vmem [shape: f32[4,1,32], index: 12, kind: input, shape index: {}]
  %s13 = inlined_call_operand.vmem [shape: bf16[4,32,32], index: 13, kind: input, shape index: {}]
  %s14 = inlined_call_operand.vmem [shape: f32[4,1,32], index: 14, kind: input, shape index: {}]
  %s15 = inlined_call_operand.vmem [shape: bf16[4,32,32], index: 15, kind: input, shape index: {}]
  %s16 = inlined_call_operand.vmem [shape: f32[4,1,32], index: 16, kind: input, shape index: {}]
  %s17 = inlined_call_operand.vmem [shape: f32[4,1,32], index: 17, kind: input, shape index: {}]
  %s18 = inlined_call_operand.vmem [shape: bf16[4,64,32], index: 18, kind: input, shape index: {}]
  %s19 = inlined_call_operand.vmem [shape: f32[4,1,32], index: 19, kind: input, shape index: {}]
  %s20 = inlined_call_operand.vmem [shape: bf16[4,32,32], index: 20, kind: input, shape index: {}]
  %s21 = inlined_call_operand.vmem [shape: f32[4,1,32], index: 21, kind: input, shape index: {}]
  %s22 = inlined_call_operand.vmem [shape: bf16[32,64], index: 22, kind: input, shape index: {}]
  %s23 = inlined_call_operand.vmem [shape: f32[1,64], index: 23, kind: input, shape index: {}]
  %s24 = inlined_call_operand.vmem [shape: bf16[64,20], index: 24, kind: input, shape index: {}]
  %s25 = inlined_call_operand.vmem [shape: f32[1,20], index: 25, kind: input, shape index: {}]
  %s26 = inlined_call_operand.hbm [shape: f32[2,20], index: 26, kind: output, shape index: {}]
  %s27 = sld [smem:[#allocation0]]
  $region153: #{res_egnn_forward.1} parent=0
    _
  %s29 = ssub.s32 1, %s27
  %s30 = scalar_select 0, %s29, %s27
  $region1: #{res_egnn_forward.1} parent=0
    #allocation7 [shape = 'u8[1024]{0}', space=vmem, size = 0x400, scoped, tag = 'output window, operand 0, single buffered']
    #allocation8 [shape = 's32[2]{0}', space=sflag, size = 0x8, scoped, tag = 'scoped memory for res_egnn_forward.1']
    %31 = vsyncpa [#allocation8], 0
    loop: start=0, step=1, limit=10
    $region2: #{res_egnn_forward.1} parent=1 // loop_pre_header
      _
    $region3: #{res_egnn_forward.1} parent=1 // loop_header
      %s33 = sphi 0, %s37
      %p34 = scmp.ge.s32.totalorder %s33, 10
      %s40 = sphi 0, %s52
      %s41 = sphi 0, %s48
      %s42 = sphi 0, %s40
      %s43 = sphi 0, %s41
      %s44 = sphi 0, %s42
      %s45 = sphi 0, %s43
      %s55 = sphi 0, %s57
      %s58 = sphi 0, %s55
      %s59 = sphi 0, %s58
      %s75 = sphi 0, %s59
      %s81 = sphi 0, %s83
      %s84 = sphi 0, %s81
      %s85 = sphi 0, %s84
      %s101 = sphi 0, %s85
      %s107 = sphi 0, %s109
      %s110 = sphi 0, %s107
      %s111 = sphi 0, %s110
      %s127 = sphi 0, %s111
      %s131 = sphi 0, %s131
      %s133 = sphi 0, %s131
      %s134 = sphi 0, %s133
      %s148 = sphi 0, %s134
      %s152 = sphi 0, %s152
      %s154 = sphi 0, %s152
      %s155 = sphi 0, %s154
      %s169 = sphi 0, %s155
      %s173 = sphi 0, %s173
      %s175 = sphi 0, %s173
      %s176 = sphi 0, %s175
      %s190 = sphi 0, %s176
      %s194 = sphi 0, %s194
      %s196 = sphi 0, %s194
      %s197 = sphi 0, %s196
      %s211 = sphi 0, %s197
      %s215 = sphi 0, %s215
      %s217 = sphi 0, %s215
      %s218 = sphi 0, %s217
      %s232 = sphi 0, %s218
      %s236 = sphi 0, %s236
      %s238 = sphi 0, %s236
      %s239 = sphi 0, %s238
      %s253 = sphi 0, %s239
      %s259 = sphi 0, %s261
      %s262 = sphi 0, %s259
      %s263 = sphi 0, %s262
      %s279 = sphi 0, %s263
      %s285 = sphi 0, %s287
      %s288 = sphi 0, %s285
      %s289 = sphi 0, %s288
      %s305 = sphi 0, %s289
      %s311 = sphi 0, %s313
      %s314 = sphi 0, %s311
      %s315 = sphi 0, %s314
      %s331 = sphi 0, %s315
      %s337 = sphi 0, %s339
      %s340 = sphi 0, %s337
      %s341 = sphi 0, %s340
      %s357 = sphi 0, %s341
      %s363 = sphi 0, %s365
      %s366 = sphi 0, %s363
      %s367 = sphi 0, %s366
      %s383 = sphi 0, %s367
      %s389 = sphi 0, %s391
      %s392 = sphi 0, %s389
      %s393 = sphi 0, %s392
      %s409 = sphi 0, %s393
      %s415 = sphi 0, %s417
      %s418 = sphi 0, %s415
      %s419 = sphi 0, %s418
      %s435 = sphi 0, %s419
      %s441 = sphi 0, %s443
      %s444 = sphi 0, %s441
      %s445 = sphi 0, %s444
      %s461 = sphi 0, %s445
      %s467 = sphi 0, %s469
      %s470 = sphi 0, %s467
      %s471 = sphi 0, %s470
      %s487 = sphi 0, %s471
      %s493 = sphi 0, %s495
      %s496 = sphi 0, %s493
      %s497 = sphi 0, %s496
      %s513 = sphi 0, %s497
      %s519 = sphi 0, %s521
      %s522 = sphi 0, %s519
      %s523 = sphi 0, %s522
      %s539 = sphi 0, %s523
      %s545 = sphi 0, %s547
      %s548 = sphi 0, %s545
      %s549 = sphi 0, %s548
      %s565 = sphi 0, %s549
      %s571 = sphi 0, %s573
      %s574 = sphi 0, %s571
      %s575 = sphi 0, %s574
      %s591 = sphi 0, %s575
      %s595 = sphi 0, %s595
      %s597 = sphi 0, %s595
      %s598 = sphi 0, %s597
      %s612 = sphi 0, %s598
      %s616 = sphi 0, %s616
      %s618 = sphi 0, %s616
      %s619 = sphi 0, %s618
      %s633 = sphi 0, %s619
      %s637 = sphi 0, %s637
      %s639 = sphi 0, %s637
      %s640 = sphi 0, %s639
      %s654 = sphi 0, %s640
      %s658 = sphi 0, %s658
      %s660 = sphi 0, %s658
      %s661 = sphi 0, %s660
      %s675 = sphi 0, %s661
      %s679 = sphi 0, %s679
      %s681 = sphi 0, %s679
      %s682 = sphi 0, %s681
      %s696 = sphi 0, %s682
    $region4: #{res_egnn_forward.1} parent=1 // loop_header_branch
      %36 = sbr.rel (%p34) target = $region8
    $region5: #{res_egnn_forward.1} parent=1 // loop_body
      %s38 = ssub.s32 %s33, 1
      %s39 = ssub.s32 %s33, 2
      %s46 = sadd.s32 1, %s41
      %p47 = scmp.ge.s32.totalorder %s46, 2
      %s48 = scalar_select %p47, 0, %s46
      %s49 = sadd.s32 1, %s40
      %s50 = scalar_select %p47, %s49, %s40
      %p51 = scmp.ge.s32.totalorder %s50, 4
      %s52 = scalar_select %p51, 0, %s50
      %s53 = ssub.s32 %s41, %s48
      %p54 = scmp.eq.s32.totalorder %s53, 0
      %s56 = sadd.s32 %s55, 1
      %s57 = scalar_select %p54, %s55, %s56
      %p60 = pneg %p54
      %p61 = scmp.eq.s32.totalorder %s33, 7
      %p62 = por %p60, %p61
      %p63 = scmp.ne.s32.totalorder %s55, %s58
      %p64 = scmp.eq.s32.totalorder %s33, 0
      %p65 = por %p63, %p64
      %p66 = scmp.ne.s32.totalorder %s55, %s58
      %p67 = scmp.eq.s32.totalorder %s38, 7
      %p68 = por %p66, %p67
      %p69 = scmp.ne.s32.totalorder %s58, %s59
      %p70 = scmp.eq.s32.totalorder %s38, 0
      %p71 = por %p69, %p70
      %p72 = scmp.ne.s32.totalorder %s58, %s59
      %p73 = scmp.eq.s32.totalorder %s39, 7
      %p74 = por %p72, %p73
      %p76 = scmp.ne.s32.totalorder %s59, %s75
      %p77 = scmp.eq.s32.totalorder %s39, 0
      %p78 = por %p76, %p77
      %s79 = ssub.s32 %s41, %s48
      %p80 = scmp.eq.s32.totalorder %s79, 0
      %s82 = sadd.s32 %s81, 1
      %s83 = scalar_select %p80, %s81, %s82
      %p86 = pneg %p80
      %p87 = scmp.eq.s32.totalorder %s33, 7
      %p88 = por %p86, %p87
      %p89 = scmp.ne.s32.totalorder %s81, %s84
      %p90 = scmp.eq.s32.totalorder %s33, 0
      %p91 = por %p89, %p90
      %p92 = scmp.ne.s32.totalorder %s81, %s84
      %p93 = scmp.eq.s32.totalorder %s38, 7
      %p94 = por %p92, %p93
      %p95 = scmp.ne.s32.totalorder %s84, %s85
      %p96 = scmp.eq.s32.totalorder %s38, 0
      %p97 = por %p95, %p96
      %p98 = scmp.ne.s32.totalorder %s84, %s85
      %p99 = scmp.eq.s32.totalorder %s39, 7
      %p100 = por %p98, %p99
      %p102 = scmp.ne.s32.totalorder %s85, %s101
      %p103 = scmp.eq.s32.totalorder %s39, 0
      %p104 = por %p102, %p103
      %s105 = ssub.s32 %s41, %s48
      %p106 = scmp.eq.s32.totalorder %s105, 0
      %s108 = sadd.s32 %s107, 1
      %s109 = scalar_select %p106, %s107, %s108
      %p112 = pneg %p106
      %p113 = scmp.eq.s32.totalorder %s33, 7
      %p114 = por %p112, %p113
      %p115 = scmp.ne.s32.totalorder %s107, %s110
      %p116 = scmp.eq.s32.totalorder %s33, 0
      %p117 = por %p115, %p116
      %p118 = scmp.ne.s32.totalorder %s107, %s110
      %p119 = scmp.eq.s32.totalorder %s38, 7
      %p120 = por %p118, %p119
      %p121 = scmp.ne.s32.totalorder %s110, %s111
      %p122 = scmp.eq.s32.totalorder %s38, 0
      %p123 = por %p121, %p122
      %p124 = scmp.ne.s32.totalorder %s110, %s111
      %p125 = scmp.eq.s32.totalorder %s39, 7
      %p126 = por %p124, %p125
      %p128 = scmp.ne.s32.totalorder %s111, %s127
      %p129 = scmp.eq.s32.totalorder %s39, 0
      %p130 = por %p128, %p129
      %s132 = sadd.s32 %s131, 1
      %p135 = scmp.eq.s32.totalorder %s33, 7
      %p136 = scmp.ne.s32.totalorder %s131, %s133
      %p137 = scmp.eq.s32.totalorder %s33, 0
      %p138 = por %p136, %p137
      %p139 = scmp.ne.s32.totalorder %s131, %s133
      %p140 = scmp.eq.s32.totalorder %s38, 7
      %p141 = por %p139, %p140
      %p142 = scmp.ne.s32.totalorder %s133, %s134
      %p143 = scmp.eq.s32.totalorder %s38, 0
      %p144 = por %p142, %p143
      %p145 = scmp.ne.s32.totalorder %s133, %s134
      %p146 = scmp.eq.s32.totalorder %s39, 7
      %p147 = por %p145, %p146
      %p149 = scmp.ne.s32.totalorder %s134, %s148
      %p150 = scmp.eq.s32.totalorder %s39, 0
      %p151 = por %p149, %p150
      %s153 = sadd.s32 %s152, 1
      %p156 = scmp.eq.s32.totalorder %s33, 7
      %p157 = scmp.ne.s32.totalorder %s152, %s154
      %p158 = scmp.eq.s32.totalorder %s33, 0
      %p159 = por %p157, %p158
      %p160 = scmp.ne.s32.totalorder %s152, %s154
      %p161 = scmp.eq.s32.totalorder %s38, 7
      %p162 = por %p160, %p161
      %p163 = scmp.ne.s32.totalorder %s154, %s155
      %p164 = scmp.eq.s32.totalorder %s38, 0
      %p165 = por %p163, %p164
      %p166 = scmp.ne.s32.totalorder %s154, %s155
      %p167 = scmp.eq.s32.totalorder %s39, 7
      %p168 = por %p166, %p167
      %p170 = scmp.ne.s32.totalorder %s155, %s169
      %p171 = scmp.eq.s32.totalorder %s39, 0
      %p172 = por %p170, %p171
      %s174 = sadd.s32 %s173, 1
      %p177 = scmp.eq.s32.totalorder %s33, 7
      %p178 = scmp.ne.s32.totalorder %s173, %s175
      %p179 = scmp.eq.s32.totalorder %s33, 0
      %p180 = por %p178, %p179
      %p181 = scmp.ne.s32.totalorder %s173, %s175
      %p182 = scmp.eq.s32.totalorder %s38, 7
      %p183 = por %p181, %p182
      %p184 = scmp.ne.s32.totalorder %s175, %s176
      %p185 = scmp.eq.s32.totalorder %s38, 0
      %p186 = por %p184, %p185
      %p187 = scmp.ne.s32.totalorder %s175, %s176
      %p188 = scmp.eq.s32.totalorder %s39, 7
      %p189 = por %p187, %p188
      %p191 = scmp.ne.s32.totalorder %s176, %s190
      %p192 = scmp.eq.s32.totalorder %s39, 0
      %p193 = por %p191, %p192
      %s195 = sadd.s32 %s194, 1
      %p198 = scmp.eq.s32.totalorder %s33, 7
      %p199 = scmp.ne.s32.totalorder %s194, %s196
      %p200 = scmp.eq.s32.totalorder %s33, 0
      %p201 = por %p199, %p200
      %p202 = scmp.ne.s32.totalorder %s194, %s196
      %p203 = scmp.eq.s32.totalorder %s38, 7
      %p204 = por %p202, %p203
      %p205 = scmp.ne.s32.totalorder %s196, %s197
      %p206 = scmp.eq.s32.totalorder %s38, 0
      %p207 = por %p205, %p206
      %p208 = scmp.ne.s32.totalorder %s196, %s197
      %p209 = scmp.eq.s32.totalorder %s39, 7
      %p210 = por %p208, %p209
      %p212 = scmp.ne.s32.totalorder %s197, %s211
      %p213 = scmp.eq.s32.totalorder %s39, 0
      %p214 = por %p212, %p213
      %s216 = sadd.s32 %s215, 1
      %p219 = scmp.eq.s32.totalorder %s33, 7
      %p220 = scmp.ne.s32.totalorder %s215, %s217
      %p221 = scmp.eq.s32.totalorder %s33, 0
      %p222 = por %p220, %p221
      %p223 = scmp.ne.s32.totalorder %s215, %s217
      %p224 = scmp.eq.s32.totalorder %s38, 7
      %p225 = por %p223, %p224
      %p226 = scmp.ne.s32.totalorder %s217, %s218
      %p227 = scmp.eq.s32.totalorder %s38, 0
      %p228 = por %p226, %p227
      %p229 = scmp.ne.s32.totalorder %s217, %s218
      %p230 = scmp.eq.s32.totalorder %s39, 7
      %p231 = por %p229, %p230
      %p233 = scmp.ne.s32.totalorder %s218, %s232
      %p234 = scmp.eq.s32.totalorder %s39, 0
      %p235 = por %p233, %p234
      %s237 = sadd.s32 %s236, 1
      %p240 = scmp.eq.s32.totalorder %s33, 7
      %p241 = scmp.ne.s32.totalorder %s236, %s238
      %p242 = scmp.eq.s32.totalorder %s33, 0
      %p243 = por %p241, %p242
      %p244 = scmp.ne.s32.totalorder %s236, %s238
      %p245 = scmp.eq.s32.totalorder %s38, 7
      %p246 = por %p244, %p245
      %p247 = scmp.ne.s32.totalorder %s238, %s239
      %p248 = scmp.eq.s32.totalorder %s38, 0
      %p249 = por %p247, %p248
      %p250 = scmp.ne.s32.totalorder %s238, %s239
      %p251 = scmp.eq.s32.totalorder %s39, 7
      %p252 = por %p250, %p251
      %p254 = scmp.ne.s32.totalorder %s239, %s253
      %p255 = scmp.eq.s32.totalorder %s39, 0
      %p256 = por %p254, %p255
      %s257 = ssub.s32 %s40, %s52
      %p258 = scmp.eq.s32.totalorder %s257, 0
      %s260 = sadd.s32 %s259, 1
      %s261 = scalar_select %p258, %s259, %s260
      %p264 = pneg %p258
      %p265 = scmp.eq.s32.totalorder %s33, 7
      %p266 = por %p264, %p265
      %p267 = scmp.ne.s32.totalorder %s259, %s262
      %p268 = scmp.eq.s32.totalorder %s33, 0
      %p269 = por %p267, %p268
      %p270 = scmp.ne.s32.totalorder %s259, %s262
      %p271 = scmp.eq.s32.totalorder %s38, 7
      %p272 = por %p270, %p271
      %p273 = scmp.ne.s32.totalorder %s262, %s263
      %p274 = scmp.eq.s32.totalorder %s38, 0
      %p275 = por %p273, %p274
      %p276 = scmp.ne.s32.totalorder %s262, %s263
      %p277 = scmp.eq.s32.totalorder %s39, 7
      %p278 = por %p276, %p277
      %p280 = scmp.ne.s32.totalorder %s263, %s279
      %p281 = scmp.eq.s32.totalorder %s39, 0
      %p282 = por %p280, %p281
      %s283 = ssub.s32 %s40, %s52
      %p284 = scmp.eq.s32.totalorder %s283, 0
      %s286 = sadd.s32 %s285, 1
      %s287 = scalar_select %p284, %s285, %s286
      %p290 = pneg %p284
      %p291 = scmp.eq.s32.totalorder %s33, 7
      %p292 = por %p290, %p291
      %p293 = scmp.ne.s32.totalorder %s285, %s288
      %p294 = scmp.eq.s32.totalorder %s33, 0
      %p295 = por %p293, %p294
      %p296 = scmp.ne.s32.totalorder %s285, %s288
      %p297 = scmp.eq.s32.totalorder %s38, 7
      %p298 = por %p296, %p297
      %p299 = scmp.ne.s32.totalorder %s288, %s289
      %p300 = scmp.eq.s32.totalorder %s38, 0
      %p301 = por %p299, %p300
      %p302 = scmp.ne.s32.totalorder %s288, %s289
      %p303 = scmp.eq.s32.totalorder %s39, 7
      %p304 = por %p302, %p303
      %p306 = scmp.ne.s32.totalorder %s289, %s305
      %p307 = scmp.eq.s32.totalorder %s39, 0
      %p308 = por %p306, %p307
      %s309 = ssub.s32 %s40, %s52
      %p310 = scmp.eq.s32.totalorder %s309, 0
      %s312 = sadd.s32 %s311, 1
      %s313 = scalar_select %p310, %s311, %s312
      %p316 = pneg %p310
      %p317 = scmp.eq.s32.totalorder %s33, 7
      %p318 = por %p316, %p317
      %p319 = scmp.ne.s32.totalorder %s311, %s314
      %p320 = scmp.eq.s32.totalorder %s33, 0
      %p321 = por %p319, %p320
      %p322 = scmp.ne.s32.totalorder %s311, %s314
      %p323 = scmp.eq.s32.totalorder %s38, 7
      %p324 = por %p322, %p323
      %p325 = scmp.ne.s32.totalorder %s314, %s315
      %p326 = scmp.eq.s32.totalorder %s38, 0
      %p327 = por %p325, %p326
      %p328 = scmp.ne.s32.totalorder %s314, %s315
      %p329 = scmp.eq.s32.totalorder %s39, 7
      %p330 = por %p328, %p329
      %p332 = scmp.ne.s32.totalorder %s315, %s331
      %p333 = scmp.eq.s32.totalorder %s39, 0
      %p334 = por %p332, %p333
      %s335 = ssub.s32 %s40, %s52
      %p336 = scmp.eq.s32.totalorder %s335, 0
      %s338 = sadd.s32 %s337, 1
      %s339 = scalar_select %p336, %s337, %s338
      %p342 = pneg %p336
      %p343 = scmp.eq.s32.totalorder %s33, 7
      %p344 = por %p342, %p343
      %p345 = scmp.ne.s32.totalorder %s337, %s340
      %p346 = scmp.eq.s32.totalorder %s33, 0
      %p347 = por %p345, %p346
      %p348 = scmp.ne.s32.totalorder %s337, %s340
      %p349 = scmp.eq.s32.totalorder %s38, 7
      %p350 = por %p348, %p349
      %p351 = scmp.ne.s32.totalorder %s340, %s341
      %p352 = scmp.eq.s32.totalorder %s38, 0
      %p353 = por %p351, %p352
      %p354 = scmp.ne.s32.totalorder %s340, %s341
      %p355 = scmp.eq.s32.totalorder %s39, 7
      %p356 = por %p354, %p355
      %p358 = scmp.ne.s32.totalorder %s341, %s357
      %p359 = scmp.eq.s32.totalorder %s39, 0
      %p360 = por %p358, %p359
      %s361 = ssub.s32 %s40, %s52
      %p362 = scmp.eq.s32.totalorder %s361, 0
      %s364 = sadd.s32 %s363, 1
      %s365 = scalar_select %p362, %s363, %s364
      %p368 = pneg %p362
      %p369 = scmp.eq.s32.totalorder %s33, 7
      %p370 = por %p368, %p369
      %p371 = scmp.ne.s32.totalorder %s363, %s366
      %p372 = scmp.eq.s32.totalorder %s33, 0
      %p373 = por %p371, %p372
      %p374 = scmp.ne.s32.totalorder %s363, %s366
      %p375 = scmp.eq.s32.totalorder %s38, 7
      %p376 = por %p374, %p375
      %p377 = scmp.ne.s32.totalorder %s366, %s367
      %p378 = scmp.eq.s32.totalorder %s38, 0
      %p379 = por %p377, %p378
      %p380 = scmp.ne.s32.totalorder %s366, %s367
      %p381 = scmp.eq.s32.totalorder %s39, 7
      %p382 = por %p380, %p381
      %p384 = scmp.ne.s32.totalorder %s367, %s383
      %p385 = scmp.eq.s32.totalorder %s39, 0
      %p386 = por %p384, %p385
      %s387 = ssub.s32 %s40, %s52
      %p388 = scmp.eq.s32.totalorder %s387, 0
      %s390 = sadd.s32 %s389, 1
      %s391 = scalar_select %p388, %s389, %s390
      %p394 = pneg %p388
      %p395 = scmp.eq.s32.totalorder %s33, 7
      %p396 = por %p394, %p395
      %p397 = scmp.ne.s32.totalorder %s389, %s392
      %p398 = scmp.eq.s32.totalorder %s33, 0
      %p399 = por %p397, %p398
      %p400 = scmp.ne.s32.totalorder %s389, %s392
      %p401 = scmp.eq.s32.totalorder %s38, 7
      %p402 = por %p400, %p401
      %p403 = scmp.ne.s32.totalorder %s392, %s393
      %p404 = scmp.eq.s32.totalorder %s38, 0
      %p405 = por %p403, %p404
      %p406 = scmp.ne.s32.totalorder %s392, %s393
      %p407 = scmp.eq.s32.totalorder %s39, 7
      %p408 = por %p406, %p407
      %p410 = scmp.ne.s32.totalorder %s393, %s409
      %p411 = scmp.eq.s32.totalorder %s39, 0
      %p412 = por %p410, %p411
      %s413 = ssub.s32 %s40, %s52
      %p414 = scmp.eq.s32.totalorder %s413, 0
      %s416 = sadd.s32 %s415, 1
      %s417 = scalar_select %p414, %s415, %s416
      %p420 = pneg %p414
      %p421 = scmp.eq.s32.totalorder %s33, 7
      %p422 = por %p420, %p421
      %p423 = scmp.ne.s32.totalorder %s415, %s418
      %p424 = scmp.eq.s32.totalorder %s33, 0
      %p425 = por %p423, %p424
      %p426 = scmp.ne.s32.totalorder %s415, %s418
      %p427 = scmp.eq.s32.totalorder %s38, 7
      %p428 = por %p426, %p427
      %p429 = scmp.ne.s32.totalorder %s418, %s419
      %p430 = scmp.eq.s32.totalorder %s38, 0
      %p431 = por %p429, %p430
      %p432 = scmp.ne.s32.totalorder %s418, %s419
      %p433 = scmp.eq.s32.totalorder %s39, 7
      %p434 = por %p432, %p433
      %p436 = scmp.ne.s32.totalorder %s419, %s435
      %p437 = scmp.eq.s32.totalorder %s39, 0
      %p438 = por %p436, %p437
      %s439 = ssub.s32 %s40, %s52
      %p440 = scmp.eq.s32.totalorder %s439, 0
      %s442 = sadd.s32 %s441, 1
      %s443 = scalar_select %p440, %s441, %s442
      %p446 = pneg %p440
      %p447 = scmp.eq.s32.totalorder %s33, 7
      %p448 = por %p446, %p447
      %p449 = scmp.ne.s32.totalorder %s441, %s444
      %p450 = scmp.eq.s32.totalorder %s33, 0
      %p451 = por %p449, %p450
      %p452 = scmp.ne.s32.totalorder %s441, %s444
      %p453 = scmp.eq.s32.totalorder %s38, 7
      %p454 = por %p452, %p453
      %p455 = scmp.ne.s32.totalorder %s444, %s445
      %p456 = scmp.eq.s32.totalorder %s38, 0
      %p457 = por %p455, %p456
      %p458 = scmp.ne.s32.totalorder %s444, %s445
      %p459 = scmp.eq.s32.totalorder %s39, 7
      %p460 = por %p458, %p459
      %p462 = scmp.ne.s32.totalorder %s445, %s461
      %p463 = scmp.eq.s32.totalorder %s39, 0
      %p464 = por %p462, %p463
      %s465 = ssub.s32 %s40, %s52
      %p466 = scmp.eq.s32.totalorder %s465, 0
      %s468 = sadd.s32 %s467, 1
      %s469 = scalar_select %p466, %s467, %s468
      %p472 = pneg %p466
      %p473 = scmp.eq.s32.totalorder %s33, 7
      %p474 = por %p472, %p473
      %p475 = scmp.ne.s32.totalorder %s467, %s470
      %p476 = scmp.eq.s32.totalorder %s33, 0
      %p477 = por %p475, %p476
      %p478 = scmp.ne.s32.totalorder %s467, %s470
      %p479 = scmp.eq.s32.totalorder %s38, 7
      %p480 = por %p478, %p479
      %p481 = scmp.ne.s32.totalorder %s470, %s471
      %p482 = scmp.eq.s32.totalorder %s38, 0
      %p483 = por %p481, %p482
      %p484 = scmp.ne.s32.totalorder %s470, %s471
      %p485 = scmp.eq.s32.totalorder %s39, 7
      %p486 = por %p484, %p485
      %p488 = scmp.ne.s32.totalorder %s471, %s487
      %p489 = scmp.eq.s32.totalorder %s39, 0
      %p490 = por %p488, %p489
      %s491 = ssub.s32 %s40, %s52
      %p492 = scmp.eq.s32.totalorder %s491, 0
      %s494 = sadd.s32 %s493, 1
      %s495 = scalar_select %p492, %s493, %s494
      %p498 = pneg %p492
      %p499 = scmp.eq.s32.totalorder %s33, 7
      %p500 = por %p498, %p499
      %p501 = scmp.ne.s32.totalorder %s493, %s496
      %p502 = scmp.eq.s32.totalorder %s33, 0
      %p503 = por %p501, %p502
      %p504 = scmp.ne.s32.totalorder %s493, %s496
      %p505 = scmp.eq.s32.totalorder %s38, 7
      %p506 = por %p504, %p505
      %p507 = scmp.ne.s32.totalorder %s496, %s497
      %p508 = scmp.eq.s32.totalorder %s38, 0
      %p509 = por %p507, %p508
      %p510 = scmp.ne.s32.totalorder %s496, %s497
      %p511 = scmp.eq.s32.totalorder %s39, 7
      %p512 = por %p510, %p511
      %p514 = scmp.ne.s32.totalorder %s497, %s513
      %p515 = scmp.eq.s32.totalorder %s39, 0
      %p516 = por %p514, %p515
      %s517 = ssub.s32 %s40, %s52
      %p518 = scmp.eq.s32.totalorder %s517, 0
      %s520 = sadd.s32 %s519, 1
      %s521 = scalar_select %p518, %s519, %s520
      %p524 = pneg %p518
      %p525 = scmp.eq.s32.totalorder %s33, 7
      %p526 = por %p524, %p525
      %p527 = scmp.ne.s32.totalorder %s519, %s522
      %p528 = scmp.eq.s32.totalorder %s33, 0
      %p529 = por %p527, %p528
      %p530 = scmp.ne.s32.totalorder %s519, %s522
      %p531 = scmp.eq.s32.totalorder %s38, 7
      %p532 = por %p530, %p531
      %p533 = scmp.ne.s32.totalorder %s522, %s523
      %p534 = scmp.eq.s32.totalorder %s38, 0
      %p535 = por %p533, %p534
      %p536 = scmp.ne.s32.totalorder %s522, %s523
      %p537 = scmp.eq.s32.totalorder %s39, 7
      %p538 = por %p536, %p537
      %p540 = scmp.ne.s32.totalorder %s523, %s539
      %p541 = scmp.eq.s32.totalorder %s39, 0
      %p542 = por %p540, %p541
      %s543 = ssub.s32 %s40, %s52
      %p544 = scmp.eq.s32.totalorder %s543, 0
      %s546 = sadd.s32 %s545, 1
      %s547 = scalar_select %p544, %s545, %s546
      %p550 = pneg %p544
      %p551 = scmp.eq.s32.totalorder %s33, 7
      %p552 = por %p550, %p551
      %p553 = scmp.ne.s32.totalorder %s545, %s548
      %p554 = scmp.eq.s32.totalorder %s33, 0
      %p555 = por %p553, %p554
      %p556 = scmp.ne.s32.totalorder %s545, %s548
      %p557 = scmp.eq.s32.totalorder %s38, 7
      %p558 = por %p556, %p557
      %p559 = scmp.ne.s32.totalorder %s548, %s549
      %p560 = scmp.eq.s32.totalorder %s38, 0
      %p561 = por %p559, %p560
      %p562 = scmp.ne.s32.totalorder %s548, %s549
      %p563 = scmp.eq.s32.totalorder %s39, 7
      %p564 = por %p562, %p563
      %p566 = scmp.ne.s32.totalorder %s549, %s565
      %p567 = scmp.eq.s32.totalorder %s39, 0
      %p568 = por %p566, %p567
      %s569 = ssub.s32 %s40, %s52
      %p570 = scmp.eq.s32.totalorder %s569, 0
      %s572 = sadd.s32 %s571, 1
      %s573 = scalar_select %p570, %s571, %s572
      %p576 = pneg %p570
      %p577 = scmp.eq.s32.totalorder %s33, 7
      %p578 = por %p576, %p577
      %p579 = scmp.ne.s32.totalorder %s571, %s574
      %p580 = scmp.eq.s32.totalorder %s33, 0
      %p581 = por %p579, %p580
      %p582 = scmp.ne.s32.totalorder %s571, %s574
      %p583 = scmp.eq.s32.totalorder %s38, 7
      %p584 = por %p582, %p583
      %p585 = scmp.ne.s32.totalorder %s574, %s575
      %p586 = scmp.eq.s32.totalorder %s38, 0
      %p587 = por %p585, %p586
      %p588 = scmp.ne.s32.totalorder %s574, %s575
      %p589 = scmp.eq.s32.totalorder %s39, 7
      %p590 = por %p588, %p589
      %p592 = scmp.ne.s32.totalorder %s575, %s591
      %p593 = scmp.eq.s32.totalorder %s39, 0
      %p594 = por %p592, %p593
      %s596 = sadd.s32 %s595, 1
      %p599 = scmp.eq.s32.totalorder %s33, 7
      %p600 = scmp.ne.s32.totalorder %s595, %s597
      %p601 = scmp.eq.s32.totalorder %s33, 0
      %p602 = por %p600, %p601
      %p603 = scmp.ne.s32.totalorder %s595, %s597
      %p604 = scmp.eq.s32.totalorder %s38, 7
      %p605 = por %p603, %p604
      %p606 = scmp.ne.s32.totalorder %s597, %s598
      %p607 = scmp.eq.s32.totalorder %s38, 0
      %p608 = por %p606, %p607
      %p609 = scmp.ne.s32.totalorder %s597, %s598
      %p610 = scmp.eq.s32.totalorder %s39, 7
      %p611 = por %p609, %p610
      %p613 = scmp.ne.s32.totalorder %s598, %s612
      %p614 = scmp.eq.s32.totalorder %s39, 0
      %p615 = por %p613, %p614
      %s617 = sadd.s32 %s616, 1
      %p620 = scmp.eq.s32.totalorder %s33, 7
      %p621 = scmp.ne.s32.totalorder %s616, %s618
      %p622 = scmp.eq.s32.totalorder %s33, 0
      %p623 = por %p621, %p622
      %p624 = scmp.ne.s32.totalorder %s616, %s618
      %p625 = scmp.eq.s32.totalorder %s38, 7
      %p626 = por %p624, %p625
      %p627 = scmp.ne.s32.totalorder %s618, %s619
      %p628 = scmp.eq.s32.totalorder %s38, 0
      %p629 = por %p627, %p628
      %p630 = scmp.ne.s32.totalorder %s618, %s619
      %p631 = scmp.eq.s32.totalorder %s39, 7
      %p632 = por %p630, %p631
      %p634 = scmp.ne.s32.totalorder %s619, %s633
      %p635 = scmp.eq.s32.totalorder %s39, 0
      %p636 = por %p634, %p635
      %s638 = sadd.s32 %s637, 1
      %p641 = scmp.eq.s32.totalorder %s33, 7
      %p642 = scmp.ne.s32.totalorder %s637, %s639
      %p643 = scmp.eq.s32.totalorder %s33, 0
      %p644 = por %p642, %p643
      %p645 = scmp.ne.s32.totalorder %s637, %s639
      %p646 = scmp.eq.s32.totalorder %s38, 7
      %p647 = por %p645, %p646
      %p648 = scmp.ne.s32.totalorder %s639, %s640
      %p649 = scmp.eq.s32.totalorder %s38, 0
      %p650 = por %p648, %p649
      %p651 = scmp.ne.s32.totalorder %s639, %s640
      %p652 = scmp.eq.s32.totalorder %s39, 7
      %p653 = por %p651, %p652
      %p655 = scmp.ne.s32.totalorder %s640, %s654
      %p656 = scmp.eq.s32.totalorder %s39, 0
      %p657 = por %p655, %p656
      %s659 = sadd.s32 %s658, 1
      %p662 = scmp.eq.s32.totalorder %s33, 7
      %p663 = scmp.ne.s32.totalorder %s658, %s660
      %p664 = scmp.eq.s32.totalorder %s33, 0
      %p665 = por %p663, %p664
      %p666 = scmp.ne.s32.totalorder %s658, %s660
      %p667 = scmp.eq.s32.totalorder %s38, 7
      %p668 = por %p666, %p667
      %p669 = scmp.ne.s32.totalorder %s660, %s661
      %p670 = scmp.eq.s32.totalorder %s38, 0
      %p671 = por %p669, %p670
      %p672 = scmp.ne.s32.totalorder %s660, %s661
      %p673 = scmp.eq.s32.totalorder %s39, 7
      %p674 = por %p672, %p673
      %p676 = scmp.ne.s32.totalorder %s661, %s675
      %p677 = scmp.eq.s32.totalorder %s39, 0
      %p678 = por %p676, %p677
      %s680 = sadd.s32 %s679, 1
      %p683 = scmp.eq.s32.totalorder %s33, 7
      %p684 = scmp.ne.s32.totalorder %s679, %s681
      %p685 = scmp.eq.s32.totalorder %s33, 0
      %p686 = por %p684, %p685
      %p687 = scmp.ne.s32.totalorder %s679, %s681
      %p688 = scmp.eq.s32.totalorder %s38, 7
      %p689 = por %p687, %p688
      %p690 = scmp.ne.s32.totalorder %s681, %s682
      %p691 = scmp.eq.s32.totalorder %s38, 0
      %p692 = por %p690, %p691
      %p693 = scmp.ne.s32.totalorder %s681, %s682
      %p694 = scmp.eq.s32.totalorder %s39, 7
      %p695 = por %p693, %p694
      %p697 = scmp.ne.s32.totalorder %s682, %s696
      %p698 = scmp.eq.s32.totalorder %s39, 0
      %p699 = por %p697, %p698
      %p700 = scmp.le.s32.totalorder 1, %s33
      %p701 = scmp.lt.s32.totalorder %s33, 9
      %p702 = pnand %p700, %p701
      %p703 = pneg %p702
      // Predicated region
      $region9: #{res_egnn_forward.1} parent=5 // pred_check
        _
      $region10: #{res_egnn_forward.1} parent=5 // pred_check_branch
        %705 = sbr.rel (%p702) target = $region12
      $region11: #{res_egnn_forward.1} parent=5 // pred_region
        %s706 = ssub.s32 %s33, 1
        // Predicated region
        $region13: #{res_egnn_forward.1} parent=11 // pred_check
          %p707 = pneg %p144
        $region14: #{res_egnn_forward.1} parent=11 // pred_check_branch
          %709 = sbr.rel (%p707) target = $region16
        $region15: #{res_egnn_forward.1} parent=11 // pred_region
          _
        $region16: #{res_egnn_forward.1} parent=11 // pred_fallthru
          _
        // Predicated region
        $region17: #{res_egnn_forward.1} parent=11 // pred_check
          %p710 = pneg %p165
        $region18: #{res_egnn_forward.1} parent=11 // pred_check_branch
          %712 = sbr.rel (%p710) target = $region20
        $region19: #{res_egnn_forward.1} parent=11 // pred_region
          _
        $region20: #{res_egnn_forward.1} parent=11 // pred_fallthru
          _
        // Predicated region
        $region21: #{res_egnn_forward.1} parent=11 // pred_check
          %p713 = pneg %p186
        $region22: #{res_egnn_forward.1} parent=11 // pred_check_branch
          %715 = sbr.rel (%p713) target = $region24
        $region23: #{res_egnn_forward.1} parent=11 // pred_region
          _
        $region24: #{res_egnn_forward.1} parent=11 // pred_fallthru
          _
        // Predicated region
        $region25: #{res_egnn_forward.1} parent=11 // pred_check
          %p716 = pneg %p207
        $region26: #{res_egnn_forward.1} parent=11 // pred_check_branch
          %718 = sbr.rel (%p716) target = $region28
        $region27: #{res_egnn_forward.1} parent=11 // pred_region
          _
        $region28: #{res_egnn_forward.1} parent=11 // pred_fallthru
          _
        // Predicated region
        $region29: #{res_egnn_forward.1} parent=11 // pred_check
          %p719 = pneg %p228
        $region30: #{res_egnn_forward.1} parent=11 // pred_check_branch
          %721 = sbr.rel (%p719) target = $region32
        $region31: #{res_egnn_forward.1} parent=11 // pred_region
          _
        $region32: #{res_egnn_forward.1} parent=11 // pred_fallthru
          _
        // Predicated region
        $region33: #{res_egnn_forward.1} parent=11 // pred_check
          %p722 = pneg %p249
        $region34: #{res_egnn_forward.1} parent=11 // pred_check_branch
          %724 = sbr.rel (%p722) target = $region36
        $region35: #{res_egnn_forward.1} parent=11 // pred_region
          _
        $region36: #{res_egnn_forward.1} parent=11 // pred_fallthru
          _
        // Predicated region
        $region37: #{res_egnn_forward.1} parent=11 // pred_check
          %p725 = pneg %p608
        $region38: #{res_egnn_forward.1} parent=11 // pred_check_branch
          %727 = sbr.rel (%p725) target = $region40
        $region39: #{res_egnn_forward.1} parent=11 // pred_region
          _
        $region40: #{res_egnn_forward.1} parent=11 // pred_fallthru
          _
        // Predicated region
        $region41: #{res_egnn_forward.1} parent=11 // pred_check
          %p728 = pneg %p629
        $region42: #{res_egnn_forward.1} parent=11 // pred_check_branch
          %730 = sbr.rel (%p728) target = $region44
        $region43: #{res_egnn_forward.1} parent=11 // pred_region
          _
        $region44: #{res_egnn_forward.1} parent=11 // pred_fallthru
          _
        // Predicated region
        $region45: #{res_egnn_forward.1} parent=11 // pred_check
          %p731 = pneg %p650
        $region46: #{res_egnn_forward.1} parent=11 // pred_check_branch
          %733 = sbr.rel (%p731) target = $region48
        $region47: #{res_egnn_forward.1} parent=11 // pred_region
          _
        $region48: #{res_egnn_forward.1} parent=11 // pred_fallthru
          _
        // Predicated region
        $region49: #{res_egnn_forward.1} parent=11 // pred_check
          %p734 = pneg %p671
        $region50: #{res_egnn_forward.1} parent=11 // pred_check_branch
          %736 = sbr.rel (%p734) target = $region52
        $region51: #{res_egnn_forward.1} parent=11 // pred_region
          _
        $region52: #{res_egnn_forward.1} parent=11 // pred_fallthru
          _
      $region12: #{res_egnn_forward.1} parent=5 // pred_fallthru
        _
      %p737 = scmp.lt.s32.totalorder %s33, 8
      // Predicated region
      $region53: #{res_egnn_forward.1} parent=5 // pred_check
        %p738 = pneg %p737
      $region54: #{res_egnn_forward.1} parent=5 // pred_check_branch
        %740 = sbr.rel (%p738) target = $region56
      $region55: #{res_egnn_forward.1} parent=5 // pred_region
        // Predicated region
        $region57: #{res_egnn_forward.1} parent=55 // pred_check
          %p741 = pneg %p65
        $region58: #{res_egnn_forward.1} parent=55 // pred_check_branch
          %743 = sbr.rel (%p741) target = $region60
        $region59: #{res_egnn_forward.1} parent=55 // pred_region
          %s744 = smul.u32 16, %s41
          %p745 = scmp.lt.s32.totalorder %s744, 31
          %s746 = scalar_select %p745, %s744, 31
          %s747 = smul.addr %s746, 8
          %s748 = scalar_lea.vmem %s0, %s747
          %s749 = smul.u32 16, %s41
        $region60: #{res_egnn_forward.1} parent=55 // pred_fallthru
          _
        // Predicated region
        $region61: #{res_egnn_forward.1} parent=55 // pred_check
          %p750 = pneg %p91
        $region62: #{res_egnn_forward.1} parent=55 // pred_check_branch
          %752 = sbr.rel (%p750) target = $region64
        $region63: #{res_egnn_forward.1} parent=55 // pred_region
          %p753 = scmp.lt.s32.totalorder %s41, 1
          %s754 = scalar_select %p753, %s41, 1
          %s755 = scalar_lea.vmem %s1, %s754
        $region64: #{res_egnn_forward.1} parent=55 // pred_fallthru
          _
        // Predicated region
        $region65: #{res_egnn_forward.1} parent=55 // pred_check
          %p756 = pneg %p117
        $region66: #{res_egnn_forward.1} parent=55 // pred_check_branch
          %758 = sbr.rel (%p756) target = $region68
        $region67: #{res_egnn_forward.1} parent=55 // pred_region
          %s759 = smul.u32 16, %s41
          %p760 = scmp.lt.s32.totalorder %s759, 31
          %s761 = scalar_select %p760, %s759, 31
          %s762 = smul.addr %s761, 4
          %s763 = scalar_lea.vmem %s2, %s762
          %s764 = smul.u32 16, %s41
        $region68: #{res_egnn_forward.1} parent=55 // pred_fallthru
          _
        // Predicated region
        $region69: #{res_egnn_forward.1} parent=55 // pred_check
          %p765 = pneg %p269
        $region70: #{res_egnn_forward.1} parent=55 // pred_check_branch
          %767 = sbr.rel (%p765) target = $region72
        $region71: #{res_egnn_forward.1} parent=55 // pred_region
          %p768 = scmp.lt.s32.totalorder %s40, 3
          %s769 = scalar_select %p768, %s40, 3
          %s770 = smul.addr %s769, 4
          %s771 = smul.addr %s770, 4
          %s772 = scalar_lea.vmem %s9, %s771
        $region72: #{res_egnn_forward.1} parent=55 // pred_fallthru
          _
        // Predicated region
        $region73: #{res_egnn_forward.1} parent=55 // pred_check
          %p773 = pneg %p295
        $region74: #{res_egnn_forward.1} parent=55 // pred_check_branch
          %775 = sbr.rel (%p773) target = $region76
        $region75: #{res_egnn_forward.1} parent=55 // pred_region
          %p776 = scmp.lt.s32.totalorder %s40, 3
          %s777 = scalar_select %p776, %s40, 3
          %s778 = scalar_lea.vmem %s10, %s777
        $region76: #{res_egnn_forward.1} parent=55 // pred_fallthru
          _
        // Predicated region
        $region77: #{res_egnn_forward.1} parent=55 // pred_check
          %p779 = pneg %p321
        $region78: #{res_egnn_forward.1} parent=55 // pred_check_branch
          %781 = sbr.rel (%p779) target = $region80
        $region79: #{res_egnn_forward.1} parent=55 // pred_region
          %p782 = scmp.lt.s32.totalorder %s40, 3
          %s783 = scalar_select %p782, %s40, 3
          %s784 = smul.addr %s783, 2
          %s785 = smul.addr %s784, 4
          %s786 = scalar_lea.vmem %s11, %s785
        $region80: #{res_egnn_forward.1} parent=55 // pred_fallthru
          _
        // Predicated region
        $region81: #{res_egnn_forward.1} parent=55 // pred_check
          %p787 = pneg %p347
        $region82: #{res_egnn_forward.1} parent=55 // pred_check_branch
          %789 = sbr.rel (%p787) target = $region84
        $region83: #{res_egnn_forward.1} parent=55 // pred_region
          %p790 = scmp.lt.s32.totalorder %s40, 3
          %s791 = scalar_select %p790, %s40, 3
          %s792 = scalar_lea.vmem %s12, %s791
        $region84: #{res_egnn_forward.1} parent=55 // pred_fallthru
          _
        // Predicated region
        $region85: #{res_egnn_forward.1} parent=55 // pred_check
          %p793 = pneg %p373
        $region86: #{res_egnn_forward.1} parent=55 // pred_check_branch
          %795 = sbr.rel (%p793) target = $region88
        $region87: #{res_egnn_forward.1} parent=55 // pred_region
          %p796 = scmp.lt.s32.totalorder %s40, 3
          %s797 = scalar_select %p796, %s40, 3
          %s798 = smul.addr %s797, 4
          %s799 = smul.addr %s798, 4
          %s800 = scalar_lea.vmem %s13, %s799
        $region88: #{res_egnn_forward.1} parent=55 // pred_fallthru
          _
        // Predicated region
        $region89: #{res_egnn_forward.1} parent=55 // pred_check
          %p801 = pneg %p399
        $region90: #{res_egnn_forward.1} parent=55 // pred_check_branch
          %803 = sbr.rel (%p801) target = $region92
        $region91: #{res_egnn_forward.1} parent=55 // pred_region
          %p804 = scmp.lt.s32.totalorder %s40, 3
          %s805 = scalar_select %p804, %s40, 3
          %s806 = scalar_lea.vmem %s14, %s805
        $region92: #{res_egnn_forward.1} parent=55 // pred_fallthru
          _
        // Predicated region
        $region93: #{res_egnn_forward.1} parent=55 // pred_check
          %p807 = pneg %p425
        $region94: #{res_egnn_forward.1} parent=55 // pred_check_branch
          %809 = sbr.rel (%p807) target = $region96
        $region95: #{res_egnn_forward.1} parent=55 // pred_region
          %p810 = scmp.lt.s32.totalorder %s40, 3
          %s811 = scalar_select %p810, %s40, 3
          %s812 = smul.addr %s811, 4
          %s813 = smul.addr %s812, 4
          %s814 = scalar_lea.vmem %s15, %s813
        $region96: #{res_egnn_forward.1} parent=55 // pred_fallthru
          _
        // Predicated region
        $region97: #{res_egnn_forward.1} parent=55 // pred_check
          %p815 = pneg %p451
        $region98: #{res_egnn_forward.1} parent=55 // pred_check_branch
          %817 = sbr.rel (%p815) target = $region100
        $region99: #{res_egnn_forward.1} parent=55 // pred_region
          %p818 = scmp.lt.s32.totalorder %s40, 3
          %s819 = scalar_select %p818, %s40, 3
          %s820 = scalar_lea.vmem %s16, %s819
        $region100: #{res_egnn_forward.1} parent=55 // pred_fallthru
          _
        // Predicated region
        $region101: #{res_egnn_forward.1} parent=55 // pred_check
          %p821 = pneg %p477
        $region102: #{res_egnn_forward.1} parent=55 // pred_check_branch
          %823 = sbr.rel (%p821) target = $region104
        $region103: #{res_egnn_forward.1} parent=55 // pred_region
          %p824 = scmp.lt.s32.totalorder %s40, 3
          %s825 = scalar_select %p824, %s40, 3
          %s826 = scalar_lea.vmem %s17, %s825
        $region104: #{res_egnn_forward.1} parent=55 // pred_fallthru
          _
        // Predicated region
        $region105: #{res_egnn_forward.1} parent=55 // pred_check
          %p827 = pneg %p503
        $region106: #{res_egnn_forward.1} parent=55 // pred_check_branch
          %829 = sbr.rel (%p827) target = $region108
        $region107: #{res_egnn_forward.1} parent=55 // pred_region
          %p830 = scmp.lt.s32.totalorder %s40, 3
          %s831 = scalar_select %p830, %s40, 3
          %s832 = smul.addr %s831, 8
          %s833 = smul.addr %s832, 4
          %s834 = scalar_lea.vmem %s18, %s833
        $region108: #{res_egnn_forward.1} parent=55 // pred_fallthru
          _
        // Predicated region
        $region109: #{res_egnn_forward.1} parent=55 // pred_check
          %p835 = pneg %p529
        $region110: #{res_egnn_forward.1} parent=55 // pred_check_branch
          %837 = sbr.rel (%p835) target = $region112
        $region111: #{res_egnn_forward.1} parent=55 // pred_region
          %p838 = scmp.lt.s32.totalorder %s40, 3
          %s839 = scalar_select %p838, %s40, 3
          %s840 = scalar_lea.vmem %s19, %s839
        $region112: #{res_egnn_forward.1} parent=55 // pred_fallthru
          _
        // Predicated region
        $region113: #{res_egnn_forward.1} parent=55 // pred_check
          %p841 = pneg %p555
        $region114: #{res_egnn_forward.1} parent=55 // pred_check_branch
          %843 = sbr.rel (%p841) target = $region116
        $region115: #{res_egnn_forward.1} parent=55 // pred_region
          %p844 = scmp.lt.s32.totalorder %s40, 3
          %s845 = scalar_select %p844, %s40, 3
          %s846 = smul.addr %s845, 4
          %s847 = smul.addr %s846, 4
          %s848 = scalar_lea.vmem %s20, %s847
        $region116: #{res_egnn_forward.1} parent=55 // pred_fallthru
          _
        // Predicated region
        $region117: #{res_egnn_forward.1} parent=55 // pred_check
          %p849 = pneg %p581
        $region118: #{res_egnn_forward.1} parent=55 // pred_check_branch
          %851 = sbr.rel (%p849) target = $region120
        $region119: #{res_egnn_forward.1} parent=55 // pred_region
          %p852 = scmp.lt.s32.totalorder %s40, 3
          %s853 = scalar_select %p852, %s40, 3
          %s854 = scalar_lea.vmem %s21, %s853
        $region120: #{res_egnn_forward.1} parent=55 // pred_fallthru
          _
      $region56: #{res_egnn_forward.1} parent=5 // pred_fallthru
        _
      %p855 = scmp.le.s32.totalorder 1, %s33
      %p856 = scmp.lt.s32.totalorder %s33, 9
      %p857 = pnand %p855, %p856
      %p858 = pneg %p857
      // Predicated region
      $region121: #{res_egnn_forward.1} parent=5 // pred_check
        _
      $region122: #{res_egnn_forward.1} parent=5 // pred_check_branch
        %860 = sbr.rel (%p857) target = $region124
      $region123: #{res_egnn_forward.1} parent=5 // pred_region
        %s861 = ssub.s32 %s33, 1
        %s862 = smul.u32 16, %s43
        %p863 = scmp.lt.s32.totalorder %s862, 31
        %s864 = scalar_select %p863, %s862, 31
        %s865 = smul.addr %s864, 8
        %s866 = scalar_lea.vmem %s0, %s865
        %p867 = pneg %p71
        %p868 = pneg %p68
        %p869 = scmp.lt.s32.totalorder %s43, 1
        %s870 = scalar_select %p869, %s43, 1
        %s871 = scalar_lea.vmem %s1, %s870
        %p872 = pneg %p97
        %p873 = pneg %p94
        %s874 = smul.u32 16, %s43
        %p875 = scmp.lt.s32.totalorder %s874, 31
        %s876 = scalar_select %p875, %s874, 31
        %s877 = smul.addr %s876, 4
        %s878 = scalar_lea.vmem %s2, %s877
        %p879 = pneg %p123
        %p880 = pneg %p120
        %p881 = pneg %p144
        %p882 = pneg %p141
        %p883 = pneg %p165
        %p884 = pneg %p162
        %p885 = pneg %p186
        %p886 = pneg %p183
        %p887 = pneg %p207
        %p888 = pneg %p204
        %p889 = pneg %p228
        %p890 = pneg %p225
        %p891 = pneg %p249
        %p892 = pneg %p246
        %p893 = scmp.lt.s32.totalorder %s42, 3
        %s894 = scalar_select %p893, %s42, 3
        %s895 = smul.addr %s894, 4
        %s896 = smul.addr %s895, 4
        %s897 = scalar_lea.vmem %s9, %s896
        %p898 = pneg %p275
        %p899 = pneg %p272
        %p900 = scmp.lt.s32.totalorder %s42, 3
        %s901 = scalar_select %p900, %s42, 3
        %s902 = scalar_lea.vmem %s10, %s901
        %p903 = pneg %p301
        %p904 = pneg %p298
        %p905 = scmp.lt.s32.totalorder %s42, 3
        %s906 = scalar_select %p905, %s42, 3
        %s907 = smul.addr %s906, 2
        %s908 = smul.addr %s907, 4
        %s909 = scalar_lea.vmem %s11, %s908
        %p910 = pneg %p327
        %p911 = pneg %p324
        %p912 = scmp.lt.s32.totalorder %s42, 3
        %s913 = scalar_select %p912, %s42, 3
        %s914 = scalar_lea.vmem %s12, %s913
        %p915 = pneg %p353
        %p916 = pneg %p350
        %p917 = scmp.lt.s32.totalorder %s42, 3
        %s918 = scalar_select %p917, %s42, 3
        %s919 = smul.addr %s918, 4
        %s920 = smul.addr %s919, 4
        %s921 = scalar_lea.vmem %s13, %s920
        %p922 = pneg %p379
        %p923 = pneg %p376
        %p924 = scmp.lt.s32.totalorder %s42, 3
        %s925 = scalar_select %p924, %s42, 3
        %s926 = scalar_lea.vmem %s14, %s925
        %p927 = pneg %p405
        %p928 = pneg %p402
        %p929 = scmp.lt.s32.totalorder %s42, 3
        %s930 = scalar_select %p929, %s42, 3
        %s931 = smul.addr %s930, 4
        %s932 = smul.addr %s931, 4
        %s933 = scalar_lea.vmem %s15, %s932
        %p934 = pneg %p431
        %p935 = pneg %p428
        %p936 = scmp.lt.s32.totalorder %s42, 3
        %s937 = scalar_select %p936, %s42, 3
        %s938 = scalar_lea.vmem %s16, %s937
        %p939 = pneg %p457
        %p940 = pneg %p454
        %p941 = scmp.lt.s32.totalorder %s42, 3
        %s942 = scalar_select %p941, %s42, 3
        %s943 = scalar_lea.vmem %s17, %s942
        %p944 = pneg %p483
        %p945 = pneg %p480
        %p946 = scmp.lt.s32.totalorder %s42, 3
        %s947 = scalar_select %p946, %s42, 3
        %s948 = smul.addr %s947, 8
        %s949 = smul.addr %s948, 4
        %s950 = scalar_lea.vmem %s18, %s949
        %p951 = pneg %p509
        %p952 = pneg %p506
        %p953 = scmp.lt.s32.totalorder %s42, 3
        %s954 = scalar_select %p953, %s42, 3
        %s955 = scalar_lea.vmem %s19, %s954
        %p956 = pneg %p535
        %p957 = pneg %p532
        %p958 = scmp.lt.s32.totalorder %s42, 3
        %s959 = scalar_select %p958, %s42, 3
        %s960 = smul.addr %s959, 4
        %s961 = smul.addr %s960, 4
        %s962 = scalar_lea.vmem %s20, %s961
        %p963 = pneg %p561
        %p964 = pneg %p558
        %p965 = scmp.lt.s32.totalorder %s42, 3
        %s966 = scalar_select %p965, %s42, 3
        %s967 = scalar_lea.vmem %s21, %s966
        %p968 = pneg %p587
        %p969 = pneg %p584
        %p970 = pneg %p608
        %p971 = pneg %p605
        %p972 = pneg %p629
        %p973 = pneg %p626
        %p974 = pneg %p650
        %p975 = pneg %p647
        %p976 = pneg %p671
        %p977 = pneg %p668
        %p978 = pneg %p692
        %p979 = pneg %p689
        %s980 = smul.u32 16, %s43
        %p981 = scmp.lt.s32.totalorder %s980, 31
        %s982 = scalar_select %p981, %s980, 31
        %s983 = smul.addr %s982, 8
        %s984 = scalar_lea.vmem %s0, %s983
        %s985 = smul.u32 16, %s43
        %p986 = scmp.lt.s32.totalorder %s43, 1
        %s987 = scalar_select %p986, %s43, 1
        %s988 = scalar_lea.vmem %s1, %s987
        %s989 = smul.u32 16, %s43
        %p990 = scmp.lt.s32.totalorder %s989, 31
        %s991 = scalar_select %p990, %s989, 31
        %s992 = smul.addr %s991, 4
        %s993 = scalar_lea.vmem %s2, %s992
        %s994 = smul.u32 16, %s43
        %p995 = scmp.lt.s32.totalorder %s42, 3
        %s996 = scalar_select %p995, %s42, 3
        %s997 = smul.addr %s996, 4
        %s998 = smul.addr %s997, 4
        %s999 = scalar_lea.vmem %s9, %s998
        %p1000 = scmp.lt.s32.totalorder %s42, 3
        %s1001 = scalar_select %p1000, %s42, 3
        %s1002 = scalar_lea.vmem %s10, %s1001
        %p1003 = scmp.lt.s32.totalorder %s42, 3
        %s1004 = scalar_select %p1003, %s42, 3
        %s1005 = smul.addr %s1004, 2
        %s1006 = smul.addr %s1005, 4
        %s1007 = scalar_lea.vmem %s11, %s1006
        %p1008 = scmp.lt.s32.totalorder %s42, 3
        %s1009 = scalar_select %p1008, %s42, 3
        %s1010 = scalar_lea.vmem %s12, %s1009
        %p1011 = scmp.lt.s32.totalorder %s42, 3
        %s1012 = scalar_select %p1011, %s42, 3
        %s1013 = smul.addr %s1012, 4
        %s1014 = smul.addr %s1013, 4
        %s1015 = scalar_lea.vmem %s13, %s1014
        %p1016 = scmp.lt.s32.totalorder %s42, 3
        %s1017 = scalar_select %p1016, %s42, 3
        %s1018 = scalar_lea.vmem %s14, %s1017
        %p1019 = scmp.lt.s32.totalorder %s42, 3
        %s1020 = scalar_select %p1019, %s42, 3
        %s1021 = smul.addr %s1020, 4
        %s1022 = smul.addr %s1021, 4
        %s1023 = scalar_lea.vmem %s15, %s1022
        %p1024 = scmp.lt.s32.totalorder %s42, 3
        %s1025 = scalar_select %p1024, %s42, 3
        %s1026 = scalar_lea.vmem %s16, %s1025
        %p1027 = scmp.lt.s32.totalorder %s42, 3
        %s1028 = scalar_select %p1027, %s42, 3
        %s1029 = scalar_lea.vmem %s17, %s1028
        %p1030 = scmp.lt.s32.totalorder %s42, 3
        %s1031 = scalar_select %p1030, %s42, 3
        %s1032 = smul.addr %s1031, 8
        %s1033 = smul.addr %s1032, 4
        %s1034 = scalar_lea.vmem %s18, %s1033
        %p1035 = scmp.lt.s32.totalorder %s42, 3
        %s1036 = scalar_select %p1035, %s42, 3
        %s1037 = scalar_lea.vmem %s19, %s1036
        %p1038 = scmp.lt.s32.totalorder %s42, 3
        %s1039 = scalar_select %p1038, %s42, 3
        %s1040 = smul.addr %s1039, 4
        %s1041 = smul.addr %s1040, 4
        %s1042 = scalar_lea.vmem %s20, %s1041
        %p1043 = scmp.lt.s32.totalorder %s42, 3
        %s1044 = scalar_select %p1043, %s42, 3
        %s1045 = scalar_lea.vmem %s21, %s1044
        %p1047 = scmp.eq.s32.totalorder %s42, 0
        %p1048 = scmp.eq.s32.totalorder %s43, 0
        %p1049 = pnand %p1047, %p1048
        %p1050 = pneg %p1049
        // Predicated region
        $region125: #{res_egnn_forward.1} parent=123 // pred_check
          _
        $region126: #{res_egnn_forward.1} parent=123 // pred_check_branch
          %1052 = sbr.rel (%p1049) target = $region128
        $region127: #{res_egnn_forward.1} parent=123 // pred_region
          %v1053 = vld [vmem:[%s3] sm:$0xf]
          %v1054 = vld [vmem:[%s3 + $0x4] sm:$0xf]
          %v1055 = vld [vmem:[%s3 + $0x8] sm:$0xf]
          %v1056 = vld [vmem:[%s3 + $0xc] sm:$0xf]
          %v1057 = vld [vmem:[%s7] sm:$0xf]
          %v1058 = vld [vmem:[%s7 + $0x4] sm:$0x1]
          %v1059 = vld [vmem:[%s8] sm:$0x1]
          %v1061 = vlaneseq
          %v1062 = vshrl.u32 %v1061, 7
          %v1063 = vsub.s32 0, %v1062
          %v1064 = vrot.slane %v1059, %v1063
          %v1070 = vunpack.c.l.b16 %v1053
          %v1071 = vunpack.c.l.b16 %v1054
          %v1072 = vunpack.c.l.b16 %v1055
          %v1073 = vunpack.c.l.b16 %v1056
          %v1074 = vpack.c.b16 %v1071, %v1070
          %v1075 = vpack.c.b16 %v1073, %v1072
          %v1078 = vunpack.c.l.b16 %v1057
          %v1079 = vunpack.c.l.b16 %v1058
          %v1080 = vpack.c.b16 %v1079, %v1078
          %vm1081 = vcmask 72704
          %v1083 = vsel %vm1081, %v1074, 0
          %v1086 = vsel %vm1081, %v1075, 0
          %vm1088 = vcmask 1043456
          %vm1089 = vcmask 1044480
          %v1090 = vsel %vm1088, 4294967295, 65535
          %v1091 = vsel %vm1089, %v1090, 0
          %v1093 = vand.u32 %v1080, %v1091
          %1095 = vmatprep.subr.bf16.mxu0 0
          %1096 = vmatpush1.bf16.msra.mxu0 0
          %1097 = vmatprep.subr.bf16.mxu0 0
          %1098 = vmatpush1.bf16.msra.mxu0 0
          %1099 = vmatprep.subr.bf16.mxu0 0
          %1100 = vmatpush1.bf16.msra.mxu0 0
          %1101 = vmatprep.subr.bf16.mxu0 0
          %1102 = vmatpush1.bf16.msra.mxu0 0
          %1103 = vmatprep.subr.bf16.mxu0 0
          %1104 = vmatpush1.bf16.msra.mxu0 0
          %1105 = vmatprep.subr.bf16.mxu0 0
          %1106 = vmatpush1.bf16.msra.mxu0 0
          %1107 = vmatprep.subr.bf16.mxu0 0
          %1108 = vmatpush1.bf16.msra.mxu0 0
          %1109 = vmatprep.subr.bf16.mxu0 0
          %1110 = vmatpush1.bf16.msra.mxu0 %v1093
          %1111 = vmatprep.subr.bf16.mxu0 0
          %1112 = vmatpush2.bf16.msra.mxu0 0
          %1113 = vmatprep.subr.bf16.mxu0 0
          %1114 = vmatpush2.bf16.msra.mxu0 0
          %1115 = vmatprep.subr.bf16.mxu0 0
          %1116 = vmatpush2.bf16.msra.mxu0 0
          %1117 = vmatprep.subr.bf16.mxu0 0
          %1118 = vmatpush2.bf16.msra.mxu0 0
          %1119 = vmatprep.subr.bf16.mxu0 0
          %1120 = vmatpush2.bf16.msra.mxu0 0
          %1121 = vmatprep.subr.bf16.mxu0 0
          %1122 = vmatpush2.bf16.msra.mxu0 0
          %1123 = vmatprep.subr.bf16.mxu0 0
          %1124 = vmatpush2.bf16.msra.mxu0 0
          %1125 = vmatprep.subr.bf16.mxu0 0
          %1126 = vmatpush2.bf16.msra.mxu0 0
          %1127 = vmatprep.mubr.bf16.mxu0 0
          %1128 = vmatmul.mubr.bf16.gmra.mxu0 %v1083
          %v1129 = vpop.f32.mrf.mxu0
          %v1130 = vadd.f32 %v1064, %v1129
          %v1131 = vpop.f32.mrf.mxu0
          %v1132 = vpop.f32.mrf.mxu0
          %v1133 = vadd.f32 %v1064, %v1132
          %v1134 = vpop.f32.mrf.mxu0
          %1135 = vmatprep.mubr.bf16.mxu0 0
          %1136 = vmatmul.mubr.bf16.gmra.mxu0 %v1086
          %v1137 = vpop.f32.mrf.mxu0
          %v1138 = vadd.f32 %v1064, %v1137
          %v1139 = vpop.f32.mrf.mxu0
          %v1140 = vpop.f32.mrf.mxu0
          %v1141 = vadd.f32 %v1064, %v1140
          %v1142 = vpop.f32.mrf.mxu0
          %1143 = vdwg.mxu0
          %vm1144 = vcmask 261120
          %1145 = vst.msk [vmem:[#allocation2] sm:$0xff] %vm1144, %v1130
          %1146 = vst.msk [vmem:[#allocation2 + $0x8] sm:$0xff] %vm1144, %v1133
          %1147 = vst.msk [vmem:[#allocation2 + $0x10] sm:$0xff] %vm1144, %v1138
          %1148 = vst.msk [vmem:[#allocation2 + $0x18] sm:$0xff] %vm1144, %v1141
          %v1149 = vld [vmem:[%s4] sm:$0xff]
          %v1150 = vld [vmem:[%s4 + $0x8] sm:$0xff]
          %v1151 = vld [vmem:[%s4 + $0x10] sm:$0xff]
          %v1152 = vld [vmem:[%s4 + $0x18] sm:$0xff]
          %vm1153 = vcmask 23552
          %1154 = vst.msk [vmem:[#allocation3] sm:$0xff] %vm1153, %v1149
          %1155 = vst.msk [vmem:[#allocation3 + $0x8] sm:$0xff] %vm1153, %v1150
          %1156 = vst.msk [vmem:[#allocation3 + $0x10] sm:$0xff] %vm1153, %v1151
          %1157 = vst.msk [vmem:[#allocation3 + $0x18] sm:$0xff] %vm1153, %v1152
        $region128: #{res_egnn_forward.1} parent=123 // pred_fallthru
          _
        // Predicated region
        $region129: #{res_egnn_forward.1} parent=123 // pred_check
          %p1158 = pneg %p1048
        $region130: #{res_egnn_forward.1} parent=123 // pred_check_branch
          %1160 = sbr.rel (%p1158) target = $region132
        $region131: #{res_egnn_forward.1} parent=123 // pred_region
          %v1161 = vld [vmem:[#allocation2] sm:$0xff]
          %v1162 = vld [vmem:[#allocation2 + $0x8] sm:$0xff]
          %v1163 = vld [vmem:[#allocation2 + $0x10] sm:$0xff]
          %v1164 = vld [vmem:[#allocation2 + $0x18] sm:$0xff]
          %v1165 = vpack.c.bf16 %v1162, %v1161
          %v1166 = vpack.c.bf16 %v1164, %v1163
          %v1167 = vld [vmem:[%s999] sm:$0xf]
          %v1168 = vld [vmem:[%s999 + $0x4] sm:$0xf]
          %v1169 = vld [vmem:[%s999 + $0x8] sm:$0xf]
          %v1170 = vld [vmem:[%s999 + $0xc] sm:$0xf]
          %v1175 = vunpack.c.l.b16 %v1167
          %v1176 = vunpack.c.l.b16 %v1168
          %v1177 = vunpack.c.l.b16 %v1169
          %v1178 = vunpack.c.l.b16 %v1170
          %v1179 = vpack.c.b16 %v1176, %v1175
          %v1180 = vpack.c.b16 %v1178, %v1177
          %vm1183 = vcmask 261120
          %v1185 = vsel %vm1183, %v1165, 0
          %v1188 = vsel %vm1183, %v1166, 0
          %1190 = vmatprep.subr.bf16.mxu0 0
          %1191 = vmatpush1.bf16.msra.mxu0 0
          %1192 = vmatprep.subr.bf16.mxu0 0
          %1193 = vmatpush1.bf16.msra.mxu0 0
          %1194 = vmatprep.subr.bf16.mxu0 0
          %1195 = vmatpush1.bf16.msra.mxu0 0
          %1196 = vmatprep.subr.bf16.mxu0 0
          %1197 = vmatpush1.bf16.msra.mxu0 0
          %1198 = vmatprep.subr.bf16.mxu0 0
          %1199 = vmatpush1.bf16.msra.mxu0 0
          %1200 = vmatprep.subr.bf16.mxu0 0
          %1201 = vmatpush1.bf16.msra.mxu0 0
          %1202 = vmatprep.subr.bf16.mxu0 0
          %1203 = vmatpush1.bf16.msra.mxu0 %v1180
          %1204 = vmatprep.subr.bf16.mxu0 0
          %1205 = vmatpush1.bf16.msra.mxu0 %v1179
          %1206 = vmatprep.subr.bf16.mxu0 0
          %1207 = vmatpush2.bf16.msra.mxu0 0
          %1208 = vmatprep.subr.bf16.mxu0 0
          %1209 = vmatpush2.bf16.msra.mxu0 0
          %1210 = vmatprep.subr.bf16.mxu0 0
          %1211 = vmatpush2.bf16.msra.mxu0 0
          %1212 = vmatprep.subr.bf16.mxu0 0
          %1213 = vmatpush2.bf16.msra.mxu0 0
          %1214 = vmatprep.subr.bf16.mxu0 0
          %1215 = vmatpush2.bf16.msra.mxu0 0
          %1216 = vmatprep.subr.bf16.mxu0 0
          %1217 = vmatpush2.bf16.msra.mxu0 0
          %1218 = vmatprep.subr.bf16.mxu0 0
          %1219 = vmatpush2.bf16.msra.mxu0 0
          %1220 = vmatprep.subr.bf16.mxu0 0
          %1221 = vmatpush2.bf16.msra.mxu0 0
          %1222 = vmatprep.mubr.bf16.mxu0 0
          %1223 = vmatmul.mubr.bf16.gmra.mxu0 %v1185
          %v1224 = vpop.f32.mrf.mxu0
          %v1225 = vadd.f32 0.0, %v1224
          %v1226 = vpop.f32.mrf.mxu0
          %v1227 = vpop.f32.mrf.mxu0
          %v1228 = vadd.f32 0.0, %v1227
          %v1229 = vpop.f32.mrf.mxu0
          %1230 = vmatprep.mubr.bf16.mxu0 0
          %1231 = vmatmul.mubr.bf16.gmra.mxu0 %v1188
          %v1232 = vpop.f32.mrf.mxu0
          %v1233 = vadd.f32 0.0, %v1232
          %v1234 = vpop.f32.mrf.mxu0
          %v1235 = vpop.f32.mrf.mxu0
          %v1236 = vadd.f32 0.0, %v1235
          %v1237 = vpop.f32.mrf.mxu0
          %1238 = vdwg.mxu0
          %v1239 = vpack.c.bf16 %v1228, %v1225
          %v1240 = vpack.c.bf16 %v1236, %v1233
          %v1243 = vunpack.c.l.b16 %v1239
          %v1244 = vunpack.c.h.b16 %v1239
          %v1245 = vunpack.c.l.b16 %v1240
          %v1246 = vunpack.c.h.b16 %v1240
          %v1247 = vpack.c.b16 %v1243, %v1243
          %v1248 = vpack.c.b16 %v1244, %v1244
          %v1249 = vpack.c.b16 %v1245, %v1245
          %v1250 = vpack.c.b16 %v1246, %v1246
          %vm1255 = vcmask 257024
          %1256 = vst.msk [vmem:[#allocation5] sm:$0xf] %vm1255, %v1247
          %1257 = vst.msk [vmem:[#allocation5 + $0x4] sm:$0xf] %vm1255, %v1248
          %1258 = vst.msk [vmem:[#allocation5 + $0x8] sm:$0xf] %vm1255, %v1249
          %1259 = vst.msk [vmem:[#allocation5 + $0xc] sm:$0xf] %vm1255, %v1250
          %1260 = vrot.lane.b32.xlu0 %v1247, 96
          %v1261 = vpop.permute.xlu0 %1260
          %1262 = vrot.lane.b32.xlu0 %v1248, 96
          %v1263 = vpop.permute.xlu0 %1262
          %1264 = vrot.lane.b32.xlu0 %v1249, 96
          %v1265 = vpop.permute.xlu0 %1264
          %1266 = vrot.lane.b32.xlu0 %v1250, 96
          %v1267 = vpop.permute.xlu0 %1266
          %1272 = vst.msk [vmem:[#allocation5 + $0x10] sm:$0xf] %vm1255, %v1261
          %1273 = vst.msk [vmem:[#allocation5 + $0x14] sm:$0xf] %vm1255, %v1263
          %1274 = vst.msk [vmem:[#allocation5 + $0x18] sm:$0xf] %vm1255, %v1265
          %1275 = vst.msk [vmem:[#allocation5 + $0x1c] sm:$0xf] %vm1255, %v1267
          %v1276 = vld [vmem:[#allocation3] sm:$0xff]
          %v1277 = vld [vmem:[#allocation3 + $0x8] sm:$0xff]
          %v1278 = vld [vmem:[#allocation3 + $0x10] sm:$0xff]
          %v1279 = vld [vmem:[#allocation3 + $0x18] sm:$0xff]
          %vm1280 = vcmask 23552
          %1281 = vst.msk [vmem:[#allocation4] sm:$0xff] %vm1280, %v1276
          %1282 = vst.msk [vmem:[#allocation4 + $0x8] sm:$0xff] %vm1280, %v1277
          %1283 = vst.msk [vmem:[#allocation4 + $0x10] sm:$0xff] %vm1280, %v1278
          %1284 = vst.msk [vmem:[#allocation4 + $0x18] sm:$0xff] %vm1280, %v1279
          %v1285 = vsub.f32 0.0, %v1276
          %v1286 = vsub.f32 0.0, %v1277
          %v1287 = vsub.f32 0.0, %v1278
          %v1288 = vsub.f32 0.0, %v1279
          %1289 = vst.msk [vmem:[#allocation4 + $0x20] sm:$0xff] %vm1280, %v1285
          %1290 = vst.msk [vmem:[#allocation4 + $0x28] sm:$0xff] %vm1280, %v1286
          %1291 = vst.msk [vmem:[#allocation4 + $0x30] sm:$0xff] %vm1280, %v1287
          %1292 = vst.msk [vmem:[#allocation4 + $0x38] sm:$0xff] %vm1280, %v1288
          %vm1293 = vcmask 285696
          %1294 = vst.msk [vmem:[#allocation6] sm:$0xff] %vm1293, 0.0
          %1295 = vst.msk [vmem:[#allocation6 + $0x8] sm:$0xff] %vm1293, 0.0
          %1296 = vst.msk [vmem:[#allocation6 + $0x10] sm:$0xff] %vm1293, 0.0
          %1297 = vst.msk [vmem:[#allocation6 + $0x18] sm:$0xff] %vm1293, 0.0
        $region132: #{res_egnn_forward.1} parent=123 // pred_fallthru
          _
        %v1298 = vld [vmem:[%s984] sm:$0xff]
        %v1299 = vld [vmem:[%s984 + $0x8] sm:$0xff]
        %v1300 = vld [vmem:[%s984 + $0x10] sm:$0xff]
        %v1301 = vld [vmem:[%s984 + $0x18] sm:$0xff]
        %v1302 = vld [vmem:[%s984 + $0x20] sm:$0xff]
        %v1303 = vld [vmem:[%s984 + $0x28] sm:$0xff]
        %v1304 = vld [vmem:[%s984 + $0x30] sm:$0xff]
        %v1305 = vld [vmem:[%s984 + $0x38] sm:$0xff]
        %v1306 = vld [vmem:[%s984 + $0x40] sm:$0xff]
        %v1307 = vld [vmem:[%s984 + $0x48] sm:$0xff]
        %v1308 = vld [vmem:[%s984 + $0x50] sm:$0xff]
        %v1309 = vld [vmem:[%s984 + $0x58] sm:$0xff]
        %v1310 = vld [vmem:[%s984 + $0x60] sm:$0xff]
        %v1311 = vld [vmem:[%s984 + $0x68] sm:$0xff]
        %v1312 = vld [vmem:[%s984 + $0x70] sm:$0xff]
        %v1313 = vld [vmem:[%s984 + $0x78] sm:$0xff]
        %v1314 = vlaneseq
        %v1315 = vand.u32 %v1314, 127
        %1316 = vset.pattern.permute.xlu0 0
        %1317 = vperm.xlu0 %1316, %v1298
        %v1318 = vpop.permute.xlu0 %1317
        %1319 = vset.pattern.permute.xlu0 0
        %1320 = vperm.xlu0 %1319, %v1299
        %v1321 = vpop.permute.xlu0 %1320
        %1322 = vset.pattern.permute.xlu0 0
        %1323 = vperm.xlu0 %1322, %v1300
        %v1324 = vpop.permute.xlu0 %1323
        %1325 = vset.pattern.permute.xlu0 0
        %1326 = vperm.xlu0 %1325, %v1301
        %v1327 = vpop.permute.xlu0 %1326
        %1328 = vset.pattern.permute.xlu0 0
        %1329 = vperm.xlu0 %1328, %v1302
        %v1330 = vpop.permute.xlu0 %1329
        %1331 = vset.pattern.permute.xlu0 0
        %1332 = vperm.xlu0 %1331, %v1303
        %v1333 = vpop.permute.xlu0 %1332
        %1334 = vset.pattern.permute.xlu0 0
        %1335 = vperm.xlu0 %1334, %v1304
        %v1336 = vpop.permute.xlu0 %1335
        %1337 = vset.pattern.permute.xlu0 0
        %1338 = vperm.xlu0 %1337, %v1305
        %v1339 = vpop.permute.xlu0 %1338
        %1340 = vset.pattern.permute.xlu0 0
        %1341 = vperm.xlu0 %1340, %v1306
        %v1342 = vpop.permute.xlu0 %1341
        %1343 = vset.pattern.permute.xlu0 0
        %1344 = vperm.xlu0 %1343, %v1307
        %v1345 = vpop.permute.xlu0 %1344
        %1346 = vset.pattern.permute.xlu0 0
        %1347 = vperm.xlu0 %1346, %v1308
        %v1348 = vpop.permute.xlu0 %1347
        %1349 = vset.pattern.permute.xlu0 0
        %1350 = vperm.xlu0 %1349, %v1309
        %v1351 = vpop.permute.xlu0 %1350
        %1352 = vset.pattern.permute.xlu0 0
        %1353 = vperm.xlu0 %1352, %v1310
        %v1354 = vpop.permute.xlu0 %1353
        %1355 = vset.pattern.permute.xlu0 0
        %1356 = vperm.xlu0 %1355, %v1311
        %v1357 = vpop.permute.xlu0 %1356
        %1358 = vset.pattern.permute.xlu0 0
        %1359 = vperm.xlu0 %1358, %v1312
        %v1360 = vpop.permute.xlu0 %1359
        %1361 = vset.pattern.permute.xlu0 0
        %1362 = vperm.xlu0 %1361, %v1313
        %v1363 = vpop.permute.xlu0 %1362
        %vm1364 = vcmp.eq.s32.totalorder %v1315, %v1318
        %vm1365 = vcmp.eq.s32.totalorder %v1315, %v1321
        %vm1366 = vcmp.eq.s32.totalorder %v1315, %v1324
        %vm1367 = vcmp.eq.s32.totalorder %v1315, %v1327
        %vm1368 = vcmp.eq.s32.totalorder %v1315, %v1330
        %vm1369 = vcmp.eq.s32.totalorder %v1315, %v1333
        %vm1370 = vcmp.eq.s32.totalorder %v1315, %v1336
        %vm1371 = vcmp.eq.s32.totalorder %v1315, %v1339
        %vm1372 = vcmp.eq.s32.totalorder %v1315, %v1342
        %vm1373 = vcmp.eq.s32.totalorder %v1315, %v1345
        %vm1374 = vcmp.eq.s32.totalorder %v1315, %v1348
        %vm1375 = vcmp.eq.s32.totalorder %v1315, %v1351
        %vm1376 = vcmp.eq.s32.totalorder %v1315, %v1354
        %vm1377 = vcmp.eq.s32.totalorder %v1315, %v1357
        %vm1378 = vcmp.eq.s32.totalorder %v1315, %v1360
        %vm1379 = vcmp.eq.s32.totalorder %v1315, %v1363
        %v1380 = vadd.s32 %v1298, 32
        %v1381 = vadd.s32 %v1299, 32
        %v1382 = vadd.s32 %v1300, 32
        %v1383 = vadd.s32 %v1301, 32
        %v1384 = vadd.s32 %v1302, 32
        %v1385 = vadd.s32 %v1303, 32
        %v1386 = vadd.s32 %v1304, 32
        %v1387 = vadd.s32 %v1305, 32
        %v1388 = vadd.s32 %v1306, 32
        %v1389 = vadd.s32 %v1307, 32
        %v1390 = vadd.s32 %v1308, 32
        %v1391 = vadd.s32 %v1309, 32
        %v1392 = vadd.s32 %v1310, 32
        %v1393 = vadd.s32 %v1311, 32
        %v1394 = vadd.s32 %v1312, 32
        %v1395 = vadd.s32 %v1313, 32
        %1396 = vset.pattern.permute.xlu0 1
        %1397 = vperm.xlu0 %1396, %v1380
        %v1398 = vpop.permute.xlu0 %1397
        %1399 = vset.pattern.permute.xlu0 1
        %1400 = vperm.xlu0 %1399, %v1381
        %v1401 = vpop.permute.xlu0 %1400
        %1402 = vset.pattern.permute.xlu0 1
        %1403 = vperm.xlu0 %1402, %v1382
        %v1404 = vpop.permute.xlu0 %1403
        %1405 = vset.pattern.permute.xlu0 1
        %1406 = vperm.xlu0 %1405, %v1383
        %v1407 = vpop.permute.xlu0 %1406
        %1408 = vset.pattern.permute.xlu0 1
        %1409 = vperm.xlu0 %1408, %v1384
        %v1410 = vpop.permute.xlu0 %1409
        %1411 = vset.pattern.permute.xlu0 1
        %1412 = vperm.xlu0 %1411, %v1385
        %v1413 = vpop.permute.xlu0 %1412
        %1414 = vset.pattern.permute.xlu0 1
        %1415 = vperm.xlu0 %1414, %v1386
        %v1416 = vpop.permute.xlu0 %1415
        %1417 = vset.pattern.permute.xlu0 1
        %1418 = vperm.xlu0 %1417, %v1387
        %v1419 = vpop.permute.xlu0 %1418
        %1420 = vset.pattern.permute.xlu0 1
        %1421 = vperm.xlu0 %1420, %v1388
        %v1422 = vpop.permute.xlu0 %1421
        %1423 = vset.pattern.permute.xlu0 1
        %1424 = vperm.xlu0 %1423, %v1389
        %v1425 = vpop.permute.xlu0 %1424
        %1426 = vset.pattern.permute.xlu0 1
        %1427 = vperm.xlu0 %1426, %v1390
        %v1428 = vpop.permute.xlu0 %1427
        %1429 = vset.pattern.permute.xlu0 1
        %1430 = vperm.xlu0 %1429, %v1391
        %v1431 = vpop.permute.xlu0 %1430
        %1432 = vset.pattern.permute.xlu0 1
        %1433 = vperm.xlu0 %1432, %v1392
        %v1434 = vpop.permute.xlu0 %1433
        %1435 = vset.pattern.permute.xlu0 1
        %1436 = vperm.xlu0 %1435, %v1393
        %v1437 = vpop.permute.xlu0 %1436
        %1438 = vset.pattern.permute.xlu0 1
        %1439 = vperm.xlu0 %1438, %v1394
        %v1440 = vpop.permute.xlu0 %1439
        %1441 = vset.pattern.permute.xlu0 1
        %1442 = vperm.xlu0 %1441, %v1395
        %v1443 = vpop.permute.xlu0 %1442
        %vm1444 = vcmp.eq.s32.totalorder %v1315, %v1398
        %vm1445 = vcmp.eq.s32.totalorder %v1315, %v1401
        %vm1446 = vcmp.eq.s32.totalorder %v1315, %v1404
        %vm1447 = vcmp.eq.s32.totalorder %v1315, %v1407
        %vm1448 = vcmp.eq.s32.totalorder %v1315, %v1410
        %vm1449 = vcmp.eq.s32.totalorder %v1315, %v1413
        %vm1450 = vcmp.eq.s32.totalorder %v1315, %v1416
        %vm1451 = vcmp.eq.s32.totalorder %v1315, %v1419
        %vm1452 = vcmp.eq.s32.totalorder %v1315, %v1422
        %vm1453 = vcmp.eq.s32.totalorder %v1315, %v1425
        %vm1454 = vcmp.eq.s32.totalorder %v1315, %v1428
        %vm1455 = vcmp.eq.s32.totalorder %v1315, %v1431
        %vm1456 = vcmp.eq.s32.totalorder %v1315, %v1434
        %vm1457 = vcmp.eq.s32.totalorder %v1315, %v1437
        %vm1458 = vcmp.eq.s32.totalorder %v1315, %v1440
        %vm1459 = vcmp.eq.s32.totalorder %v1315, %v1443
        %vm1460 = vmor %vm1364, %vm1444
        %vm1461 = vmor %vm1365, %vm1445
        %vm1462 = vmor %vm1366, %vm1446
        %vm1463 = vmor %vm1367, %vm1447
        %vm1464 = vmor %vm1368, %vm1448
        %vm1465 = vmor %vm1369, %vm1449
        %vm1466 = vmor %vm1370, %vm1450
        %vm1467 = vmor %vm1371, %vm1451
        %vm1468 = vmor %vm1372, %vm1452
        %vm1469 = vmor %vm1373, %vm1453
        %vm1470 = vmor %vm1374, %vm1454
        %vm1471 = vmor %vm1375, %vm1455
        %vm1472 = vmor %vm1376, %vm1456
        %vm1473 = vmor %vm1377, %vm1457
        %vm1474 = vmor %vm1378, %vm1458
        %vm1475 = vmor %vm1379, %vm1459
        %v1476 = vsel %vm1460, 1.0, 0.0
        %v1477 = vsel %vm1461, 1.0, 0.0
        %v1478 = vsel %vm1462, 1.0, 0.0
        %v1479 = vsel %vm1463, 1.0, 0.0
        %v1480 = vsel %vm1464, 1.0, 0.0
        %v1481 = vsel %vm1465, 1.0, 0.0
        %v1482 = vsel %vm1466, 1.0, 0.0
        %v1483 = vsel %vm1467, 1.0, 0.0
        %v1484 = vsel %vm1468, 1.0, 0.0
        %v1485 = vsel %vm1469, 1.0, 0.0
        %v1486 = vsel %vm1470, 1.0, 0.0
        %v1487 = vsel %vm1471, 1.0, 0.0
        %v1488 = vsel %vm1472, 1.0, 0.0
        %v1489 = vsel %vm1473, 1.0, 0.0
        %v1490 = vsel %vm1474, 1.0, 0.0
        %v1491 = vsel %vm1475, 1.0, 0.0
        %v1492 = vpack.c.bf16 %v1477, %v1476
        %v1493 = vpack.c.bf16 %v1479, %v1478
        %v1494 = vpack.c.bf16 %v1481, %v1480
        %v1495 = vpack.c.bf16 %v1483, %v1482
        %v1496 = vpack.c.bf16 %v1485, %v1484
        %v1497 = vpack.c.bf16 %v1487, %v1486
        %v1498 = vpack.c.bf16 %v1489, %v1488
        %v1499 = vpack.c.bf16 %v1491, %v1490
        %v1500 = vld [vmem:[#allocation4] sm:$0xff]
        %v1501 = vld [vmem:[#allocation4 + $0x8] sm:$0xff]
        %v1502 = vld [vmem:[#allocation4 + $0x10] sm:$0xff]
        %v1503 = vld [vmem:[#allocation4 + $0x18] sm:$0xff]
        %v1504 = vld [vmem:[#allocation4 + $0x20] sm:$0xff]
        %v1505 = vld [vmem:[#allocation4 + $0x28] sm:$0xff]
        %v1506 = vld [vmem:[#allocation4 + $0x30] sm:$0xff]
        %v1507 = vld [vmem:[#allocation4 + $0x38] sm:$0xff]
        %vm1508 = vcmask 523264
        %v1510 = vsel %vm1508, %v1476, 0
        %v1513 = vsel %vm1508, %v1477, 0
        %v1516 = vsel %vm1508, %v1478, 0
        %v1519 = vsel %vm1508, %v1479, 0
        %v1522 = vsel %vm1508, %v1480, 0
        %v1525 = vsel %vm1508, %v1481, 0
        %v1528 = vsel %vm1508, %v1482, 0
        %v1531 = vsel %vm1508, %v1483, 0
        %v1534 = vsel %vm1508, %v1484, 0
        %v1537 = vsel %vm1508, %v1485, 0
        %v1540 = vsel %vm1508, %v1486, 0
        %v1543 = vsel %vm1508, %v1487, 0
        %v1546 = vsel %vm1508, %v1488, 0
        %v1549 = vsel %vm1508, %v1489, 0
        %v1552 = vsel %vm1508, %v1490, 0
        %v1555 = vsel %vm1508, %v1491, 0
        %1557 = vmatprep.subr.mxu0 0.0
        %1558 = vmatpush1.msra.mxu0 0.0
        %1559 = vmatprep.subr.mxu0 0.0
        %1560 = vmatpush1.msra.mxu0 0.0
        %1561 = vmatprep.subr.mxu0 0.0
        %1562 = vmatpush1.msra.mxu0 0.0
        %1563 = vmatprep.subr.mxu0 0.0
        %1564 = vmatpush1.msra.mxu0 0.0
        %1565 = vmatprep.subr.mxu0 0.0
        %1566 = vmatpush1.msra.mxu0 0.0
        %1567 = vmatprep.subr.mxu0 0.0
        %1568 = vmatpush1.msra.mxu0 0.0
        %1569 = vmatprep.subr.mxu0 0.0
        %1570 = vmatpush1.msra.mxu0 0.0
        %1571 = vmatprep.subr.mxu0 0.0
        %1572 = vmatpush1.msra.mxu0 0.0
        %1573 = vmatprep.subr.mxu0 0.0
        %1574 = vmatpush1.msra.mxu0 %v1507
        %1575 = vmatprep.subr.mxu0 0.0
        %1576 = vmatpush1.msra.mxu0 %v1506
        %1577 = vmatprep.subr.mxu0 0.0
        %1578 = vmatpush1.msra.mxu0 %v1505
        %1579 = vmatprep.subr.mxu0 0.0
        %1580 = vmatpush1.msra.mxu0 %v1504
        %1581 = vmatprep.subr.mxu0 0.0
        %1582 = vmatpush1.msra.mxu0 %v1503
        %1583 = vmatprep.subr.mxu0 0.0
        %1584 = vmatpush1.msra.mxu0 %v1502
        %1585 = vmatprep.subr.mxu0 0.0
        %1586 = vmatpush1.msra.mxu0 %v1501
        %1587 = vmatprep.subr.mxu0 0.0
        %1588 = vmatpush1.msra.mxu0 %v1500
        %1589 = vmatprep.subr.mxu0 0.0
        %1590 = vmatpush2.msra.mxu0 0.0
        %1591 = vmatprep.subr.mxu0 0.0
        %1592 = vmatpush2.msra.mxu0 0.0
        %1593 = vmatprep.subr.mxu0 0.0
        %1594 = vmatpush2.msra.mxu0 0.0
        %1595 = vmatprep.subr.mxu0 0.0
        %1596 = vmatpush2.msra.mxu0 0.0
        %1597 = vmatprep.subr.mxu0 0.0
        %1598 = vmatpush2.msra.mxu0 0.0
        %1599 = vmatprep.subr.mxu0 0.0
        %1600 = vmatpush2.msra.mxu0 0.0
        %1601 = vmatprep.subr.mxu0 0.0
        %1602 = vmatpush2.msra.mxu0 0.0
        %1603 = vmatprep.subr.mxu0 0.0
        %1604 = vmatpush2.msra.mxu0 0.0
        %1605 = vmatprep.subr.mxu0 0.0
        %1606 = vmatpush2.msra.mxu0 0.0
        %1607 = vmatprep.subr.mxu0 0.0
        %1608 = vmatpush2.msra.mxu0 0.0
        %1609 = vmatprep.subr.mxu0 0.0
        %1610 = vmatpush2.msra.mxu0 0.0
        %1611 = vmatprep.subr.mxu0 0.0
        %1612 = vmatpush2.msra.mxu0 0.0
        %1613 = vmatprep.subr.mxu0 0.0
        %1614 = vmatpush2.msra.mxu0 0.0
        %1615 = vmatprep.subr.mxu0 0.0
        %1616 = vmatpush2.msra.mxu0 0.0
        %1617 = vmatprep.subr.mxu0 0.0
        %1618 = vmatpush2.msra.mxu0 0.0
        %1619 = vmatprep.subr.mxu0 0.0
        %1620 = vmatpush2.msra.mxu0 0.0
        %1621 = vmatprep.mubr.f32.mxu0 0.0
        %1622 = vmatmul.mubr.f32.gmra.mxu0 %v1510
        %v1623 = vpop.f32.mrf.mxu0
        %v1624 = vadd.f32 0.0, %v1623
        %v1625 = vpop.f32.mrf.mxu0
        %1626 = vmatprep.mubr.f32.mxu0 0.0
        %1627 = vmatmul.mubr.f32.gmra.mxu0 %v1513
        %v1628 = vpop.f32.mrf.mxu0
        %v1629 = vadd.f32 0.0, %v1628
        %v1630 = vpop.f32.mrf.mxu0
        %1631 = vmatprep.mubr.f32.mxu0 0.0
        %1632 = vmatmul.mubr.f32.gmra.mxu0 %v1516
        %v1633 = vpop.f32.mrf.mxu0
        %v1634 = vadd.f32 0.0, %v1633
        %v1635 = vpop.f32.mrf.mxu0
        %1636 = vmatprep.mubr.f32.mxu0 0.0
        %1637 = vmatmul.mubr.f32.gmra.mxu0 %v1519
        %v1638 = vpop.f32.mrf.mxu0
        %v1639 = vadd.f32 0.0, %v1638
        %v1640 = vpop.f32.mrf.mxu0
        %1641 = vmatprep.mubr.f32.mxu0 0.0
        %1642 = vmatmul.mubr.f32.gmra.mxu0 %v1522
        %v1643 = vpop.f32.mrf.mxu0
        %v1644 = vadd.f32 0.0, %v1643
        %v1645 = vpop.f32.mrf.mxu0
        %1646 = vmatprep.mubr.f32.mxu0 0.0
        %1647 = vmatmul.mubr.f32.gmra.mxu0 %v1525
        %v1648 = vpop.f32.mrf.mxu0
        %v1649 = vadd.f32 0.0, %v1648
        %v1650 = vpop.f32.mrf.mxu0
        %1651 = vmatprep.mubr.f32.mxu0 0.0
        %1652 = vmatmul.mubr.f32.gmra.mxu0 %v1528
        %v1653 = vpop.f32.mrf.mxu0
        %v1654 = vadd.f32 0.0, %v1653
        %v1655 = vpop.f32.mrf.mxu0
        %1656 = vmatprep.mubr.f32.mxu0 0.0
        %1657 = vmatmul.mubr.f32.gmra.mxu0 %v1531
        %v1658 = vpop.f32.mrf.mxu0
        %v1659 = vadd.f32 0.0, %v1658
        %v1660 = vpop.f32.mrf.mxu0
        %1661 = vmatprep.mubr.f32.mxu0 0.0
        %1662 = vmatmul.mubr.f32.gmra.mxu0 %v1534
        %v1663 = vpop.f32.mrf.mxu0
        %v1664 = vadd.f32 0.0, %v1663
        %v1665 = vpop.f32.mrf.mxu0
        %1666 = vmatprep.mubr.f32.mxu0 0.0
        %1667 = vmatmul.mubr.f32.gmra.mxu0 %v1537
        %v1668 = vpop.f32.mrf.mxu0
        %v1669 = vadd.f32 0.0, %v1668
        %v1670 = vpop.f32.mrf.mxu0
        %1671 = vmatprep.mubr.f32.mxu0 0.0
        %1672 = vmatmul.mubr.f32.gmra.mxu0 %v1540
        %v1673 = vpop.f32.mrf.mxu0
        %v1674 = vadd.f32 0.0, %v1673
        %v1675 = vpop.f32.mrf.mxu0
        %1676 = vmatprep.mubr.f32.mxu0 0.0
        %1677 = vmatmul.mubr.f32.gmra.mxu0 %v1543
        %v1678 = vpop.f32.mrf.mxu0
        %v1679 = vadd.f32 0.0, %v1678
        %v1680 = vpop.f32.mrf.mxu0
        %1681 = vmatprep.mubr.f32.mxu0 0.0
        %1682 = vmatmul.mubr.f32.gmra.mxu0 %v1546
        %v1683 = vpop.f32.mrf.mxu0
        %v1684 = vadd.f32 0.0, %v1683
        %v1685 = vpop.f32.mrf.mxu0
        %1686 = vmatprep.mubr.f32.mxu0 0.0
        %1687 = vmatmul.mubr.f32.gmra.mxu0 %v1549
        %v1688 = vpop.f32.mrf.mxu0
        %v1689 = vadd.f32 0.0, %v1688
        %v1690 = vpop.f32.mrf.mxu0
        %1691 = vmatprep.mubr.f32.mxu0 0.0
        %1692 = vmatmul.mubr.f32.gmra.mxu0 %v1552
        %v1693 = vpop.f32.mrf.mxu0
        %v1694 = vadd.f32 0.0, %v1693
        %v1695 = vpop.f32.mrf.mxu0
        %1696 = vmatprep.mubr.f32.mxu0 0.0
        %1697 = vmatmul.mubr.f32.gmra.mxu0 %v1555
        %v1698 = vpop.f32.mrf.mxu0
        %v1699 = vadd.f32 0.0, %v1698
        %v1700 = vpop.f32.mrf.mxu0
        %1701 = vdwg.mxu0
        %v1702 = vld [vmem:[#allocation5] sm:$0xf]
        %v1703 = vld [vmem:[#allocation5 + $0x4] sm:$0xf]
        %v1704 = vld [vmem:[#allocation5 + $0x8] sm:$0xf]
        %v1705 = vld [vmem:[#allocation5 + $0xc] sm:$0xf]
        %v1706 = vld [vmem:[#allocation5 + $0x10] sm:$0xf]
        %v1707 = vld [vmem:[#allocation5 + $0x14] sm:$0xf]
        %v1708 = vld [vmem:[#allocation5 + $0x18] sm:$0xf]
        %v1709 = vld [vmem:[#allocation5 + $0x1c] sm:$0xf]
        %v1710 = vmul.f32 %v1624, %v1624
        %v1711 = vmul.f32 %v1629, %v1629
        %v1712 = vmul.f32 %v1634, %v1634
        %v1713 = vmul.f32 %v1639, %v1639
        %v1714 = vmul.f32 %v1644, %v1644
        %v1715 = vmul.f32 %v1649, %v1649
        %v1716 = vmul.f32 %v1654, %v1654
        %v1717 = vmul.f32 %v1659, %v1659
        %v1718 = vmul.f32 %v1664, %v1664
        %v1719 = vmul.f32 %v1669, %v1669
        %v1720 = vmul.f32 %v1674, %v1674
        %v1721 = vmul.f32 %v1679, %v1679
        %v1722 = vmul.f32 %v1684, %v1684
        %v1723 = vmul.f32 %v1689, %v1689
        %v1724 = vmul.f32 %v1694, %v1694
        %v1725 = vmul.f32 %v1699, %v1699
        %vm1726 = vcmask 23552
        %v1727 = vsel %vm1726, %v1710, 0.0
        %1728 = vadd.xlane.f32.xlu0 %v1727
        %v1729 = vpop.xlane.xlu0 %1728
        %v1730 = vsel %vm1726, %v1711, 0.0
        %1731 = vadd.xlane.f32.xlu0 %v1730
        %v1732 = vpop.xlane.xlu0 %1731
        %v1733 = vsel %vm1726, %v1712, 0.0
        %1734 = vadd.xlane.f32.xlu0 %v1733
        %v1735 = vpop.xlane.xlu0 %1734
        %v1736 = vsel %vm1726, %v1713, 0.0
        %1737 = vadd.xlane.f32.xlu0 %v1736
        %v1738 = vpop.xlane.xlu0 %1737
        %v1739 = vsel %vm1726, %v1714, 0.0
        %1740 = vadd.xlane.f32.xlu0 %v1739
        %v1741 = vpop.xlane.xlu0 %1740
        %v1742 = vsel %vm1726, %v1715, 0.0
        %1743 = vadd.xlane.f32.xlu0 %v1742
        %v1744 = vpop.xlane.xlu0 %1743
        %v1745 = vsel %vm1726, %v1716, 0.0
        %1746 = vadd.xlane.f32.xlu0 %v1745
        %v1747 = vpop.xlane.xlu0 %1746
        %v1748 = vsel %vm1726, %v1717, 0.0
        %1749 = vadd.xlane.f32.xlu0 %v1748
        %v1750 = vpop.xlane.xlu0 %1749
        %v1751 = vsel %vm1726, %v1718, 0.0
        %1752 = vadd.xlane.f32.xlu0 %v1751
        %v1753 = vpop.xlane.xlu0 %1752
        %v1754 = vsel %vm1726, %v1719, 0.0
        %1755 = vadd.xlane.f32.xlu0 %v1754
        %v1756 = vpop.xlane.xlu0 %1755
        %v1757 = vsel %vm1726, %v1720, 0.0
        %1758 = vadd.xlane.f32.xlu0 %v1757
        %v1759 = vpop.xlane.xlu0 %1758
        %v1760 = vsel %vm1726, %v1721, 0.0
        %1761 = vadd.xlane.f32.xlu0 %v1760
        %v1762 = vpop.xlane.xlu0 %1761
        %v1763 = vsel %vm1726, %v1722, 0.0
        %1764 = vadd.xlane.f32.xlu0 %v1763
        %v1765 = vpop.xlane.xlu0 %1764
        %v1766 = vsel %vm1726, %v1723, 0.0
        %1767 = vadd.xlane.f32.xlu0 %v1766
        %v1768 = vpop.xlane.xlu0 %1767
        %v1769 = vsel %vm1726, %v1724, 0.0
        %1770 = vadd.xlane.f32.xlu0 %v1769
        %v1771 = vpop.xlane.xlu0 %1770
        %v1772 = vsel %vm1726, %v1725, 0.0
        %1773 = vadd.xlane.f32.xlu0 %v1772
        %v1774 = vpop.xlane.xlu0 %1773
        %v1775 = vld [vmem:[%s993] sm:$0xf]
        %v1776 = vld [vmem:[%s993 + $0x4] sm:$0xf]
        %v1777 = vld [vmem:[%s993 + $0x8] sm:$0xf]
        %v1778 = vld [vmem:[%s993 + $0xc] sm:$0xf]
        %v1779 = vld [vmem:[%s993 + $0x10] sm:$0xf]
        %v1780 = vld [vmem:[%s993 + $0x14] sm:$0xf]
        %v1781 = vld [vmem:[%s993 + $0x18] sm:$0xf]
        %v1782 = vld [vmem:[%s993 + $0x1c] sm:$0xf]
        %v1783 = vld [vmem:[%s993 + $0x20] sm:$0xf]
        %v1784 = vld [vmem:[%s993 + $0x24] sm:$0xf]
        %v1785 = vld [vmem:[%s993 + $0x28] sm:$0xf]
        %v1786 = vld [vmem:[%s993 + $0x2c] sm:$0xf]
        %v1787 = vld [vmem:[%s993 + $0x30] sm:$0xf]
        %v1788 = vld [vmem:[%s993 + $0x34] sm:$0xf]
        %v1789 = vld [vmem:[%s993 + $0x38] sm:$0xf]
        %v1790 = vld [vmem:[%s993 + $0x3c] sm:$0xf]
        %v1791 = vld [vmem:[%s1007] sm:$0xf]
        %v1792 = vld [vmem:[%s1007 + $0x4] sm:$0xf]
        %v1809 = vunpack.c.l.b16 %v1775
        %v1810 = vunpack.c.l.b16 %v1776
        %v1811 = vunpack.c.l.b16 %v1777
        %v1812 = vunpack.c.l.b16 %v1778
        %v1813 = vunpack.c.l.b16 %v1779
        %v1814 = vunpack.c.l.b16 %v1780
        %v1815 = vunpack.c.l.b16 %v1781
        %v1816 = vunpack.c.l.b16 %v1782
        %v1817 = vunpack.c.l.b16 %v1783
        %v1818 = vunpack.c.l.b16 %v1784
        %v1819 = vunpack.c.l.b16 %v1785
        %v1820 = vunpack.c.l.b16 %v1786
        %v1821 = vunpack.c.l.b16 %v1787
        %v1822 = vunpack.c.l.b16 %v1788
        %v1823 = vunpack.c.l.b16 %v1789
        %v1824 = vunpack.c.l.b16 %v1790
        %v1825 = vpack.c.b16 %v1810, %v1809
        %v1826 = vpack.c.b16 %v1812, %v1811
        %v1827 = vpack.c.b16 %v1814, %v1813
        %v1828 = vpack.c.b16 %v1816, %v1815
        %v1829 = vpack.c.b16 %v1818, %v1817
        %v1830 = vpack.c.b16 %v1820, %v1819
        %v1831 = vpack.c.b16 %v1822, %v1821
        %v1832 = vpack.c.b16 %v1824, %v1823
        %v1835 = vunpack.c.l.b16 %v1791
        %v1836 = vunpack.c.l.b16 %v1792
        %v1837 = vpack.c.b16 %v1836, %v1835
        %vm1839 = vcmask 130048
        %v1841 = vsel %vm1839, %v1825, 0
        %v1844 = vsel %vm1839, %v1826, 0
        %v1847 = vsel %vm1839, %v1827, 0
        %v1850 = vsel %vm1839, %v1828, 0
        %v1853 = vsel %vm1839, %v1829, 0
        %v1856 = vsel %vm1839, %v1830, 0
        %v1859 = vsel %vm1839, %v1831, 0
        %v1862 = vsel %vm1839, %v1832, 0
        %1864 = vmatprep.subr.bf16.mxu0 0
        %1865 = vmatpush1.bf16.msra.mxu0 0
        %1866 = vmatprep.subr.bf16.mxu0 0
        %1867 = vmatpush1.bf16.msra.mxu0 0
        %1868 = vmatprep.subr.bf16.mxu0 0
        %1869 = vmatpush1.bf16.msra.mxu0 0
        %1870 = vmatprep.subr.bf16.mxu0 0
        %1871 = vmatpush1.bf16.msra.mxu0 0
        %1872 = vmatprep.subr.bf16.mxu0 0
        %1873 = vmatpush1.bf16.msra.mxu0 0
        %1874 = vmatprep.subr.bf16.mxu0 0
        %1875 = vmatpush1.bf16.msra.mxu0 0
        %1876 = vmatprep.subr.bf16.mxu0 0
        %1877 = vmatpush1.bf16.msra.mxu0 0
        %1878 = vmatprep.subr.bf16.mxu0 0
        %1879 = vmatpush1.bf16.msra.mxu0 %v1837
        %1880 = vmatprep.subr.bf16.mxu0 0
        %1881 = vmatpush2.bf16.msra.mxu0 0
        %1882 = vmatprep.subr.bf16.mxu0 0
        %1883 = vmatpush2.bf16.msra.mxu0 0
        %1884 = vmatprep.subr.bf16.mxu0 0
        %1885 = vmatpush2.bf16.msra.mxu0 0
        %1886 = vmatprep.subr.bf16.mxu0 0
        %1887 = vmatpush2.bf16.msra.mxu0 0
        %1888 = vmatprep.subr.bf16.mxu0 0
        %1889 = vmatpush2.bf16.msra.mxu0 0
        %1890 = vmatprep.subr.bf16.mxu0 0
        %1891 = vmatpush2.bf16.msra.mxu0 0
        %1892 = vmatprep.subr.bf16.mxu0 0
        %1893 = vmatpush2.bf16.msra.mxu0 0
        %1894 = vmatprep.subr.bf16.mxu0 0
        %1895 = vmatpush2.bf16.msra.mxu0 0
        %1896 = vmatprep.mubr.bf16.mxu0 0
        %1897 = vmatmul.mubr.bf16.gmra.mxu0 %v1841
        %v1898 = vpop.f32.mrf.mxu0
        %v1899 = vadd.f32 0.0, %v1898
        %v1900 = vpop.f32.mrf.mxu0
        %v1901 = vpop.f32.mrf.mxu0
        %v1902 = vadd.f32 0.0, %v1901
        %v1903 = vpop.f32.mrf.mxu0
        %1904 = vmatprep.mubr.bf16.mxu0 0
        %1905 = vmatmul.mubr.bf16.gmra.mxu0 %v1844
        %v1906 = vpop.f32.mrf.mxu0
        %v1907 = vadd.f32 0.0, %v1906
        %v1908 = vpop.f32.mrf.mxu0
        %v1909 = vpop.f32.mrf.mxu0
        %v1910 = vadd.f32 0.0, %v1909
        %v1911 = vpop.f32.mrf.mxu0
        %1912 = vmatprep.mubr.bf16.mxu0 0
        %1913 = vmatmul.mubr.bf16.gmra.mxu0 %v1847
        %v1914 = vpop.f32.mrf.mxu0
        %v1915 = vadd.f32 0.0, %v1914
        %v1916 = vpop.f32.mrf.mxu0
        %v1917 = vpop.f32.mrf.mxu0
        %v1918 = vadd.f32 0.0, %v1917
        %v1919 = vpop.f32.mrf.mxu0
        %1920 = vmatprep.mubr.bf16.mxu0 0
        %1921 = vmatmul.mubr.bf16.gmra.mxu0 %v1850
        %v1922 = vpop.f32.mrf.mxu0
        %v1923 = vadd.f32 0.0, %v1922
        %v1924 = vpop.f32.mrf.mxu0
        %v1925 = vpop.f32.mrf.mxu0
        %v1926 = vadd.f32 0.0, %v1925
        %v1927 = vpop.f32.mrf.mxu0
        %1928 = vmatprep.mubr.bf16.mxu0 0
        %1929 = vmatmul.mubr.bf16.gmra.mxu0 %v1853
        %v1930 = vpop.f32.mrf.mxu0
        %v1931 = vadd.f32 0.0, %v1930
        %v1932 = vpop.f32.mrf.mxu0
        %v1933 = vpop.f32.mrf.mxu0
        %v1934 = vadd.f32 0.0, %v1933
        %v1935 = vpop.f32.mrf.mxu0
        %1936 = vmatprep.mubr.bf16.mxu0 0
        %1937 = vmatmul.mubr.bf16.gmra.mxu0 %v1856
        %v1938 = vpop.f32.mrf.mxu0
        %v1939 = vadd.f32 0.0, %v1938
        %v1940 = vpop.f32.mrf.mxu0
        %v1941 = vpop.f32.mrf.mxu0
        %v1942 = vadd.f32 0.0, %v1941
        %v1943 = vpop.f32.mrf.mxu0
        %1944 = vmatprep.mubr.bf16.mxu0 0
        %1945 = vmatmul.mubr.bf16.gmra.mxu0 %v1859
        %v1946 = vpop.f32.mrf.mxu0
        %v1947 = vadd.f32 0.0, %v1946
        %v1948 = vpop.f32.mrf.mxu0
        %v1949 = vpop.f32.mrf.mxu0
        %v1950 = vadd.f32 0.0, %v1949
        %v1951 = vpop.f32.mrf.mxu0
        %1952 = vmatprep.mubr.bf16.mxu0 0
        %1953 = vmatmul.mubr.bf16.gmra.mxu0 %v1862
        %v1954 = vpop.f32.mrf.mxu0
        %v1955 = vadd.f32 0.0, %v1954
        %v1956 = vpop.f32.mrf.mxu0
        %v1957 = vpop.f32.mrf.mxu0
        %v1958 = vadd.f32 0.0, %v1957
        %v1959 = vpop.f32.mrf.mxu0
        %1960 = vdwg.mxu0
        %v1961 = vld [vmem:[%s1002] sm:$0x1]
        %v1963 = vlaneseq
        %v1964 = vshrl.u32 %v1963, 7
        %v1965 = vsub.s32 0, %v1964
        %v1966 = vrot.slane %v1961, %v1965
        %v1968 = vmul.f32 %v1729, %v1966
        %v1969 = vmul.f32 %v1732, %v1966
        %v1970 = vmul.f32 %v1735, %v1966
        %v1971 = vmul.f32 %v1738, %v1966
        %v1972 = vmul.f32 %v1741, %v1966
        %v1973 = vmul.f32 %v1744, %v1966
        %v1974 = vmul.f32 %v1747, %v1966
        %v1975 = vmul.f32 %v1750, %v1966
        %v1976 = vmul.f32 %v1753, %v1966
        %v1977 = vmul.f32 %v1756, %v1966
        %v1978 = vmul.f32 %v1759, %v1966
        %v1979 = vmul.f32 %v1762, %v1966
        %v1980 = vmul.f32 %v1765, %v1966
        %v1981 = vmul.f32 %v1768, %v1966
        %v1982 = vmul.f32 %v1771, %v1966
        %v1983 = vmul.f32 %v1774, %v1966
        %v1992 = vunpack.c.l.b16 %v1702
        %v1993 = vunpack.c.l.b16 %v1703
        %v1994 = vunpack.c.l.b16 %v1704
        %v1995 = vunpack.c.l.b16 %v1705
        %v1996 = vunpack.c.l.b16 %v1706
        %v1997 = vunpack.c.l.b16 %v1707
        %v1998 = vunpack.c.l.b16 %v1708
        %v1999 = vunpack.c.l.b16 %v1709
        %v2000 = vpack.c.b16 %v1993, %v1992
        %v2001 = vpack.c.b16 %v1995, %v1994
        %v2002 = vpack.c.b16 %v1997, %v1996
        %v2003 = vpack.c.b16 %v1999, %v1998
        %v2009 = vsel %vm1508, %v1492, 0
        %v2012 = vsel %vm1508, %v1493, 0
        %v2015 = vsel %vm1508, %v1494, 0
        %v2018 = vsel %vm1508, %v1495, 0
        %v2021 = vsel %vm1508, %v1496, 0
        %v2024 = vsel %vm1508, %v1497, 0
        %v2027 = vsel %vm1508, %v1498, 0
        %v2030 = vsel %vm1508, %v1499, 0
        %2032 = vmatprep.subr.bf16.mxu0 0
        %2033 = vmatpush1.bf16.msra.mxu0 0
        %2034 = vmatprep.subr.bf16.mxu0 0
        %2035 = vmatpush1.bf16.msra.mxu0 0
        %2036 = vmatprep.subr.bf16.mxu0 0
        %2037 = vmatpush1.bf16.msra.mxu0 0
        %2038 = vmatprep.subr.bf16.mxu0 0
        %2039 = vmatpush1.bf16.msra.mxu0 0
        %2040 = vmatprep.subr.bf16.mxu0 0
        %2041 = vmatpush1.bf16.msra.mxu0 %v2003
        %2042 = vmatprep.subr.bf16.mxu0 0
        %2043 = vmatpush1.bf16.msra.mxu0 %v2002
        %2044 = vmatprep.subr.bf16.mxu0 0
        %2045 = vmatpush1.bf16.msra.mxu0 %v2001
        %2046 = vmatprep.subr.bf16.mxu0 0
        %2047 = vmatpush1.bf16.msra.mxu0 %v2000
        %2048 = vmatprep.subr.bf16.mxu0 0
        %2049 = vmatpush2.bf16.msra.mxu0 0
        %2050 = vmatprep.subr.bf16.mxu0 0
        %2051 = vmatpush2.bf16.msra.mxu0 0
        %2052 = vmatprep.subr.bf16.mxu0 0
        %2053 = vmatpush2.bf16.msra.mxu0 0
        %2054 = vmatprep.subr.bf16.mxu0 0
        %2055 = vmatpush2.bf16.msra.mxu0 0
        %2056 = vmatprep.subr.bf16.mxu0 0
        %2057 = vmatpush2.bf16.msra.mxu0 0
        %2058 = vmatprep.subr.bf16.mxu0 0
        %2059 = vmatpush2.bf16.msra.mxu0 0
        %2060 = vmatprep.subr.bf16.mxu0 0
        %2061 = vmatpush2.bf16.msra.mxu0 0
        %2062 = vmatprep.subr.bf16.mxu0 0
        %2063 = vmatpush2.bf16.msra.mxu0 0
        %2064 = vmatprep.mubr.bf16.mxu0 0
        %2065 = vmatmul.mubr.bf16.gmra.mxu0 %v2009
        %v2066 = vpop.f32.mrf.mxu0
        %v2067 = vadd.f32 %v1968, %v2066
        %v2068 = vpop.f32.mrf.mxu0
        %v2069 = vpop.f32.mrf.mxu0
        %v2070 = vadd.f32 %v1969, %v2069
        %v2071 = vpop.f32.mrf.mxu0
        %2072 = vmatprep.mubr.bf16.mxu0 0
        %2073 = vmatmul.mubr.bf16.gmra.mxu0 %v2012
        %v2074 = vpop.f32.mrf.mxu0
        %v2075 = vadd.f32 %v1970, %v2074
        %v2076 = vpop.f32.mrf.mxu0
        %v2077 = vpop.f32.mrf.mxu0
        %v2078 = vadd.f32 %v1971, %v2077
        %v2079 = vpop.f32.mrf.mxu0
        %2080 = vmatprep.mubr.bf16.mxu0 0
        %2081 = vmatmul.mubr.bf16.gmra.mxu0 %v2015
        %v2082 = vpop.f32.mrf.mxu0
        %v2083 = vadd.f32 %v1972, %v2082
        %v2084 = vpop.f32.mrf.mxu0
        %v2085 = vpop.f32.mrf.mxu0
        %v2086 = vadd.f32 %v1973, %v2085
        %v2087 = vpop.f32.mrf.mxu0
        %2088 = vmatprep.mubr.bf16.mxu0 0
        %2089 = vmatmul.mubr.bf16.gmra.mxu0 %v2018
        %v2090 = vpop.f32.mrf.mxu0
        %v2091 = vadd.f32 %v1974, %v2090
        %v2092 = vpop.f32.mrf.mxu0
        %v2093 = vpop.f32.mrf.mxu0
        %v2094 = vadd.f32 %v1975, %v2093
        %v2095 = vpop.f32.mrf.mxu0
        %2096 = vmatprep.mubr.bf16.mxu0 0
        %2097 = vmatmul.mubr.bf16.gmra.mxu0 %v2021
        %v2098 = vpop.f32.mrf.mxu0
        %v2099 = vadd.f32 %v1976, %v2098
        %v2100 = vpop.f32.mrf.mxu0
        %v2101 = vpop.f32.mrf.mxu0
        %v2102 = vadd.f32 %v1977, %v2101
        %v2103 = vpop.f32.mrf.mxu0
        %2104 = vmatprep.mubr.bf16.mxu0 0
        %2105 = vmatmul.mubr.bf16.gmra.mxu0 %v2024
        %v2106 = vpop.f32.mrf.mxu0
        %v2107 = vadd.f32 %v1978, %v2106
        %v2108 = vpop.f32.mrf.mxu0
        %v2109 = vpop.f32.mrf.mxu0
        %v2110 = vadd.f32 %v1979, %v2109
        %v2111 = vpop.f32.mrf.mxu0
        %2112 = vmatprep.mubr.bf16.mxu0 0
        %2113 = vmatmul.mubr.bf16.gmra.mxu0 %v2027
        %v2114 = vpop.f32.mrf.mxu0
        %v2115 = vadd.f32 %v1980, %v2114
        %v2116 = vpop.f32.mrf.mxu0
        %v2117 = vpop.f32.mrf.mxu0
        %v2118 = vadd.f32 %v1981, %v2117
        %v2119 = vpop.f32.mrf.mxu0
        %2120 = vmatprep.mubr.bf16.mxu0 0
        %2121 = vmatmul.mubr.bf16.gmra.mxu0 %v2030
        %v2122 = vpop.f32.mrf.mxu0
        %v2123 = vadd.f32 %v1982, %v2122
        %v2124 = vpop.f32.mrf.mxu0
        %v2125 = vpop.f32.mrf.mxu0
        %v2126 = vadd.f32 %v1983, %v2125
        %v2127 = vpop.f32.mrf.mxu0
        %2128 = vdwg.mxu0
        %v2129 = vadd.f32 %v2067, %v1899
        %v2130 = vadd.f32 %v2070, %v1902
        %v2131 = vadd.f32 %v2075, %v1907
        %v2132 = vadd.f32 %v2078, %v1910
        %v2133 = vadd.f32 %v2083, %v1915
        %v2134 = vadd.f32 %v2086, %v1918
        %v2135 = vadd.f32 %v2091, %v1923
        %v2136 = vadd.f32 %v2094, %v1926
        %v2137 = vadd.f32 %v2099, %v1931
        %v2138 = vadd.f32 %v2102, %v1934
        %v2139 = vadd.f32 %v2107, %v1939
        %v2140 = vadd.f32 %v2110, %v1942
        %v2141 = vadd.f32 %v2115, %v1947
        %v2142 = vadd.f32 %v2118, %v1950
        %v2143 = vadd.f32 %v2123, %v1955
        %v2144 = vadd.f32 %v2126, %v1958
        %v2145 = vld [vmem:[%s1010] sm:$0x1]
        %v2147 = vlaneseq
        %v2148 = vshrl.u32 %v2147, 7
        %v2149 = vsub.s32 0, %v2148
        %v2150 = vrot.slane %v2145, %v2149
        %v2152 = vadd.f32 %v2129, %v2150
        %v2153 = vadd.f32 %v2130, %v2150
        %v2154 = vadd.f32 %v2131, %v2150
        %v2155 = vadd.f32 %v2132, %v2150
        %v2156 = vadd.f32 %v2133, %v2150
        %v2157 = vadd.f32 %v2134, %v2150
        %v2158 = vadd.f32 %v2135, %v2150
        %v2159 = vadd.f32 %v2136, %v2150
        %v2160 = vadd.f32 %v2137, %v2150
        %v2161 = vadd.f32 %v2138, %v2150
        %v2162 = vadd.f32 %v2139, %v2150
        %v2163 = vadd.f32 %v2140, %v2150
        %v2164 = vadd.f32 %v2141, %v2150
        %v2165 = vadd.f32 %v2142, %v2150
        %v2166 = vadd.f32 %v2143, %v2150
        %v2167 = vadd.f32 %v2144, %v2150
        %v2168 = vxor.u32 %v2152, 2147483648
        %v2169 = vxor.u32 %v2153, 2147483648
        %v2170 = vxor.u32 %v2154, 2147483648
        %v2171 = vxor.u32 %v2155, 2147483648
        %v2172 = vxor.u32 %v2156, 2147483648
        %v2173 = vxor.u32 %v2157, 2147483648
        %v2174 = vxor.u32 %v2158, 2147483648
        %v2175 = vxor.u32 %v2159, 2147483648
        %v2176 = vxor.u32 %v2160, 2147483648
        %v2177 = vxor.u32 %v2161, 2147483648
        %v2178 = vxor.u32 %v2162, 2147483648
        %v2179 = vxor.u32 %v2163, 2147483648
        %v2180 = vxor.u32 %v2164, 2147483648
        %v2181 = vxor.u32 %v2165, 2147483648
        %v2182 = vxor.u32 %v2166, 2147483648
        %v2183 = vxor.u32 %v2167, 2147483648
        %v2184 = vmul.f32 %v2168, 1.442695
        %v2185 = vpow.pop %v2184
        %v2186 = vmul.f32 %v2169, 1.442695
        %v2187 = vpow.pop %v2186
        %v2188 = vmul.f32 %v2170, 1.442695
        %v2189 = vpow.pop %v2188
        %v2190 = vmul.f32 %v2171, 1.442695
        %v2191 = vpow.pop %v2190
        %v2192 = vmul.f32 %v2172, 1.442695
        %v2193 = vpow.pop %v2192
        %v2194 = vmul.f32 %v2173, 1.442695
        %v2195 = vpow.pop %v2194
        %v2196 = vmul.f32 %v2174, 1.442695
        %v2197 = vpow.pop %v2196
        %v2198 = vmul.f32 %v2175, 1.442695
        %v2199 = vpow.pop %v2198
        %v2200 = vmul.f32 %v2176, 1.442695
        %v2201 = vpow.pop %v2200
        %v2202 = vmul.f32 %v2177, 1.442695
        %v2203 = vpow.pop %v2202
        %v2204 = vmul.f32 %v2178, 1.442695
        %v2205 = vpow.pop %v2204
        %v2206 = vmul.f32 %v2179, 1.442695
        %v2207 = vpow.pop %v2206
        %v2208 = vmul.f32 %v2180, 1.442695
        %v2209 = vpow.pop %v2208
        %v2210 = vmul.f32 %v2181, 1.442695
        %v2211 = vpow.pop %v2210
        %v2212 = vmul.f32 %v2182, 1.442695
        %v2213 = vpow.pop %v2212
        %v2214 = vmul.f32 %v2183, 1.442695
        %v2215 = vpow.pop %v2214
        %v2216 = vadd.f32 %v2185, 1.0
        %v2217 = vadd.f32 %v2187, 1.0
        %v2218 = vadd.f32 %v2189, 1.0
        %v2219 = vadd.f32 %v2191, 1.0
        %v2220 = vadd.f32 %v2193, 1.0
        %v2221 = vadd.f32 %v2195, 1.0
        %v2222 = vadd.f32 %v2197, 1.0
        %v2223 = vadd.f32 %v2199, 1.0
        %v2224 = vadd.f32 %v2201, 1.0
        %v2225 = vadd.f32 %v2203, 1.0
        %v2226 = vadd.f32 %v2205, 1.0
        %v2227 = vadd.f32 %v2207, 1.0
        %v2228 = vadd.f32 %v2209, 1.0
        %v2229 = vadd.f32 %v2211, 1.0
        %v2230 = vadd.f32 %v2213, 1.0
        %v2231 = vadd.f32 %v2215, 1.0
        %v2232 = vrcp.pop %v2216
        %v2233 = vmul.f32 1.0, %v2232
        %v2234 = vrcp.pop %v2217
        %v2235 = vmul.f32 1.0, %v2234
        %v2236 = vrcp.pop %v2218
        %v2237 = vmul.f32 1.0, %v2236
        %v2238 = vrcp.pop %v2219
        %v2239 = vmul.f32 1.0, %v2238
        %v2240 = vrcp.pop %v2220
        %v2241 = vmul.f32 1.0, %v2240
        %v2242 = vrcp.pop %v2221
        %v2243 = vmul.f32 1.0, %v2242
        %v2244 = vrcp.pop %v2222
        %v2245 = vmul.f32 1.0, %v2244
        %v2246 = vrcp.pop %v2223
        %v2247 = vmul.f32 1.0, %v2246
        %v2248 = vrcp.pop %v2224
        %v2249 = vmul.f32 1.0, %v2248
        %v2250 = vrcp.pop %v2225
        %v2251 = vmul.f32 1.0, %v2250
        %v2252 = vrcp.pop %v2226
        %v2253 = vmul.f32 1.0, %v2252
        %v2254 = vrcp.pop %v2227
        %v2255 = vmul.f32 1.0, %v2254
        %v2256 = vrcp.pop %v2228
        %v2257 = vmul.f32 1.0, %v2256
        %v2258 = vrcp.pop %v2229
        %v2259 = vmul.f32 1.0, %v2258
        %v2260 = vrcp.pop %v2230
        %v2261 = vmul.f32 1.0, %v2260
        %v2262 = vrcp.pop %v2231
        %v2263 = vmul.f32 1.0, %v2262
        %v2264 = vmul.f32 %v2152, %v2233
        %v2265 = vmul.f32 %v2153, %v2235
        %v2266 = vmul.f32 %v2154, %v2237
        %v2267 = vmul.f32 %v2155, %v2239
        %v2268 = vmul.f32 %v2156, %v2241
        %v2269 = vmul.f32 %v2157, %v2243
        %v2270 = vmul.f32 %v2158, %v2245
        %v2271 = vmul.f32 %v2159, %v2247
        %v2272 = vmul.f32 %v2160, %v2249
        %v2273 = vmul.f32 %v2161, %v2251
        %v2274 = vmul.f32 %v2162, %v2253
        %v2275 = vmul.f32 %v2163, %v2255
        %v2276 = vmul.f32 %v2164, %v2257
        %v2277 = vmul.f32 %v2165, %v2259
        %v2278 = vmul.f32 %v2166, %v2261
        %v2279 = vmul.f32 %v2167, %v2263
        %v2280 = vpack.c.bf16 %v2265, %v2264
        %v2281 = vpack.c.bf16 %v2267, %v2266
        %v2282 = vpack.c.bf16 %v2269, %v2268
        %v2283 = vpack.c.bf16 %v2271, %v2270
        %v2284 = vpack.c.bf16 %v2273, %v2272
        %v2285 = vpack.c.bf16 %v2275, %v2274
        %v2286 = vpack.c.bf16 %v2277, %v2276
        %v2287 = vpack.c.bf16 %v2279, %v2278
        %v2288 = vld [vmem:[%s1015] sm:$0xf]
        %v2289 = vld [vmem:[%s1015 + $0x4] sm:$0xf]
        %v2290 = vld [vmem:[%s1015 + $0x8] sm:$0xf]
        %v2291 = vld [vmem:[%s1015 + $0xc] sm:$0xf]
        %v2292 = vld [vmem:[%s1018] sm:$0x1]
        %v2294 = vlaneseq
        %v2295 = vshrl.u32 %v2294, 7
        %v2296 = vsub.s32 0, %v2295
        %v2297 = vrot.slane %v2292, %v2296
        %v2303 = vunpack.c.l.b16 %v2288
        %v2304 = vunpack.c.l.b16 %v2289
        %v2305 = vunpack.c.l.b16 %v2290
        %v2306 = vunpack.c.l.b16 %v2291
        %v2307 = vpack.c.b16 %v2304, %v2303
        %v2308 = vpack.c.b16 %v2306, %v2305
        %vm2311 = vcmask 261120
        %v2313 = vsel %vm2311, %v2280, 0
        %v2316 = vsel %vm2311, %v2281, 0
        %v2319 = vsel %vm2311, %v2282, 0
        %v2322 = vsel %vm2311, %v2283, 0
        %v2325 = vsel %vm2311, %v2284, 0
        %v2328 = vsel %vm2311, %v2285, 0
        %v2331 = vsel %vm2311, %v2286, 0
        %v2334 = vsel %vm2311, %v2287, 0
        %2336 = vmatprep.subr.bf16.mxu0 0
        %2337 = vmatpush1.bf16.msra.mxu0 0
        %2338 = vmatprep.subr.bf16.mxu0 0
        %2339 = vmatpush1.bf16.msra.mxu0 0
        %2340 = vmatprep.subr.bf16.mxu0 0
        %2341 = vmatpush1.bf16.msra.mxu0 0
        %2342 = vmatprep.subr.bf16.mxu0 0
        %2343 = vmatpush1.bf16.msra.mxu0 0
        %2344 = vmatprep.subr.bf16.mxu0 0
        %2345 = vmatpush1.bf16.msra.mxu0 0
        %2346 = vmatprep.subr.bf16.mxu0 0
        %2347 = vmatpush1.bf16.msra.mxu0 0
        %2348 = vmatprep.subr.bf16.mxu0 0
        %2349 = vmatpush1.bf16.msra.mxu0 %v2308
        %2350 = vmatprep.subr.bf16.mxu0 0
        %2351 = vmatpush1.bf16.msra.mxu0 %v2307
        %2352 = vmatprep.subr.bf16.mxu0 0
        %2353 = vmatpush2.bf16.msra.mxu0 0
        %2354 = vmatprep.subr.bf16.mxu0 0
        %2355 = vmatpush2.bf16.msra.mxu0 0
        %2356 = vmatprep.subr.bf16.mxu0 0
        %2357 = vmatpush2.bf16.msra.mxu0 0
        %2358 = vmatprep.subr.bf16.mxu0 0
        %2359 = vmatpush2.bf16.msra.mxu0 0
        %2360 = vmatprep.subr.bf16.mxu0 0
        %2361 = vmatpush2.bf16.msra.mxu0 0
        %2362 = vmatprep.subr.bf16.mxu0 0
        %2363 = vmatpush2.bf16.msra.mxu0 0
        %2364 = vmatprep.subr.bf16.mxu0 0
        %2365 = vmatpush2.bf16.msra.mxu0 0
        %2366 = vmatprep.subr.bf16.mxu0 0
        %2367 = vmatpush2.bf16.msra.mxu0 0
        %2368 = vmatprep.mubr.bf16.mxu0 0
        %2369 = vmatmul.mubr.bf16.gmra.mxu0 %v2313
        %v2370 = vpop.f32.mrf.mxu0
        %v2371 = vadd.f32 %v2297, %v2370
        %v2372 = vpop.f32.mrf.mxu0
        %v2373 = vpop.f32.mrf.mxu0
        %v2374 = vadd.f32 %v2297, %v2373
        %v2375 = vpop.f32.mrf.mxu0
        %2376 = vmatprep.mubr.bf16.mxu0 0
        %2377 = vmatmul.mubr.bf16.gmra.mxu0 %v2316
        %v2378 = vpop.f32.mrf.mxu0
        %v2379 = vadd.f32 %v2297, %v2378
        %v2380 = vpop.f32.mrf.mxu0
        %v2381 = vpop.f32.mrf.mxu0
        %v2382 = vadd.f32 %v2297, %v2381
        %v2383 = vpop.f32.mrf.mxu0
        %2384 = vmatprep.mubr.bf16.mxu0 0
        %2385 = vmatmul.mubr.bf16.gmra.mxu0 %v2319
        %v2386 = vpop.f32.mrf.mxu0
        %v2387 = vadd.f32 %v2297, %v2386
        %v2388 = vpop.f32.mrf.mxu0
        %v2389 = vpop.f32.mrf.mxu0
        %v2390 = vadd.f32 %v2297, %v2389
        %v2391 = vpop.f32.mrf.mxu0
        %2392 = vmatprep.mubr.bf16.mxu0 0
        %2393 = vmatmul.mubr.bf16.gmra.mxu0 %v2322
        %v2394 = vpop.f32.mrf.mxu0
        %v2395 = vadd.f32 %v2297, %v2394
        %v2396 = vpop.f32.mrf.mxu0
        %v2397 = vpop.f32.mrf.mxu0
        %v2398 = vadd.f32 %v2297, %v2397
        %v2399 = vpop.f32.mrf.mxu0
        %2400 = vmatprep.mubr.bf16.mxu0 0
        %2401 = vmatmul.mubr.bf16.gmra.mxu0 %v2325
        %v2402 = vpop.f32.mrf.mxu0
        %v2403 = vadd.f32 %v2297, %v2402
        %v2404 = vpop.f32.mrf.mxu0
        %v2405 = vpop.f32.mrf.mxu0
        %v2406 = vadd.f32 %v2297, %v2405
        %v2407 = vpop.f32.mrf.mxu0
        %2408 = vmatprep.mubr.bf16.mxu0 0
        %2409 = vmatmul.mubr.bf16.gmra.mxu0 %v2328
        %v2410 = vpop.f32.mrf.mxu0
        %v2411 = vadd.f32 %v2297, %v2410
        %v2412 = vpop.f32.mrf.mxu0
        %v2413 = vpop.f32.mrf.mxu0
        %v2414 = vadd.f32 %v2297, %v2413
        %v2415 = vpop.f32.mrf.mxu0
        %2416 = vmatprep.mubr.bf16.mxu0 0
        %2417 = vmatmul.mubr.bf16.gmra.mxu0 %v2331
        %v2418 = vpop.f32.mrf.mxu0
        %v2419 = vadd.f32 %v2297, %v2418
        %v2420 = vpop.f32.mrf.mxu0
        %v2421 = vpop.f32.mrf.mxu0
        %v2422 = vadd.f32 %v2297, %v2421
        %v2423 = vpop.f32.mrf.mxu0
        %2424 = vmatprep.mubr.bf16.mxu0 0
        %2425 = vmatmul.mubr.bf16.gmra.mxu0 %v2334
        %v2426 = vpop.f32.mrf.mxu0
        %v2427 = vadd.f32 %v2297, %v2426
        %v2428 = vpop.f32.mrf.mxu0
        %v2429 = vpop.f32.mrf.mxu0
        %v2430 = vadd.f32 %v2297, %v2429
        %v2431 = vpop.f32.mrf.mxu0
        %2432 = vdwg.mxu0
        %v2433 = vxor.u32 %v2371, 2147483648
        %v2434 = vxor.u32 %v2374, 2147483648
        %v2435 = vxor.u32 %v2379, 2147483648
        %v2436 = vxor.u32 %v2382, 2147483648
        %v2437 = vxor.u32 %v2387, 2147483648
        %v2438 = vxor.u32 %v2390, 2147483648
        %v2439 = vxor.u32 %v2395, 2147483648
        %v2440 = vxor.u32 %v2398, 2147483648
        %v2441 = vxor.u32 %v2403, 2147483648
        %v2442 = vxor.u32 %v2406, 2147483648
        %v2443 = vxor.u32 %v2411, 2147483648
        %v2444 = vxor.u32 %v2414, 2147483648
        %v2445 = vxor.u32 %v2419, 2147483648
        %v2446 = vxor.u32 %v2422, 2147483648
        %v2447 = vxor.u32 %v2427, 2147483648
        %v2448 = vxor.u32 %v2430, 2147483648
        %v2449 = vmul.f32 %v2433, 1.442695
        %v2450 = vpow.pop %v2449
        %v2451 = vmul.f32 %v2434, 1.442695
        %v2452 = vpow.pop %v2451
        %v2453 = vmul.f32 %v2435, 1.442695
        %v2454 = vpow.pop %v2453
        %v2455 = vmul.f32 %v2436, 1.442695
        %v2456 = vpow.pop %v2455
        %v2457 = vmul.f32 %v2437, 1.442695
        %v2458 = vpow.pop %v2457
        %v2459 = vmul.f32 %v2438, 1.442695
        %v2460 = vpow.pop %v2459
        %v2461 = vmul.f32 %v2439, 1.442695
        %v2462 = vpow.pop %v2461
        %v2463 = vmul.f32 %v2440, 1.442695
        %v2464 = vpow.pop %v2463
        %v2465 = vmul.f32 %v2441, 1.442695
        %v2466 = vpow.pop %v2465
        %v2467 = vmul.f32 %v2442, 1.442695
        %v2468 = vpow.pop %v2467
        %v2469 = vmul.f32 %v2443, 1.442695
        %v2470 = vpow.pop %v2469
        %v2471 = vmul.f32 %v2444, 1.442695
        %v2472 = vpow.pop %v2471
        %v2473 = vmul.f32 %v2445, 1.442695
        %v2474 = vpow.pop %v2473
        %v2475 = vmul.f32 %v2446, 1.442695
        %v2476 = vpow.pop %v2475
        %v2477 = vmul.f32 %v2447, 1.442695
        %v2478 = vpow.pop %v2477
        %v2479 = vmul.f32 %v2448, 1.442695
        %v2480 = vpow.pop %v2479
        %v2481 = vadd.f32 %v2450, 1.0
        %v2482 = vadd.f32 %v2452, 1.0
        %v2483 = vadd.f32 %v2454, 1.0
        %v2484 = vadd.f32 %v2456, 1.0
        %v2485 = vadd.f32 %v2458, 1.0
        %v2486 = vadd.f32 %v2460, 1.0
        %v2487 = vadd.f32 %v2462, 1.0
        %v2488 = vadd.f32 %v2464, 1.0
        %v2489 = vadd.f32 %v2466, 1.0
        %v2490 = vadd.f32 %v2468, 1.0
        %v2491 = vadd.f32 %v2470, 1.0
        %v2492 = vadd.f32 %v2472, 1.0
        %v2493 = vadd.f32 %v2474, 1.0
        %v2494 = vadd.f32 %v2476, 1.0
        %v2495 = vadd.f32 %v2478, 1.0
        %v2496 = vadd.f32 %v2480, 1.0
        %v2497 = vrcp.pop %v2481
        %v2498 = vmul.f32 1.0, %v2497
        %v2499 = vrcp.pop %v2482
        %v2500 = vmul.f32 1.0, %v2499
        %v2501 = vrcp.pop %v2483
        %v2502 = vmul.f32 1.0, %v2501
        %v2503 = vrcp.pop %v2484
        %v2504 = vmul.f32 1.0, %v2503
        %v2505 = vrcp.pop %v2485
        %v2506 = vmul.f32 1.0, %v2505
        %v2507 = vrcp.pop %v2486
        %v2508 = vmul.f32 1.0, %v2507
        %v2509 = vrcp.pop %v2487
        %v2510 = vmul.f32 1.0, %v2509
        %v2511 = vrcp.pop %v2488
        %v2512 = vmul.f32 1.0, %v2511
        %v2513 = vrcp.pop %v2489
        %v2514 = vmul.f32 1.0, %v2513
        %v2515 = vrcp.pop %v2490
        %v2516 = vmul.f32 1.0, %v2515
        %v2517 = vrcp.pop %v2491
        %v2518 = vmul.f32 1.0, %v2517
        %v2519 = vrcp.pop %v2492
        %v2520 = vmul.f32 1.0, %v2519
        %v2521 = vrcp.pop %v2493
        %v2522 = vmul.f32 1.0, %v2521
        %v2523 = vrcp.pop %v2494
        %v2524 = vmul.f32 1.0, %v2523
        %v2525 = vrcp.pop %v2495
        %v2526 = vmul.f32 1.0, %v2525
        %v2527 = vrcp.pop %v2496
        %v2528 = vmul.f32 1.0, %v2527
        %v2529 = vmul.f32 %v2371, %v2498
        %v2530 = vmul.f32 %v2374, %v2500
        %v2531 = vmul.f32 %v2379, %v2502
        %v2532 = vmul.f32 %v2382, %v2504
        %v2533 = vmul.f32 %v2387, %v2506
        %v2534 = vmul.f32 %v2390, %v2508
        %v2535 = vmul.f32 %v2395, %v2510
        %v2536 = vmul.f32 %v2398, %v2512
        %v2537 = vmul.f32 %v2403, %v2514
        %v2538 = vmul.f32 %v2406, %v2516
        %v2539 = vmul.f32 %v2411, %v2518
        %v2540 = vmul.f32 %v2414, %v2520
        %v2541 = vmul.f32 %v2419, %v2522
        %v2542 = vmul.f32 %v2422, %v2524
        %v2543 = vmul.f32 %v2427, %v2526
        %v2544 = vmul.f32 %v2430, %v2528
        %v2545 = vpack.c.bf16 %v2530, %v2529
        %v2546 = vpack.c.bf16 %v2532, %v2531
        %v2547 = vpack.c.bf16 %v2534, %v2533
        %v2548 = vpack.c.bf16 %v2536, %v2535
        %v2549 = vpack.c.bf16 %v2538, %v2537
        %v2550 = vpack.c.bf16 %v2540, %v2539
        %v2551 = vpack.c.bf16 %v2542, %v2541
        %v2552 = vpack.c.bf16 %v2544, %v2543
        %v2553 = vld [vmem:[%s1023] sm:$0xf]
        %v2554 = vld [vmem:[%s1023 + $0x4] sm:$0xf]
        %v2555 = vld [vmem:[%s1023 + $0x8] sm:$0xf]
        %v2556 = vld [vmem:[%s1023 + $0xc] sm:$0xf]
        %v2557 = vld [vmem:[%s1026] sm:$0x1]
        %v2559 = vlaneseq
        %v2560 = vshrl.u32 %v2559, 7
        %v2561 = vsub.s32 0, %v2560
        %v2562 = vrot.slane %v2557, %v2561
        %v2568 = vunpack.c.l.b16 %v2553
        %v2569 = vunpack.c.l.b16 %v2554
        %v2570 = vunpack.c.l.b16 %v2555
        %v2571 = vunpack.c.l.b16 %v2556
        %v2572 = vpack.c.b16 %v2569, %v2568
        %v2573 = vpack.c.b16 %v2571, %v2570
        %v2577 = vsel %vm2311, %v2545, 0
        %v2580 = vsel %vm2311, %v2546, 0
        %v2583 = vsel %vm2311, %v2547, 0
        %v2586 = vsel %vm2311, %v2548, 0
        %v2589 = vsel %vm2311, %v2549, 0
        %v2592 = vsel %vm2311, %v2550, 0
        %v2595 = vsel %vm2311, %v2551, 0
        %v2598 = vsel %vm2311, %v2552, 0
        %2600 = vmatprep.subr.bf16.mxu0 0
        %2601 = vmatpush1.bf16.msra.mxu0 0
        %2602 = vmatprep.subr.bf16.mxu0 0
        %2603 = vmatpush1.bf16.msra.mxu0 0
        %2604 = vmatprep.subr.bf16.mxu0 0
        %2605 = vmatpush1.bf16.msra.mxu0 0
        %2606 = vmatprep.subr.bf16.mxu0 0
        %2607 = vmatpush1.bf16.msra.mxu0 0
        %2608 = vmatprep.subr.bf16.mxu0 0
        %2609 = vmatpush1.bf16.msra.mxu0 0
        %2610 = vmatprep.subr.bf16.mxu0 0
        %2611 = vmatpush1.bf16.msra.mxu0 0
        %2612 = vmatprep.subr.bf16.mxu0 0
        %2613 = vmatpush1.bf16.msra.mxu0 %v2573
        %2614 = vmatprep.subr.bf16.mxu0 0
        %2615 = vmatpush1.bf16.msra.mxu0 %v2572
        %2616 = vmatprep.subr.bf16.mxu0 0
        %2617 = vmatpush2.bf16.msra.mxu0 0
        %2618 = vmatprep.subr.bf16.mxu0 0
        %2619 = vmatpush2.bf16.msra.mxu0 0
        %2620 = vmatprep.subr.bf16.mxu0 0
        %2621 = vmatpush2.bf16.msra.mxu0 0
        %2622 = vmatprep.subr.bf16.mxu0 0
        %2623 = vmatpush2.bf16.msra.mxu0 0
        %2624 = vmatprep.subr.bf16.mxu0 0
        %2625 = vmatpush2.bf16.msra.mxu0 0
        %2626 = vmatprep.subr.bf16.mxu0 0
        %2627 = vmatpush2.bf16.msra.mxu0 0
        %2628 = vmatprep.subr.bf16.mxu0 0
        %2629 = vmatpush2.bf16.msra.mxu0 0
        %2630 = vmatprep.subr.bf16.mxu0 0
        %2631 = vmatpush2.bf16.msra.mxu0 0
        %2632 = vmatprep.mubr.bf16.mxu0 0
        %2633 = vmatmul.mubr.bf16.gmra.mxu0 %v2577
        %v2634 = vpop.f32.mrf.mxu0
        %v2635 = vadd.f32 %v2562, %v2634
        %v2636 = vpop.f32.mrf.mxu0
        %v2637 = vpop.f32.mrf.mxu0
        %v2638 = vadd.f32 %v2562, %v2637
        %v2639 = vpop.f32.mrf.mxu0
        %2640 = vmatprep.mubr.bf16.mxu0 0
        %2641 = vmatmul.mubr.bf16.gmra.mxu0 %v2580
        %v2642 = vpop.f32.mrf.mxu0
        %v2643 = vadd.f32 %v2562, %v2642
        %v2644 = vpop.f32.mrf.mxu0
        %v2645 = vpop.f32.mrf.mxu0
        %v2646 = vadd.f32 %v2562, %v2645
        %v2647 = vpop.f32.mrf.mxu0
        %2648 = vmatprep.mubr.bf16.mxu0 0
        %2649 = vmatmul.mubr.bf16.gmra.mxu0 %v2583
        %v2650 = vpop.f32.mrf.mxu0
        %v2651 = vadd.f32 %v2562, %v2650
        %v2652 = vpop.f32.mrf.mxu0
        %v2653 = vpop.f32.mrf.mxu0
        %v2654 = vadd.f32 %v2562, %v2653
        %v2655 = vpop.f32.mrf.mxu0
        %2656 = vmatprep.mubr.bf16.mxu0 0
        %2657 = vmatmul.mubr.bf16.gmra.mxu0 %v2586
        %v2658 = vpop.f32.mrf.mxu0
        %v2659 = vadd.f32 %v2562, %v2658
        %v2660 = vpop.f32.mrf.mxu0
        %v2661 = vpop.f32.mrf.mxu0
        %v2662 = vadd.f32 %v2562, %v2661
        %v2663 = vpop.f32.mrf.mxu0
        %2664 = vmatprep.mubr.bf16.mxu0 0
        %2665 = vmatmul.mubr.bf16.gmra.mxu0 %v2589
        %v2666 = vpop.f32.mrf.mxu0
        %v2667 = vadd.f32 %v2562, %v2666
        %v2668 = vpop.f32.mrf.mxu0
        %v2669 = vpop.f32.mrf.mxu0
        %v2670 = vadd.f32 %v2562, %v2669
        %v2671 = vpop.f32.mrf.mxu0
        %2672 = vmatprep.mubr.bf16.mxu0 0
        %2673 = vmatmul.mubr.bf16.gmra.mxu0 %v2592
        %v2674 = vpop.f32.mrf.mxu0
        %v2675 = vadd.f32 %v2562, %v2674
        %v2676 = vpop.f32.mrf.mxu0
        %v2677 = vpop.f32.mrf.mxu0
        %v2678 = vadd.f32 %v2562, %v2677
        %v2679 = vpop.f32.mrf.mxu0
        %2680 = vmatprep.mubr.bf16.mxu0 0
        %2681 = vmatmul.mubr.bf16.gmra.mxu0 %v2595
        %v2682 = vpop.f32.mrf.mxu0
        %v2683 = vadd.f32 %v2562, %v2682
        %v2684 = vpop.f32.mrf.mxu0
        %v2685 = vpop.f32.mrf.mxu0
        %v2686 = vadd.f32 %v2562, %v2685
        %v2687 = vpop.f32.mrf.mxu0
        %2688 = vmatprep.mubr.bf16.mxu0 0
        %2689 = vmatmul.mubr.bf16.gmra.mxu0 %v2598
        %v2690 = vpop.f32.mrf.mxu0
        %v2691 = vadd.f32 %v2562, %v2690
        %v2692 = vpop.f32.mrf.mxu0
        %v2693 = vpop.f32.mrf.mxu0
        %v2694 = vadd.f32 %v2562, %v2693
        %v2695 = vpop.f32.mrf.mxu0
        %2696 = vdwg.mxu0
        %v2697 = vxor.u32 %v2635, 2147483648
        %v2698 = vxor.u32 %v2638, 2147483648
        %v2699 = vxor.u32 %v2643, 2147483648
        %v2700 = vxor.u32 %v2646, 2147483648
        %v2701 = vxor.u32 %v2651, 2147483648
        %v2702 = vxor.u32 %v2654, 2147483648
        %v2703 = vxor.u32 %v2659, 2147483648
        %v2704 = vxor.u32 %v2662, 2147483648
        %v2705 = vxor.u32 %v2667, 2147483648
        %v2706 = vxor.u32 %v2670, 2147483648
        %v2707 = vxor.u32 %v2675, 2147483648
        %v2708 = vxor.u32 %v2678, 2147483648
        %v2709 = vxor.u32 %v2683, 2147483648
        %v2710 = vxor.u32 %v2686, 2147483648
        %v2711 = vxor.u32 %v2691, 2147483648
        %v2712 = vxor.u32 %v2694, 2147483648
        %v2713 = vmul.f32 %v2697, 1.442695
        %v2714 = vpow.pop %v2713
        %v2715 = vmul.f32 %v2698, 1.442695
        %v2716 = vpow.pop %v2715
        %v2717 = vmul.f32 %v2699, 1.442695
        %v2718 = vpow.pop %v2717
        %v2719 = vmul.f32 %v2700, 1.442695
        %v2720 = vpow.pop %v2719
        %v2721 = vmul.f32 %v2701, 1.442695
        %v2722 = vpow.pop %v2721
        %v2723 = vmul.f32 %v2702, 1.442695
        %v2724 = vpow.pop %v2723
        %v2725 = vmul.f32 %v2703, 1.442695
        %v2726 = vpow.pop %v2725
        %v2727 = vmul.f32 %v2704, 1.442695
        %v2728 = vpow.pop %v2727
        %v2729 = vmul.f32 %v2705, 1.442695
        %v2730 = vpow.pop %v2729
        %v2731 = vmul.f32 %v2706, 1.442695
        %v2732 = vpow.pop %v2731
        %v2733 = vmul.f32 %v2707, 1.442695
        %v2734 = vpow.pop %v2733
        %v2735 = vmul.f32 %v2708, 1.442695
        %v2736 = vpow.pop %v2735
        %v2737 = vmul.f32 %v2709, 1.442695
        %v2738 = vpow.pop %v2737
        %v2739 = vmul.f32 %v2710, 1.442695
        %v2740 = vpow.pop %v2739
        %v2741 = vmul.f32 %v2711, 1.442695
        %v2742 = vpow.pop %v2741
        %v2743 = vmul.f32 %v2712, 1.442695
        %v2744 = vpow.pop %v2743
        %v2745 = vadd.f32 %v2714, 1.0
        %v2746 = vadd.f32 %v2716, 1.0
        %v2747 = vadd.f32 %v2718, 1.0
        %v2748 = vadd.f32 %v2720, 1.0
        %v2749 = vadd.f32 %v2722, 1.0
        %v2750 = vadd.f32 %v2724, 1.0
        %v2751 = vadd.f32 %v2726, 1.0
        %v2752 = vadd.f32 %v2728, 1.0
        %v2753 = vadd.f32 %v2730, 1.0
        %v2754 = vadd.f32 %v2732, 1.0
        %v2755 = vadd.f32 %v2734, 1.0
        %v2756 = vadd.f32 %v2736, 1.0
        %v2757 = vadd.f32 %v2738, 1.0
        %v2758 = vadd.f32 %v2740, 1.0
        %v2759 = vadd.f32 %v2742, 1.0
        %v2760 = vadd.f32 %v2744, 1.0
        %v2761 = vrcp.pop %v2745
        %v2762 = vmul.f32 1.0, %v2761
        %v2763 = vrcp.pop %v2746
        %v2764 = vmul.f32 1.0, %v2763
        %v2765 = vrcp.pop %v2747
        %v2766 = vmul.f32 1.0, %v2765
        %v2767 = vrcp.pop %v2748
        %v2768 = vmul.f32 1.0, %v2767
        %v2769 = vrcp.pop %v2749
        %v2770 = vmul.f32 1.0, %v2769
        %v2771 = vrcp.pop %v2750
        %v2772 = vmul.f32 1.0, %v2771
        %v2773 = vrcp.pop %v2751
        %v2774 = vmul.f32 1.0, %v2773
        %v2775 = vrcp.pop %v2752
        %v2776 = vmul.f32 1.0, %v2775
        %v2777 = vrcp.pop %v2753
        %v2778 = vmul.f32 1.0, %v2777
        %v2779 = vrcp.pop %v2754
        %v2780 = vmul.f32 1.0, %v2779
        %v2781 = vrcp.pop %v2755
        %v2782 = vmul.f32 1.0, %v2781
        %v2783 = vrcp.pop %v2756
        %v2784 = vmul.f32 1.0, %v2783
        %v2785 = vrcp.pop %v2757
        %v2786 = vmul.f32 1.0, %v2785
        %v2787 = vrcp.pop %v2758
        %v2788 = vmul.f32 1.0, %v2787
        %v2789 = vrcp.pop %v2759
        %v2790 = vmul.f32 1.0, %v2789
        %v2791 = vrcp.pop %v2760
        %v2792 = vmul.f32 1.0, %v2791
        %v2793 = vmul.f32 %v2635, %v2762
        %v2794 = vmul.f32 %v2638, %v2764
        %v2795 = vmul.f32 %v2643, %v2766
        %v2796 = vmul.f32 %v2646, %v2768
        %v2797 = vmul.f32 %v2651, %v2770
        %v2798 = vmul.f32 %v2654, %v2772
        %v2799 = vmul.f32 %v2659, %v2774
        %v2800 = vmul.f32 %v2662, %v2776
        %v2801 = vmul.f32 %v2667, %v2778
        %v2802 = vmul.f32 %v2670, %v2780
        %v2803 = vmul.f32 %v2675, %v2782
        %v2804 = vmul.f32 %v2678, %v2784
        %v2805 = vmul.f32 %v2683, %v2786
        %v2806 = vmul.f32 %v2686, %v2788
        %v2807 = vmul.f32 %v2691, %v2790
        %v2808 = vmul.f32 %v2694, %v2792
        %v2809 = vld [vmem:[%s1029] sm:$0x1]
        %v2811 = vlaneseq
        %v2812 = vshrl.u32 %v2811, 7
        %v2813 = vsub.s32 0, %v2812
        %v2814 = vrot.slane %v2809, %v2813
        %v2816 = vmul.f32 %v2793, %v2814
        %v2817 = vmul.f32 %v2794, %v2814
        %v2818 = vmul.f32 %v2795, %v2814
        %v2819 = vmul.f32 %v2796, %v2814
        %v2820 = vmul.f32 %v2797, %v2814
        %v2821 = vmul.f32 %v2798, %v2814
        %v2822 = vmul.f32 %v2799, %v2814
        %v2823 = vmul.f32 %v2800, %v2814
        %v2824 = vmul.f32 %v2801, %v2814
        %v2825 = vmul.f32 %v2802, %v2814
        %v2826 = vmul.f32 %v2803, %v2814
        %v2827 = vmul.f32 %v2804, %v2814
        %v2828 = vmul.f32 %v2805, %v2814
        %v2829 = vmul.f32 %v2806, %v2814
        %v2830 = vmul.f32 %v2807, %v2814
        %v2831 = vmul.f32 %v2808, %v2814
        %v2832 = vsel %vm2311, %v2816, 0.0
        %2833 = vadd.xlane.f32.xlu0 %v2832
        %v2834 = vpop.xlane.xlu0 %2833
        %v2835 = vsel %vm2311, %v2817, 0.0
        %2836 = vadd.xlane.f32.xlu0 %v2835
        %v2837 = vpop.xlane.xlu0 %2836
        %v2838 = vsel %vm2311, %v2818, 0.0
        %2839 = vadd.xlane.f32.xlu0 %v2838
        %v2840 = vpop.xlane.xlu0 %2839
        %v2841 = vsel %vm2311, %v2819, 0.0
        %2842 = vadd.xlane.f32.xlu0 %v2841
        %v2843 = vpop.xlane.xlu0 %2842
        %v2844 = vsel %vm2311, %v2820, 0.0
        %2845 = vadd.xlane.f32.xlu0 %v2844
        %v2846 = vpop.xlane.xlu0 %2845
        %v2847 = vsel %vm2311, %v2821, 0.0
        %2848 = vadd.xlane.f32.xlu0 %v2847
        %v2849 = vpop.xlane.xlu0 %2848
        %v2850 = vsel %vm2311, %v2822, 0.0
        %2851 = vadd.xlane.f32.xlu0 %v2850
        %v2852 = vpop.xlane.xlu0 %2851
        %v2853 = vsel %vm2311, %v2823, 0.0
        %2854 = vadd.xlane.f32.xlu0 %v2853
        %v2855 = vpop.xlane.xlu0 %2854
        %v2856 = vsel %vm2311, %v2824, 0.0
        %2857 = vadd.xlane.f32.xlu0 %v2856
        %v2858 = vpop.xlane.xlu0 %2857
        %v2859 = vsel %vm2311, %v2825, 0.0
        %2860 = vadd.xlane.f32.xlu0 %v2859
        %v2861 = vpop.xlane.xlu0 %2860
        %v2862 = vsel %vm2311, %v2826, 0.0
        %2863 = vadd.xlane.f32.xlu0 %v2862
        %v2864 = vpop.xlane.xlu0 %2863
        %v2865 = vsel %vm2311, %v2827, 0.0
        %2866 = vadd.xlane.f32.xlu0 %v2865
        %v2867 = vpop.xlane.xlu0 %2866
        %v2868 = vsel %vm2311, %v2828, 0.0
        %2869 = vadd.xlane.f32.xlu0 %v2868
        %v2870 = vpop.xlane.xlu0 %2869
        %v2871 = vsel %vm2311, %v2829, 0.0
        %2872 = vadd.xlane.f32.xlu0 %v2871
        %v2873 = vpop.xlane.xlu0 %2872
        %v2874 = vsel %vm2311, %v2830, 0.0
        %2875 = vadd.xlane.f32.xlu0 %v2874
        %v2876 = vpop.xlane.xlu0 %2875
        %v2877 = vsel %vm2311, %v2831, 0.0
        %2878 = vadd.xlane.f32.xlu0 %v2877
        %v2879 = vpop.xlane.xlu0 %2878
        %v2880 = vmul.f32 %v1624, %v2834
        %v2881 = vmul.f32 %v1629, %v2837
        %v2882 = vmul.f32 %v1634, %v2840
        %v2883 = vmul.f32 %v1639, %v2843
        %v2884 = vmul.f32 %v1644, %v2846
        %v2885 = vmul.f32 %v1649, %v2849
        %v2886 = vmul.f32 %v1654, %v2852
        %v2887 = vmul.f32 %v1659, %v2855
        %v2888 = vmul.f32 %v1664, %v2858
        %v2889 = vmul.f32 %v1669, %v2861
        %v2890 = vmul.f32 %v1674, %v2864
        %v2891 = vmul.f32 %v1679, %v2867
        %v2892 = vmul.f32 %v1684, %v2870
        %v2893 = vmul.f32 %v1689, %v2873
        %v2894 = vmul.f32 %v1694, %v2876
        %v2895 = vmul.f32 %v1699, %v2879
        %2912 = vrot.lane.b32.xlu0 %v2529, 3
        %v2913 = vpop.permute.xlu0 %2912
        %2914 = vrot.lane.b32.xlu0 %v2530, 3
        %v2915 = vpop.permute.xlu0 %2914
        %2916 = vrot.lane.b32.xlu0 %v2531, 3
        %v2917 = vpop.permute.xlu0 %2916
        %2918 = vrot.lane.b32.xlu0 %v2532, 3
        %v2919 = vpop.permute.xlu0 %2918
        %2920 = vrot.lane.b32.xlu0 %v2533, 3
        %v2921 = vpop.permute.xlu0 %2920
        %2922 = vrot.lane.b32.xlu0 %v2534, 3
        %v2923 = vpop.permute.xlu0 %2922
        %2924 = vrot.lane.b32.xlu0 %v2535, 3
        %v2925 = vpop.permute.xlu0 %2924
        %2926 = vrot.lane.b32.xlu0 %v2536, 3
        %v2927 = vpop.permute.xlu0 %2926
        %2928 = vrot.lane.b32.xlu0 %v2537, 3
        %v2929 = vpop.permute.xlu0 %2928
        %2930 = vrot.lane.b32.xlu0 %v2538, 3
        %v2931 = vpop.permute.xlu0 %2930
        %2932 = vrot.lane.b32.xlu0 %v2539, 3
        %v2933 = vpop.permute.xlu0 %2932
        %2934 = vrot.lane.b32.xlu0 %v2540, 3
        %v2935 = vpop.permute.xlu0 %2934
        %2936 = vrot.lane.b32.xlu0 %v2541, 3
        %v2937 = vpop.permute.xlu0 %2936
        %2938 = vrot.lane.b32.xlu0 %v2542, 3
        %v2939 = vpop.permute.xlu0 %2938
        %2940 = vrot.lane.b32.xlu0 %v2543, 3
        %v2941 = vpop.permute.xlu0 %2940
        %2942 = vrot.lane.b32.xlu0 %v2544, 3
        %v2943 = vpop.permute.xlu0 %2942
        %v2960 = vsel %vm1726, %v2880, %v2913
        %v2961 = vsel %vm1726, %v2881, %v2915
        %v2962 = vsel %vm1726, %v2882, %v2917
        %v2963 = vsel %vm1726, %v2883, %v2919
        %v2964 = vsel %vm1726, %v2884, %v2921
        %v2965 = vsel %vm1726, %v2885, %v2923
        %v2966 = vsel %vm1726, %v2886, %v2925
        %v2967 = vsel %vm1726, %v2887, %v2927
        %v2968 = vsel %vm1726, %v2888, %v2929
        %v2969 = vsel %vm1726, %v2889, %v2931
        %v2970 = vsel %vm1726, %v2890, %v2933
        %v2971 = vsel %vm1726, %v2891, %v2935
        %v2972 = vsel %vm1726, %v2892, %v2937
        %v2973 = vsel %vm1726, %v2893, %v2939
        %v2974 = vsel %vm1726, %v2894, %v2941
        %v2975 = vsel %vm1726, %v2895, %v2943
        %v2976 = vpack.c.bf16 %v2961, %v2960
        %v2977 = vpack.c.bf16 %v2963, %v2962
        %v2978 = vpack.c.bf16 %v2965, %v2964
        %v2979 = vpack.c.bf16 %v2967, %v2966
        %v2980 = vpack.c.bf16 %v2969, %v2968
        %v2981 = vpack.c.bf16 %v2971, %v2970
        %v2982 = vpack.c.bf16 %v2973, %v2972
        %v2983 = vpack.c.bf16 %v2975, %v2974
        %v2984 = vlaneseq
        %v2985 = vshrl.u32 %v2984, 7
        %v2986 = vadd.s32 %v2985, 8
        %v2987 = vadd.s32 %v2985, 16
        %v2988 = vadd.s32 %v2985, 24
        %v2989 = vld [vmem:[%s988] sm:$0x1]
        %v2990 = vlaneseq
        %v2991 = vshrl.u32 %v2990, 7
        %v2992 = vsub.s32 0, %v2991
        %v2993 = vrot.slane %v2989, %v2992
        %vm2994 = vcmp.eq.s32.totalorder %v2985, %v2993
        %vm2995 = vcmp.eq.s32.totalorder %v2986, %v2993
        %vm2996 = vcmp.eq.s32.totalorder %v2987, %v2993
        %vm2997 = vcmp.eq.s32.totalorder %v2988, %v2993
        %v2998 = vsel %vm2994, 1.0, 0.0
        %v2999 = vsel %vm2995, 1.0, 0.0
        %v3000 = vsel %vm2996, 1.0, 0.0
        %v3001 = vsel %vm2997, 1.0, 0.0
        %v3002 = vpack.c.bf16 %v2999, %v2998
        %v3003 = vpack.c.bf16 %v3001, %v3000
        %v3004 = vld [vmem:[#allocation6] sm:$0xff]
        %v3005 = vld [vmem:[#allocation6 + $0x8] sm:$0xff]
        %v3006 = vld [vmem:[#allocation6 + $0x10] sm:$0xff]
        %v3007 = vld [vmem:[#allocation6 + $0x18] sm:$0xff]
        %3008 = vmatprep.subr.bf16.mxu0 0
        %3009 = vmatpush1.bf16.msra.mxu0 %v2983
        %3010 = vmatprep.subr.bf16.mxu0 0
        %3011 = vmatpush1.bf16.msra.mxu0 %v2982
        %3012 = vmatprep.subr.bf16.mxu0 0
        %3013 = vmatpush1.bf16.msra.mxu0 %v2981
        %3014 = vmatprep.subr.bf16.mxu0 0
        %3015 = vmatpush1.bf16.msra.mxu0 %v2980
        %3016 = vmatprep.subr.bf16.mxu0 0
        %3017 = vmatpush1.bf16.msra.mxu0 %v2979
        %3018 = vmatprep.subr.bf16.mxu0 0
        %3019 = vmatpush1.bf16.msra.mxu0 %v2978
        %3020 = vmatprep.subr.bf16.mxu0 0
        %3021 = vmatpush1.bf16.msra.mxu0 %v2977
        %3022 = vmatprep.subr.bf16.mxu0 0
        %3023 = vmatpush1.bf16.msra.mxu0 %v2976
        %3024 = vmatprep.subr.bf16.mxu0 0
        %3025 = vmatpush2.bf16.msra.mxu0 0
        %3026 = vmatprep.subr.bf16.mxu0 0
        %3027 = vmatpush2.bf16.msra.mxu0 0
        %3028 = vmatprep.subr.bf16.mxu0 0
        %3029 = vmatpush2.bf16.msra.mxu0 0
        %3030 = vmatprep.subr.bf16.mxu0 0
        %3031 = vmatpush2.bf16.msra.mxu0 0
        %3032 = vmatprep.subr.bf16.mxu0 0
        %3033 = vmatpush2.bf16.msra.mxu0 0
        %3034 = vmatprep.subr.bf16.mxu0 0
        %3035 = vmatpush2.bf16.msra.mxu0 0
        %3036 = vmatprep.subr.bf16.mxu0 0
        %3037 = vmatpush2.bf16.msra.mxu0 0
        %3038 = vmatprep.subr.bf16.mxu0 0
        %3039 = vmatpush2.bf16.msra.mxu0 0
        %3040 = vmatprep.mubr.bf16.mxu0 0
        %3041 = vmatmul.mubr.bf16.gmra.mxu0 %v3002
        %v3042 = vpop.f32.mrf.mxu0
        %v3043 = vadd.f32 0.0, %v3042
        %v3044 = vpop.f32.mrf.mxu0
        %v3045 = vpop.f32.mrf.mxu0
        %v3046 = vadd.f32 0.0, %v3045
        %v3047 = vpop.f32.mrf.mxu0
        %3048 = vmatprep.mubr.bf16.mxu0 0
        %3049 = vmatmul.mubr.bf16.gmra.mxu0 %v3003
        %v3050 = vpop.f32.mrf.mxu0
        %v3051 = vadd.f32 0.0, %v3050
        %v3052 = vpop.f32.mrf.mxu0
        %v3053 = vpop.f32.mrf.mxu0
        %v3054 = vadd.f32 0.0, %v3053
        %v3055 = vpop.f32.mrf.mxu0
        %3056 = vdwg.mxu0
        %v3057 = vadd.f32 %v3004, %v3043
        %v3058 = vadd.f32 %v3005, %v3046
        %v3059 = vadd.f32 %v3006, %v3051
        %v3060 = vadd.f32 %v3007, %v3054
        %vm3061 = vcmask 285696
        %3062 = vst.msk [vmem:[#allocation6] sm:$0xff] %vm3061, %v3057
        %3063 = vst.msk [vmem:[#allocation6 + $0x8] sm:$0xff] %vm3061, %v3058
        %3064 = vst.msk [vmem:[#allocation6 + $0x10] sm:$0xff] %vm3061, %v3059
        %3065 = vst.msk [vmem:[#allocation6 + $0x18] sm:$0xff] %vm3061, %v3060
        %p3066 = scmp.eq.s32.totalorder %s43, 1
        // Predicated region
        $region133: #{res_egnn_forward.1} parent=123 // pred_check
          %p3067 = pneg %p3066
        $region134: #{res_egnn_forward.1} parent=123 // pred_check_branch
          %3069 = sbr.rel (%p3067) target = $region136
        $region135: #{res_egnn_forward.1} parent=123 // pred_region
          %v3070 = vld [vmem:[#allocation6] sm:$0xff]
          %v3071 = vld [vmem:[#allocation6 + $0x8] sm:$0xff]
          %v3072 = vld [vmem:[#allocation6 + $0x10] sm:$0xff]
          %v3073 = vld [vmem:[#allocation6 + $0x18] sm:$0xff]
          %v3074 = vld [vmem:[#allocation3] sm:$0xff]
          %v3075 = vld [vmem:[#allocation3 + $0x8] sm:$0xff]
          %v3076 = vld [vmem:[#allocation3 + $0x10] sm:$0xff]
          %v3077 = vld [vmem:[#allocation3 + $0x18] sm:$0xff]
          %v3078 = vld [vmem:[%s5] sm:$0xff]
          %v3079 = vld [vmem:[%s5 + $0x8] sm:$0xff]
          %v3080 = vld [vmem:[%s5 + $0x10] sm:$0xff]
          %v3081 = vld [vmem:[%s5 + $0x18] sm:$0xff]
          %3083 = vset.pattern.permute.xlu0 0
          %3084 = vperm.xlu0 %3083, %v3078
          %v3085 = vpop.permute.xlu0 %3084
          %3088 = vset.pattern.permute.xlu0 0
          %3089 = vperm.xlu0 %3088, %v3079
          %v3090 = vpop.permute.xlu0 %3089
          %3093 = vset.pattern.permute.xlu0 0
          %3094 = vperm.xlu0 %3093, %v3080
          %v3095 = vpop.permute.xlu0 %3094
          %3098 = vset.pattern.permute.xlu0 0
          %3099 = vperm.xlu0 %3098, %v3081
          %v3100 = vpop.permute.xlu0 %3099
          %v3102 = vmul.f32 %v3070, %v3085
          %v3103 = vmul.f32 %v3071, %v3090
          %v3104 = vmul.f32 %v3072, %v3095
          %v3105 = vmul.f32 %v3073, %v3100
          %v3106 = vadd.f32 %v3074, %v3102
          %v3107 = vadd.f32 %v3075, %v3103
          %v3108 = vadd.f32 %v3076, %v3104
          %v3109 = vadd.f32 %v3077, %v3105
          %3110 = vst.msk [vmem:[#allocation3] sm:$0xff] %vm1726, %v3106
          %3111 = vst.msk [vmem:[#allocation3 + $0x8] sm:$0xff] %vm1726, %v3107
          %3112 = vst.msk [vmem:[#allocation3 + $0x10] sm:$0xff] %vm1726, %v3108
          %3113 = vst.msk [vmem:[#allocation3 + $0x18] sm:$0xff] %vm1726, %v3109
          %v3114 = vld [vmem:[#allocation2] sm:$0xff]
          %v3115 = vld [vmem:[#allocation2 + $0x8] sm:$0xff]
          %v3116 = vld [vmem:[#allocation2 + $0x10] sm:$0xff]
          %v3117 = vld [vmem:[#allocation2 + $0x18] sm:$0xff]
          %v3118 = vpack.c.bf16 %v3115, %v3114
          %v3119 = vpack.c.bf16 %v3117, %v3116
          %v3120 = vpack.c.bf16 %v3071, %v3070
          %v3121 = vpack.c.bf16 %v3073, %v3072
          %3124 = vrot.lane.b32.xlu0 %v3120, 29
          %v3125 = vpop.permute.xlu0 %3124
          %3126 = vrot.lane.b32.xlu0 %v3121, 29
          %v3127 = vpop.permute.xlu0 %3126
          %v3130 = vsel %vm2311, %v3118, %v3125
          %v3133 = vsel %vm2311, %v3119, %v3127
          %v3134 = vld [vmem:[%s1034] sm:$0xf]
          %v3135 = vld [vmem:[%s1034 + $0x4] sm:$0xf]
          %v3136 = vld [vmem:[%s1034 + $0x8] sm:$0xf]
          %v3137 = vld [vmem:[%s1034 + $0xc] sm:$0xf]
          %v3138 = vld [vmem:[%s1034 + $0x10] sm:$0xf]
          %v3139 = vld [vmem:[%s1034 + $0x14] sm:$0xf]
          %v3140 = vld [vmem:[%s1034 + $0x18] sm:$0xf]
          %v3141 = vld [vmem:[%s1034 + $0x1c] sm:$0xf]
          %v3142 = vld [vmem:[%s1037] sm:$0x1]
          %v3144 = vlaneseq
          %v3145 = vshrl.u32 %v3144, 7
          %v3146 = vsub.s32 0, %v3145
          %v3147 = vrot.slane %v3142, %v3146
          %v3157 = vunpack.c.l.b16 %v3134
          %v3158 = vunpack.c.l.b16 %v3135
          %v3159 = vunpack.c.l.b16 %v3136
          %v3160 = vunpack.c.l.b16 %v3137
          %v3161 = vunpack.c.l.b16 %v3138
          %v3162 = vunpack.c.l.b16 %v3139
          %v3163 = vunpack.c.l.b16 %v3140
          %v3164 = vunpack.c.l.b16 %v3141
          %v3165 = vpack.c.b16 %v3158, %v3157
          %v3166 = vpack.c.b16 %v3160, %v3159
          %v3167 = vpack.c.b16 %v3162, %v3161
          %v3168 = vpack.c.b16 %v3164, %v3163
          %v3173 = vsel %vm1508, %v3130, 0
          %v3175 = vsel %vm1508, %v3133, 0
          %3177 = vmatprep.subr.bf16.mxu0 0
          %3178 = vmatpush1.bf16.msra.mxu0 0
          %3179 = vmatprep.subr.bf16.mxu0 0
          %3180 = vmatpush1.bf16.msra.mxu0 0
          %3181 = vmatprep.subr.bf16.mxu0 0
          %3182 = vmatpush1.bf16.msra.mxu0 0
          %3183 = vmatprep.subr.bf16.mxu0 0
          %3184 = vmatpush1.bf16.msra.mxu0 0
          %3185 = vmatprep.subr.bf16.mxu0 0
          %3186 = vmatpush1.bf16.msra.mxu0 %v3168
          %3187 = vmatprep.subr.bf16.mxu0 0
          %3188 = vmatpush1.bf16.msra.mxu0 %v3167
          %3189 = vmatprep.subr.bf16.mxu0 0
          %3190 = vmatpush1.bf16.msra.mxu0 %v3166
          %3191 = vmatprep.subr.bf16.mxu0 0
          %3192 = vmatpush1.bf16.msra.mxu0 %v3165
          %3193 = vmatprep.subr.bf16.mxu0 0
          %3194 = vmatpush2.bf16.msra.mxu0 0
          %3195 = vmatprep.subr.bf16.mxu0 0
          %3196 = vmatpush2.bf16.msra.mxu0 0
          %3197 = vmatprep.subr.bf16.mxu0 0
          %3198 = vmatpush2.bf16.msra.mxu0 0
          %3199 = vmatprep.subr.bf16.mxu0 0
          %3200 = vmatpush2.bf16.msra.mxu0 0
          %3201 = vmatprep.subr.bf16.mxu0 0
          %3202 = vmatpush2.bf16.msra.mxu0 0
          %3203 = vmatprep.subr.bf16.mxu0 0
          %3204 = vmatpush2.bf16.msra.mxu0 0
          %3205 = vmatprep.subr.bf16.mxu0 0
          %3206 = vmatpush2.bf16.msra.mxu0 0
          %3207 = vmatprep.subr.bf16.mxu0 0
          %3208 = vmatpush2.bf16.msra.mxu0 0
          %3209 = vmatprep.mubr.bf16.mxu0 0
          %3210 = vmatmul.mubr.bf16.gmra.mxu0 %v3173
          %v3211 = vpop.f32.mrf.mxu0
          %v3212 = vadd.f32 %v3147, %v3211
          %v3213 = vpop.f32.mrf.mxu0
          %v3214 = vpop.f32.mrf.mxu0
          %v3215 = vadd.f32 %v3147, %v3214
          %v3216 = vpop.f32.mrf.mxu0
          %3217 = vmatprep.mubr.bf16.mxu0 0
          %3218 = vmatmul.mubr.bf16.gmra.mxu0 %v3175
          %v3219 = vpop.f32.mrf.mxu0
          %v3220 = vadd.f32 %v3147, %v3219
          %v3221 = vpop.f32.mrf.mxu0
          %v3222 = vpop.f32.mrf.mxu0
          %v3223 = vadd.f32 %v3147, %v3222
          %v3224 = vpop.f32.mrf.mxu0
          %3225 = vdwg.mxu0
          %v3226 = vxor.u32 %v3212, 2147483648
          %v3227 = vxor.u32 %v3215, 2147483648
          %v3228 = vxor.u32 %v3220, 2147483648
          %v3229 = vxor.u32 %v3223, 2147483648
          %v3230 = vmul.f32 %v3226, 1.442695
          %v3231 = vpow.pop %v3230
          %v3232 = vmul.f32 %v3227, 1.442695
          %v3233 = vpow.pop %v3232
          %v3234 = vmul.f32 %v3228, 1.442695
          %v3235 = vpow.pop %v3234
          %v3236 = vmul.f32 %v3229, 1.442695
          %v3237 = vpow.pop %v3236
          %v3238 = vadd.f32 %v3231, 1.0
          %v3239 = vadd.f32 %v3233, 1.0
          %v3240 = vadd.f32 %v3235, 1.0
          %v3241 = vadd.f32 %v3237, 1.0
          %v3242 = vrcp.pop %v3238
          %v3243 = vmul.f32 1.0, %v3242
          %v3244 = vrcp.pop %v3239
          %v3245 = vmul.f32 1.0, %v3244
          %v3246 = vrcp.pop %v3240
          %v3247 = vmul.f32 1.0, %v3246
          %v3248 = vrcp.pop %v3241
          %v3249 = vmul.f32 1.0, %v3248
          %v3250 = vmul.f32 %v3212, %v3243
          %v3251 = vmul.f32 %v3215, %v3245
          %v3252 = vmul.f32 %v3220, %v3247
          %v3253 = vmul.f32 %v3223, %v3249
          %v3254 = vpack.c.bf16 %v3251, %v3250
          %v3255 = vpack.c.bf16 %v3253, %v3252
          %v3256 = vld [vmem:[%s1042] sm:$0xf]
          %v3257 = vld [vmem:[%s1042 + $0x4] sm:$0xf]
          %v3258 = vld [vmem:[%s1042 + $0x8] sm:$0xf]
          %v3259 = vld [vmem:[%s1042 + $0xc] sm:$0xf]
          %v3264 = vunpack.c.l.b16 %v3256
          %v3265 = vunpack.c.l.b16 %v3257
          %v3266 = vunpack.c.l.b16 %v3258
          %v3267 = vunpack.c.l.b16 %v3259
          %v3268 = vpack.c.b16 %v3265, %v3264
          %v3269 = vpack.c.b16 %v3267, %v3266
          %v3273 = vsel %vm2311, %v3254, 0
          %v3276 = vsel %vm2311, %v3255, 0
          %3278 = vmatprep.subr.bf16.mxu0 0
          %3279 = vmatpush1.bf16.msra.mxu0 0
          %3280 = vmatprep.subr.bf16.mxu0 0
          %3281 = vmatpush1.bf16.msra.mxu0 0
          %3282 = vmatprep.subr.bf16.mxu0 0
          %3283 = vmatpush1.bf16.msra.mxu0 0
          %3284 = vmatprep.subr.bf16.mxu0 0
          %3285 = vmatpush1.bf16.msra.mxu0 0
          %3286 = vmatprep.subr.bf16.mxu0 0
          %3287 = vmatpush1.bf16.msra.mxu0 0
          %3288 = vmatprep.subr.bf16.mxu0 0
          %3289 = vmatpush1.bf16.msra.mxu0 0
          %3290 = vmatprep.subr.bf16.mxu0 0
          %3291 = vmatpush1.bf16.msra.mxu0 %v3269
          %3292 = vmatprep.subr.bf16.mxu0 0
          %3293 = vmatpush1.bf16.msra.mxu0 %v3268
          %3294 = vmatprep.subr.bf16.mxu0 0
          %3295 = vmatpush2.bf16.msra.mxu0 0
          %3296 = vmatprep.subr.bf16.mxu0 0
          %3297 = vmatpush2.bf16.msra.mxu0 0
          %3298 = vmatprep.subr.bf16.mxu0 0
          %3299 = vmatpush2.bf16.msra.mxu0 0
          %3300 = vmatprep.subr.bf16.mxu0 0
          %3301 = vmatpush2.bf16.msra.mxu0 0
          %3302 = vmatprep.subr.bf16.mxu0 0
          %3303 = vmatpush2.bf16.msra.mxu0 0
          %3304 = vmatprep.subr.bf16.mxu0 0
          %3305 = vmatpush2.bf16.msra.mxu0 0
          %3306 = vmatprep.subr.bf16.mxu0 0
          %3307 = vmatpush2.bf16.msra.mxu0 0
          %3308 = vmatprep.subr.bf16.mxu0 0
          %3309 = vmatpush2.bf16.msra.mxu0 0
          %3310 = vmatprep.mubr.bf16.mxu0 0
          %3311 = vmatmul.mubr.bf16.gmra.mxu0 %v3273
          %v3312 = vpop.f32.mrf.mxu0
          %v3313 = vadd.f32 0.0, %v3312
          %v3314 = vpop.f32.mrf.mxu0
          %v3315 = vpop.f32.mrf.mxu0
          %v3316 = vadd.f32 0.0, %v3315
          %v3317 = vpop.f32.mrf.mxu0
          %3318 = vmatprep.mubr.bf16.mxu0 0
          %3319 = vmatmul.mubr.bf16.gmra.mxu0 %v3276
          %v3320 = vpop.f32.mrf.mxu0
          %v3321 = vadd.f32 0.0, %v3320
          %v3322 = vpop.f32.mrf.mxu0
          %v3323 = vpop.f32.mrf.mxu0
          %v3324 = vadd.f32 0.0, %v3323
          %v3325 = vpop.f32.mrf.mxu0
          %3326 = vdwg.mxu0
          %v3327 = vadd.f32 %v3114, %v3313
          %v3328 = vadd.f32 %v3115, %v3316
          %v3329 = vadd.f32 %v3116, %v3321
          %v3330 = vadd.f32 %v3117, %v3324
          %v3331 = vld [vmem:[%s1045] sm:$0x1]
          %v3333 = vlaneseq
          %v3334 = vshrl.u32 %v3333, 7
          %v3335 = vsub.s32 0, %v3334
          %v3336 = vrot.slane %v3331, %v3335
          %v3338 = vadd.f32 %v3327, %v3336
          %v3339 = vadd.f32 %v3328, %v3336
          %v3340 = vadd.f32 %v3329, %v3336
          %v3341 = vadd.f32 %v3330, %v3336
          %3342 = vst.msk [vmem:[#allocation2] sm:$0xff] %vm2311, %v3338
          %3343 = vst.msk [vmem:[#allocation2 + $0x8] sm:$0xff] %vm2311, %v3339
          %3344 = vst.msk [vmem:[#allocation2 + $0x10] sm:$0xff] %vm2311, %v3340
          %3345 = vst.msk [vmem:[#allocation2 + $0x18] sm:$0xff] %vm2311, %v3341
        $region136: #{res_egnn_forward.1} parent=123 // pred_fallthru
          _
        %p3346 = scmp.eq.s32.totalorder %s42, 3
        %p3347 = pnand %p3346, %p3066
        %p3348 = pneg %p3347
        // Predicated region
        $region137: #{res_egnn_forward.1} parent=123 // pred_check
          _
        $region138: #{res_egnn_forward.1} parent=123 // pred_check_branch
          %3350 = sbr.rel (%p3347) target = $region140
        $region139: #{res_egnn_forward.1} parent=123 // pred_region
          %v3351 = vld [vmem:[%s6] sm:$0x3]
          %3352 = vset.pattern.permute.xlu0 0
          %3353 = vperm.xlu0 %3352, %v3351
          %v3354 = vpop.permute.xlu0 %3353
          %vm3355 = vcmp.eq.s32.totalorder %v1315, %v3354
          %v3356 = vsel %vm3355, 1.0, 0.0
          %v3357 = vpack.c.bf16 %v3356, %v3356
          %v3358 = vld [vmem:[#allocation2] sm:$0xff]
          %v3359 = vld [vmem:[#allocation2 + $0x8] sm:$0xff]
          %v3360 = vld [vmem:[#allocation2 + $0x10] sm:$0xff]
          %v3361 = vld [vmem:[#allocation2 + $0x18] sm:$0xff]
          %v3362 = vpack.c.bf16 %v3359, %v3358
          %v3363 = vpack.c.bf16 %v3361, %v3360
          %v3365 = vsel %vm2311, %v3357, 0
          %3367 = vmatprep.subr.bf16.mxu0 0
          %3368 = vmatpush1.bf16.msra.mxu0 0
          %3369 = vmatprep.subr.bf16.mxu0 0
          %3370 = vmatpush1.bf16.msra.mxu0 0
          %3371 = vmatprep.subr.bf16.mxu0 0
          %3372 = vmatpush1.bf16.msra.mxu0 0
          %3373 = vmatprep.subr.bf16.mxu0 0
          %3374 = vmatpush1.bf16.msra.mxu0 0
          %3375 = vmatprep.subr.bf16.mxu0 0
          %3376 = vmatpush1.bf16.msra.mxu0 0
          %3377 = vmatprep.subr.bf16.mxu0 0
          %3378 = vmatpush1.bf16.msra.mxu0 0
          %3379 = vmatprep.subr.bf16.mxu0 0
          %3380 = vmatpush1.bf16.msra.mxu0 %v3363
          %3381 = vmatprep.subr.bf16.mxu0 0
          %3382 = vmatpush1.bf16.msra.mxu0 %v3362
          %3383 = vmatprep.subr.bf16.mxu0 0
          %3384 = vmatpush2.bf16.msra.mxu0 0
          %3385 = vmatprep.subr.bf16.mxu0 0
          %3386 = vmatpush2.bf16.msra.mxu0 0
          %3387 = vmatprep.subr.bf16.mxu0 0
          %3388 = vmatpush2.bf16.msra.mxu0 0
          %3389 = vmatprep.subr.bf16.mxu0 0
          %3390 = vmatpush2.bf16.msra.mxu0 0
          %3391 = vmatprep.subr.bf16.mxu0 0
          %3392 = vmatpush2.bf16.msra.mxu0 0
          %3393 = vmatprep.subr.bf16.mxu0 0
          %3394 = vmatpush2.bf16.msra.mxu0 0
          %3395 = vmatprep.subr.bf16.mxu0 0
          %3396 = vmatpush2.bf16.msra.mxu0 0
          %3397 = vmatprep.subr.bf16.mxu0 0
          %3398 = vmatpush2.bf16.msra.mxu0 0
          %3399 = vmatprep.mubr.bf16.mxu0 0
          %3400 = vmatmul.mubr.bf16.gmra.mxu0 %v3365
          %v3401 = vpop.f32.mrf.mxu0
          %v3402 = vadd.f32 0.0, %v3401
          %v3403 = vpop.f32.mrf.mxu0
          %v3404 = vpop.f32.mrf.mxu0
          %v3405 = vpop.f32.mrf.mxu0
          %3406 = vdwg.mxu0
          %v3407 = vpack.c.bf16 %v3402, %v3402
          %v3408 = vld [vmem:[%s22] sm:$0xf]
          %v3409 = vld [vmem:[%s22 + $0x4] sm:$0xf]
          %v3410 = vld [vmem:[%s22 + $0x8] sm:$0xf]
          %v3411 = vld [vmem:[%s22 + $0xc] sm:$0xf]
          %v3412 = vld [vmem:[%s23] sm:$0x1]
          %v3414 = vlaneseq
          %v3415 = vshrl.u32 %v3414, 7
          %v3416 = vsub.s32 0, %v3415
          %v3417 = vrot.slane %v3412, %v3416
          %v3423 = vunpack.c.l.b16 %v3408
          %v3424 = vunpack.c.l.b16 %v3409
          %v3425 = vunpack.c.l.b16 %v3410
          %v3426 = vunpack.c.l.b16 %v3411
          %v3427 = vpack.c.b16 %v3424, %v3423
          %v3428 = vpack.c.b16 %v3426, %v3425
          %v3432 = vsel %vm2311, %v3407, 0
          %3434 = vmatprep.subr.bf16.mxu0 0
          %3435 = vmatpush1.bf16.msra.mxu0 0
          %3436 = vmatprep.subr.bf16.mxu0 0
          %3437 = vmatpush1.bf16.msra.mxu0 0
          %3438 = vmatprep.subr.bf16.mxu0 0
          %3439 = vmatpush1.bf16.msra.mxu0 0
          %3440 = vmatprep.subr.bf16.mxu0 0
          %3441 = vmatpush1.bf16.msra.mxu0 0
          %3442 = vmatprep.subr.bf16.mxu0 0
          %3443 = vmatpush1.bf16.msra.mxu0 0
          %3444 = vmatprep.subr.bf16.mxu0 0
          %3445 = vmatpush1.bf16.msra.mxu0 0
          %3446 = vmatprep.subr.bf16.mxu0 0
          %3447 = vmatpush1.bf16.msra.mxu0 %v3428
          %3448 = vmatprep.subr.bf16.mxu0 0
          %3449 = vmatpush1.bf16.msra.mxu0 %v3427
          %3450 = vmatprep.subr.bf16.mxu0 0
          %3451 = vmatpush2.bf16.msra.mxu0 0
          %3452 = vmatprep.subr.bf16.mxu0 0
          %3453 = vmatpush2.bf16.msra.mxu0 0
          %3454 = vmatprep.subr.bf16.mxu0 0
          %3455 = vmatpush2.bf16.msra.mxu0 0
          %3456 = vmatprep.subr.bf16.mxu0 0
          %3457 = vmatpush2.bf16.msra.mxu0 0
          %3458 = vmatprep.subr.bf16.mxu0 0
          %3459 = vmatpush2.bf16.msra.mxu0 0
          %3460 = vmatprep.subr.bf16.mxu0 0
          %3461 = vmatpush2.bf16.msra.mxu0 0
          %3462 = vmatprep.subr.bf16.mxu0 0
          %3463 = vmatpush2.bf16.msra.mxu0 0
          %3464 = vmatprep.subr.bf16.mxu0 0
          %3465 = vmatpush2.bf16.msra.mxu0 0
          %3466 = vmatprep.mubr.bf16.mxu0 0
          %3467 = vmatmul.mubr.bf16.gmra.mxu0 %v3432
          %v3468 = vpop.f32.mrf.mxu0
          %v3469 = vadd.f32 %v3417, %v3468
          %v3470 = vpop.f32.mrf.mxu0
          %v3471 = vpop.f32.mrf.mxu0
          %v3472 = vpop.f32.mrf.mxu0
          %3473 = vdwg.mxu0
          %v3474 = vmax.f32 %v3469, 0.0
          %v3475 = vpack.c.bf16 %v3474, %v3474
          %v3476 = vld [vmem:[%s24] sm:$0xf]
          %v3477 = vld [vmem:[%s24 + $0x4] sm:$0xf]
          %v3478 = vld [vmem:[%s24 + $0x8] sm:$0xf]
          %v3479 = vld [vmem:[%s24 + $0xc] sm:$0xf]
          %v3480 = vld [vmem:[%s24 + $0x10] sm:$0xf]
          %v3481 = vld [vmem:[%s24 + $0x14] sm:$0xf]
          %v3482 = vld [vmem:[%s24 + $0x18] sm:$0xf]
          %v3483 = vld [vmem:[%s24 + $0x1c] sm:$0xf]
          %v3484 = vld [vmem:[%s25] sm:$0x1]
          %v3486 = vlaneseq
          %v3487 = vshrl.u32 %v3486, 7
          %v3488 = vsub.s32 0, %v3487
          %v3489 = vrot.slane %v3484, %v3488
          %v3499 = vunpack.c.l.b16 %v3476
          %v3500 = vunpack.c.l.b16 %v3477
          %v3501 = vunpack.c.l.b16 %v3478
          %v3502 = vunpack.c.l.b16 %v3479
          %v3503 = vunpack.c.l.b16 %v3480
          %v3504 = vunpack.c.l.b16 %v3481
          %v3505 = vunpack.c.l.b16 %v3482
          %v3506 = vunpack.c.l.b16 %v3483
          %v3507 = vpack.c.b16 %v3500, %v3499
          %v3508 = vpack.c.b16 %v3502, %v3501
          %v3509 = vpack.c.b16 %v3504, %v3503
          %v3510 = vpack.c.b16 %v3506, %v3505
          %v3516 = vsel %vm1508, %v3475, 0
          %3518 = vmatprep.subr.bf16.mxu0 0
          %3519 = vmatpush1.bf16.msra.mxu0 0
          %3520 = vmatprep.subr.bf16.mxu0 0
          %3521 = vmatpush1.bf16.msra.mxu0 0
          %3522 = vmatprep.subr.bf16.mxu0 0
          %3523 = vmatpush1.bf16.msra.mxu0 0
          %3524 = vmatprep.subr.bf16.mxu0 0
          %3525 = vmatpush1.bf16.msra.mxu0 0
          %3526 = vmatprep.subr.bf16.mxu0 0
          %3527 = vmatpush1.bf16.msra.mxu0 %v3510
          %3528 = vmatprep.subr.bf16.mxu0 0
          %3529 = vmatpush1.bf16.msra.mxu0 %v3509
          %3530 = vmatprep.subr.bf16.mxu0 0
          %3531 = vmatpush1.bf16.msra.mxu0 %v3508
          %3532 = vmatprep.subr.bf16.mxu0 0
          %3533 = vmatpush1.bf16.msra.mxu0 %v3507
          %3534 = vmatprep.subr.bf16.mxu0 0
          %3535 = vmatpush2.bf16.msra.mxu0 0
          %3536 = vmatprep.subr.bf16.mxu0 0
          %3537 = vmatpush2.bf16.msra.mxu0 0
          %3538 = vmatprep.subr.bf16.mxu0 0
          %3539 = vmatpush2.bf16.msra.mxu0 0
          %3540 = vmatprep.subr.bf16.mxu0 0
          %3541 = vmatpush2.bf16.msra.mxu0 0
          %3542 = vmatprep.subr.bf16.mxu0 0
          %3543 = vmatpush2.bf16.msra.mxu0 0
          %3544 = vmatprep.subr.bf16.mxu0 0
          %3545 = vmatpush2.bf16.msra.mxu0 0
          %3546 = vmatprep.subr.bf16.mxu0 0
          %3547 = vmatpush2.bf16.msra.mxu0 0
          %3548 = vmatprep.subr.bf16.mxu0 0
          %3549 = vmatpush2.bf16.msra.mxu0 0
          %3550 = vmatprep.mubr.bf16.mxu0 0
          %3551 = vmatmul.mubr.bf16.gmra.mxu0 %v3516
          %v3552 = vpop.f32.mrf.mxu0
          %v3553 = vadd.f32 %v3489, %v3552
          %v3554 = vpop.f32.mrf.mxu0
          %v3555 = vpop.f32.mrf.mxu0
          %v3556 = vpop.f32.mrf.mxu0
          %3557 = vdwg.mxu0
          %vm3558 = vcmask 156672
          %3559 = vst.msk [vmem:[#allocation7] sm:$0x3] %vm3558, %v3553
        $region140: #{res_egnn_forward.1} parent=123 // pred_fallthru
          _
        // Predicated region
        $region141: #{res_egnn_forward.1} parent=123 // pred_check
          %p3560 = pneg %p689
        $region142: #{res_egnn_forward.1} parent=123 // pred_check_branch
          %3562 = sbr.rel (%p3560) target = $region144
        $region143: #{res_egnn_forward.1} parent=123 // pred_region
          %s3564 = ssub.s32 32, 32
          %3565 = vsyncadd [#allocation8], %s3564
          %s3567 = sshll.u32 [#allocation7], 4
          %s3568 = int_to_ptr.vmem [resolvable:$true] %s3567
          %3570 = dma.vmem_to_hbm [thread:$0]  %s3568, 32, %s26, [#allocation8]
        $region144: #{res_egnn_forward.1} parent=123 // pred_fallthru
          _
        // Predicated region
        $region145: #{res_egnn_forward.1} parent=123 // pred_check
          %p3571 = pneg %p689
        $region146: #{res_egnn_forward.1} parent=123 // pred_check_branch
          %3573 = sbr.rel (%p3571) target = $region148
        $region147: #{res_egnn_forward.1} parent=123 // pred_region
          %3574 = dma.done [#allocation8], 32
        $region148: #{res_egnn_forward.1} parent=123 // pred_fallthru
          _
      $region124: #{res_egnn_forward.1} parent=5 // pred_fallthru
        _
      %p3575 = scmp.le.s32.totalorder 2, %s33
      // Predicated region
      $region149: #{res_egnn_forward.1} parent=5 // pred_check
        %p3576 = pneg %p3575
      $region150: #{res_egnn_forward.1} parent=5 // pred_check_branch
        %3578 = sbr.rel (%p3576) target = $region152
      $region151: #{res_egnn_forward.1} parent=5 // pred_region
        %s3579 = ssub.s32 %s33, 2
      $region152: #{res_egnn_forward.1} parent=5 // pred_fallthru
        _
    $region6: #{res_egnn_forward.1} parent=1 // loop_footer
      %s37 = sadd.s32 1, %s33
    $region7: #{res_egnn_forward.1} parent=1 // loop_footer_branch
      %32 = sbr.rel target = $region3
    $region8: #{res_egnn_forward.1} parent=1 // loop_exit
      _
    %3580 = vsyncpa [#allocation8], 1
    %s3581 = scalar_lea.sflag [#allocation8], 1
    %3582 = vsyncpa %s3581, 1

</llo_original>
